<compile_context>
chip_gen: v6e
topology: v6e:2x2x1
jax: 0.10.0
libtpu: 0.0.40
codegen_flags: <defaults>
</compile_context>

<pallas_src>
import functools

import jax
import jax.numpy as jnp
from jax.experimental import pallas as pl
from jax.experimental.pallas import tpu as pltpu

LANE = 128


def _round_up(x, m):
    return (x + m - 1) // m * m


# ----------------------- Kernel A: fused stride-1 3x3 conv --------------------

def _tap_accumulate(x_ref, w_ref, ho, wo, cout):
    """acc[m, co] = sum over 9 taps of x_tap[m, ci] @ w[tap, ci, co] (bf16 MXU)."""
    acc = jnp.zeros((ho * wo, cout), jnp.float32)
    t = 0
    for kh in range(3):
        for kw in range(3):
            xt = x_ref[0, kh:kh + ho, kw:kw + wo, :]            # (ho, wo, cin) f32
            xt = xt.reshape(ho * wo, -1).astype(jnp.bfloat16)   # lane dim unchanged
            acc = acc + jnp.dot(xt, w_ref[t],
                                preferred_element_type=jnp.float32)
            t += 1
    return acc


def _conv3x3_kernel(x_ref, w_ref, b_ref, o_ref, *, ho, wo, relu):
    cout = o_ref.shape[-1]
    y = _tap_accumulate(x_ref, w_ref, ho, wo, cout) + b_ref[...]
    if relu:
        y = jnp.maximum(y, 0.0)
    o_ref[...] = y.reshape(o_ref.shape).astype(o_ref.dtype)


def _conv3x3_res_kernel(x_ref, w_ref, b_ref, r_ref, o_ref, *, ho, wo, relu):
    cout = o_ref.shape[-1]
    y = _tap_accumulate(x_ref, w_ref, ho, wo, cout) + b_ref[...]
    y = y + r_ref[0].reshape(ho * wo, cout)                     # identity shortcut
    if relu:
        y = jnp.maximum(y, 0.0)
    o_ref[...] = y.reshape(o_ref.shape).astype(o_ref.dtype)


def _conv3x3_proj_kernel(x_ref, w_ref, b_ref, pd_ref, wd_ref, bd_ref, o_ref,
                         *, ho, wo, relu):
    cout = o_ref.shape[-1]
    y = _tap_accumulate(x_ref, w_ref, ho, wo, cout) + b_ref[...]
    pd = pd_ref[0].reshape(ho * wo, -1).astype(jnp.bfloat16)    # 1x1 downsample
    res = jnp.dot(pd, wd_ref[...], preferred_element_type=jnp.float32) + bd_ref[...]
    y = y + res
    if relu:
        y = jnp.maximum(y, 0.0)
    o_ref[...] = y.reshape(o_ref.shape).astype(o_ref.dtype)


def conv3x3_fused(x_pad, w_taps, bias, *, relu, residual=None, proj=None):
    """Fused stride-1 3x3 conv with folded BN, in-kernel tap gather.

    x_pad:    (N, Ho+2, Wo+2, Cin)  f32, spatially padded by 1.
    w_taps:   (9, Cin, Cout_pad)    bf16, BN scale folded, Cout lane-padded.
    bias:     (1, Cout_pad)         f32.
    residual: (N, Ho, Wo, Cout_pad) identity shortcut (added before ReLU).
    proj:     (pd, wd, bd) fused 1x1 downsample shortcut.
    """
    n, hp, wp, cin = x_pad.shape
    ho, wo = hp - 2, wp - 2
    cout_pad = w_taps.shape[-1]
    assert cout_pad % LANE == 0
    assert wo % 8 == 0, "fused conv path requires output width % 8 == 0"
    tn = LANE
    grid = (n, cout_pad // tn)

    x_spec = pl.BlockSpec((1, hp, wp, cin), lambda i, j: (i, 0, 0, 0))
    w_spec = pl.BlockSpec((9, cin, tn), lambda i, j: (0, 0, j))
    b_spec = pl.BlockSpec((1, tn), lambda i, j: (0, j))
    o_spec = pl.BlockSpec((1, ho, wo, tn), lambda i, j: (i, 0, 0, j))

    flops = 2 * n * ho * wo * 9 * cin * cout_pad
    bytes_accessed = x_pad.size * 4 + w_taps.size * 2 + n * ho * wo * cout_pad * 4

    if proj is not None:
        pd, wd, bd = proj
        cin0 = pd.shape[-1]
        kernel = functools.partial(_conv3x3_proj_kernel, ho=ho, wo=wo, relu=relu)
        in_specs = [x_spec, w_spec, b_spec,
                    pl.BlockSpec((1, ho, wo, cin0), lambda i, j: (i, 0, 0, 0)),
                    pl.BlockSpec((cin0, tn), lambda i, j: (0, j)),
                    pl.BlockSpec((1, tn), lambda i, j: (0, j))]
        args = (x_pad, w_taps, bias, pd, wd, bd)
        flops += 2 * n * ho * wo * cin0 * cout_pad
        bytes_accessed += pd.size * 4 + wd.size * 2
    elif residual is not None:
        kernel = functools.partial(_conv3x3_res_kernel, ho=ho, wo=wo, relu=relu)
        in_specs = [x_spec, w_spec, b_spec,
                    pl.BlockSpec((1, ho, wo, tn), lambda i, j: (i, 0, 0, j))]
        args = (x_pad, w_taps, bias, residual)
        bytes_accessed += residual.size * 4
    else:
        kernel = functools.partial(_conv3x3_kernel, ho=ho, wo=wo, relu=relu)
        in_specs = [x_spec, w_spec, b_spec]
        args = (x_pad, w_taps, bias)

    return pl.pallas_call(
        kernel,
        out_shape=jax.ShapeDtypeStruct((n, ho, wo, cout_pad), jnp.float32),
        grid=grid,
        in_specs=in_specs,
        out_specs=o_spec,
        compiler_params=pltpu.CompilerParams(
            dimension_semantics=("parallel", "parallel"),
            vmem_limit_bytes=32 * 1024 * 1024),
        cost_estimate=pl.CostEstimate(flops=flops, transcendentals=0,
                                      bytes_accessed=bytes_accessed),
    )(*args)


# ------------- Kernel B: tiled matmul + bias + ReLU (strided conv1) -----------

def _mm_bias_act_kernel(x_ref, w_ref, b_ref, o_ref, *, relu):
    y = jnp.dot(x_ref[...], w_ref[...], preferred_element_type=jnp.float32)
    y = y + b_ref[...]
    if relu:
        y = jnp.maximum(y, 0.0)
    o_ref[...] = y.astype(o_ref.dtype)


def matmul_bias_act(x_bf16, w_bf16, bias, *, relu):
    """(M,K)bf16 @ (K,Npad)bf16 + bias, M/N-tiled grid, lane-dense output."""
    m, k = x_bf16.shape
    _, n_pad = w_bf16.shape
    assert n_pad % LANE == 0
    tn = LANE
    tm = m
    for cand in (1024, 512, 256, 128, 64, 32, 16):
        if m % cand == 0:
            tm = cand
            break
    grid = (m // tm, n_pad // tn)

    flops = 2 * m * k * n_pad
    bytes_accessed = m * k * 2 + k * n_pad * 2 + n_pad * 4 + m * n_pad * 4

    return pl.pallas_call(
        functools.partial(_mm_bias_act_kernel, relu=relu),
        out_shape=jax.ShapeDtypeStruct((m, n_pad), jnp.float32),
        grid=grid,
        in_specs=[pl.BlockSpec((tm, k), lambda i, j: (i, 0)),
                  pl.BlockSpec((k, tn), lambda i, j: (0, j)),
                  pl.BlockSpec((1, tn), lambda i, j: (0, j))],
        out_specs=pl.BlockSpec((tm, tn), lambda i, j: (i, j)),
        compiler_params=pltpu.CompilerParams(
            dimension_semantics=("parallel", "parallel"),
            vmem_limit_bytes=32 * 1024 * 1024),
        cost_estimate=pl.CostEstimate(flops=flops, transcendentals=0,
                                      bytes_accessed=bytes_accessed),
    )(x_bf16, w_bf16, bias)


# ------------------------------ JAX glue --------------------------------------

def im2col(x_nhwc, k, stride, pad):
    """(N,H,W,C) -> (N*Ho*Wo, k*k*C) patches, column order (kh, kw, c)."""
    n, h, w, c = x_nhwc.shape
    xp = jnp.pad(x_nhwc, ((0, 0), (pad, pad), (pad, pad), (0, 0)))
    ho = (h + 2 * pad - k) // stride + 1
    wo = (w + 2 * pad - k) // stride + 1
    cols = []
    for kh in range(k):
        for kw in range(k):
            cols.append(xp[:, kh:kh + stride * ho:stride,
                           kw:kw + stride * wo:stride, :])
    patches = jnp.concatenate(cols, axis=-1)
    return patches.reshape(n * ho * wo, k * k * c), (n, ho, wo)


def _fold_to_taps(w_oihw, scale, cin_pad, cout_pad):
    """(O,I,3,3) -> (9, cin_pad, cout_pad) bf16, BN scale folded, zero-padded."""
    o, i, kh, kw = w_oihw.shape
    wt = jnp.transpose(w_oihw, (2, 3, 1, 0)).reshape(kh * kw, i, o)
    wt = wt * scale[None, None, :]
    wt = jnp.pad(wt, ((0, 0), (0, cin_pad - i), (0, cout_pad - o)))
    return wt.astype(jnp.bfloat16)


def _fold_to_mat(w_oihw, scale, cout_pad):
    """(O,I,k,k) -> (k*k*I, cout_pad) bf16 for the im2col path."""
    o, i, kh, kw = w_oihw.shape
    wm = jnp.transpose(w_oihw, (2, 3, 1, 0)).reshape(kh * kw * i, o)
    wm = wm * scale[None, :]
    wm = jnp.pad(wm, ((0, 0), (0, cout_pad - o)))
    return wm.astype(jnp.bfloat16)


def _pad_bias(b, cout_pad):
    return jnp.pad(b, (0, cout_pad - b.shape[0])).reshape(1, cout_pad).astype(jnp.float32)


def prepare_block_params(p, conv1_cin, cout_pad, stride):
    """Fold BN into weights, lane-pad Cout, cast MXU operands to bf16."""
    q = {}
    if stride != 1:
        q['w1_mat'] = _fold_to_mat(p['w1_oihw'], p['s1'], cout_pad)
    else:
        q['w1_taps'] = _fold_to_taps(p['w1_oihw'], p['s1'], conv1_cin, cout_pad)
    q['b1'] = _pad_bias(p['b1'], cout_pad)
    q['w2_taps'] = _fold_to_taps(p['w2_oihw'], p['s2'], cout_pad, cout_pad)
    q['b2'] = _pad_bias(p['b2'], cout_pad)
    if 'wd_oihw' in p:
        wd = p['wd_oihw'][:, :, 0, 0].T * p['sd'][None, :]          # (I, O)
        q['wd'] = jnp.pad(wd, ((0, 0), (0, cout_pad - wd.shape[1]))).astype(jnp.bfloat16)
        q['bd'] = _pad_bias(p['bd'], cout_pad)
    return q


def basic_block_forward(x_nhwc, q, stride, cout_pad):
    n, h, w, _ = x_nhwc.shape
    if stride != 1:
        # strided conv1: wrapper-side im2col + tiled matmul kernel (first block only)
        patches, (n, ho, wo) = im2col(x_nhwc, 3, stride, 1)
        y1 = matmul_bias_act(patches.astype(jnp.bfloat16), q['w1_mat'], q['b1'],
                             relu=True)
        y1 = y1.reshape(n, ho, wo, cout_pad)
    else:
        ho, wo = h, w
        xp = jnp.pad(x_nhwc, ((0, 0), (1, 1), (1, 1), (0, 0)))
        y1 = conv3x3_fused(xp, q['w1_taps'], q['b1'], relu=True)

    # conv2 + BN2 + residual + ReLU, all in one fused kernel
    y1p = jnp.pad(y1, ((0, 0), (1, 1), (1, 1), (0, 0)))
    if 'wd' in q:
        pd = x_nhwc[:, ::stride, ::stride, :]
        out = conv3x3_fused(y1p, q['w2_taps'], q['b2'], relu=True,
                            proj=(pd, q['wd'], q['bd']))
    else:
        res = x_nhwc
        if res.shape[-1] != cout_pad:
            res = jnp.pad(res, ((0, 0), (0, 0), (0, 0),
                                (0, cout_pad - res.shape[-1])))
        out = conv3x3_fused(y1p, q['w2_taps'], q['b2'], relu=True, residual=res)
    return out


def residual_block_forward(x_nchw, prepared, strides, out_c, cout_pad,
                           features=None, get_features=False, detached=False):
    """Mirrors ResidualBlock.forward: returns (out, features)."""
    x = jnp.transpose(x_nchw, (0, 2, 3, 1))          # NCHW -> NHWC
    for q, s in zip(prepared, strides):
        x = basic_block_forward(x, q, s, cout_pad)
    x = x[..., :out_c]                               # strip lane padding
    out = jnp.transpose(x, (0, 3, 1, 2))             # NHWC -> NCHW
    return out, features


# ------------------------- deterministic parameters ---------------------------

def init_block_params(key, in_c, out_c, stride, eps=1e-5):
    keys = jax.random.split(key, 6)

    def conv_w(k, co, ci, ks):
        fan_in = ci * ks * ks
        return jax.random.normal(k, (co, ci, ks, ks), jnp.float32) / jnp.sqrt(fan_in)

    def bn(k, c):
        gamma = 1.0 + 0.1 * jax.random.normal(k, (c,), jnp.float32)
        beta = 0.05 * jnp.arange(c, dtype=jnp.float32) / c
        mean = 0.01 * jnp.arange(c, dtype=jnp.float32)
        var = 1.0 + 0.1 * jnp.arange(c, dtype=jnp.float32) / c
        scale = gamma / jnp.sqrt(var + eps)
        bias = beta - mean * scale
        return scale, bias

    w1 = conv_w(keys[0], out_c, in_c, 3)
    s1, b1 = bn(keys[1], out_c)
    w2 = conv_w(keys[2], out_c, out_c, 3)
    s2, b2 = bn(keys[3], out_c)
    p = {'w1_oihw': w1, 's1': s1, 'b1': b1,
         'w2_oihw': w2, 's2': s2, 'b2': b2}
    if stride != 1 or in_c != out_c:                 # block.expansion == 1
        wd = conv_w(keys[4], out_c, in_c, 1)
        sd, bd = bn(keys[5], out_c)
        p.update({'wd_oihw': wd, 'sd': sd, 'bd': bd})
    return p


def init_residual_block(key, in_c, out_c, depth, stride):
    keys = jax.random.split(key, depth)
    params = [init_block_params(keys[0], in_c, out_c, stride)]
    for i in range(1, depth):
        params.append(init_block_params(keys[i], out_c, out_c, 1))
    return params


# ------------------------------ pure-JAX reference -----------------------------

def _ref_conv(x, w, stride, pad):
    return jax.lax.conv_general_dilated(
        x, w, window_strides=(stride, stride),
        padding=((pad, pad), (pad, pad)),
        dimension_numbers=('NCHW', 'OIHW', 'NCHW'))


def _ref_basic_block(x, p, stride):
    y = _ref_conv(x, p['w1_oihw'], stride, 1)
    y = y * p['s1'][None, :, None, None] + p['b1'][None, :, None, None]
    y = jnp.maximum(y, 0.0)
    y = _ref_conv(y, p['w2_oihw'], 1, 1)
    y = y * p['s2'][None, :, None, None] + p['b2'][None, :, None, None]
    if 'wd_oihw' in p:
        r = _ref_conv(x, p['wd_oihw'], stride, 0)
        r = r * p['sd'][None, :, None, None] + p['bd'][None, :, None, None]
    else:
        r = x
    return jnp.maximum(y + r, 0.0)


def _ref_forward(x, blocks_params, stride):
    for i, bp in enumerate(blocks_params):
        x = _ref_basic_block(x, bp, stride if i == 0 else 1)
    return x


# ----------------------------------- main --------------------------------------

if __name__ == "__main__":
    key = jax.random.PRNGKey(0)
    kx, kp = jax.random.split(key)

    in_channels, out_channels, depth, stride = 4, 8, 2, 2
    x = jax.random.normal(kx, (2, in_channels, 16, 16), jnp.float32)

    raw_params = init_residual_block(kp, in_channels, out_channels, depth, stride)

    cout_pad = _round_up(out_channels, LANE)
    strides = [stride] + [1] * (depth - 1)
    prepared = [prepare_block_params(raw_params[0], conv1_cin=in_channels,
                                     cout_pad=cout_pad, stride=stride)]
    for i in range(1, depth):
        prepared.append(prepare_block_params(raw_params[i], conv1_cin=cout_pad,
                                             cout_pad=cout_pad, stride=1))

    @jax.jit
    def run(inp):
        return residual_block_forward(inp, prepared, strides, out_channels, cout_pad)

    out, feats = run(x)
    out = jax.block_until_ready(out)

    ref = jax.block_until_ready(_ref_forward(x, raw_params, stride))
    assert out.shape == ref.shape == (2, out_channels, 8, 8), out.shape
    assert feats is None
    # bf16 MXU inputs with f32 accumulation/epilogue -> loosened tolerance.
    if not jnp.allclose(out, ref, rtol=3e-2, atol=3e-2):
        max_err = float(jnp.max(jnp.abs(out - ref)))
        raise AssertionError(f"Pallas output mismatch, max abs err {max_err}")

    print("KERNEL_OK")
</pallas_src>

<mosaic_0001>
module attributes {stable_mosaic.version = 11 : i64} {
  func.func @_mm_bias_act_kernel(%arg0: i32, %arg1: i32, %arg2: memref<128x36xbf16, #tpu.memory_space<vmem>>, %arg3: memref<36x128xbf16, #tpu.memory_space<vmem>>, %arg4: memref<1x128xf32, #tpu.memory_space<vmem>>, %arg5: memref<128x128xf32, #tpu.memory_space<vmem>>) attributes {dimension_semantics = [#tpu.dimension_semantics<parallel>, #tpu.dimension_semantics<parallel>], iteration_bounds = array<i64: 1, 1>, scalar_prefetch = 0 : i64, scratch_operands = 0 : i64, tpu.core_type = #tpu.core_type<tc>, window_params = [{transform_indices = @transform_0, window_bounds = array<i64: 128, 36>}, {transform_indices = @transform_1, window_bounds = array<i64: 36, 128>}, {transform_indices = @transform_2, window_bounds = array<i64: 1, 128>}, {transform_indices = @transform_3, window_bounds = array<i64: 128, 128>}]} {
    %c0 = arith.constant 0 : index
    %c0_0 = arith.constant 0 : index
    %0 = vector.load %arg2[%c0, %c0_0] : memref<128x36xbf16, #tpu.memory_space<vmem>>, vector<128x36xbf16>
    %c0_1 = arith.constant 0 : index
    %c0_2 = arith.constant 0 : index
    %1 = vector.load %arg3[%c0_1, %c0_2] : memref<36x128xbf16, #tpu.memory_space<vmem>>, vector<36x128xbf16>
    %cst = arith.constant dense<0.000000e+00> : vector<128x128xf32>
    %2 = tpu.matmul %0, %1, %cst {dimension_numbers = #tpu.dot_dimension_numbers<[1], [0], [0], [1], [0, 0, 1, 1], [], []>} : vector<128x36xbf16>, vector<36x128xbf16>, vector<128x128xf32> -> vector<128x128xf32>
    %c0_3 = arith.constant 0 : index
    %c0_4 = arith.constant 0 : index
    %3 = vector.load %arg4[%c0_3, %c0_4] : memref<1x128xf32, #tpu.memory_space<vmem>>, vector<1x128xf32>
    %4 = vector.broadcast %3 : vector<1x128xf32> to vector<128x128xf32>
    %5 = arith.addf %2, %4 : vector<128x128xf32>
    %cst_5 = arith.constant 0.000000e+00 : f32
    %6 = vector.broadcast %cst_5 : f32 to vector<128x128xf32>
    %7 = arith.maximumf %5, %6 : vector<128x128xf32>
    %c0_6 = arith.constant 0 : index
    %c0_7 = arith.constant 0 : index
    %8 = vector.load %arg5[%c0_6, %c0_7] : memref<128x128xf32, #tpu.memory_space<vmem>>, vector<128x128xf32>
    tpu.vector_store %arg5[%c0_6, %c0_7], %7 {strides = array<i32>} : memref<128x128xf32, #tpu.memory_space<vmem>>, vector<128x128xf32>,
    return
  }
  func.func @transform_0(%arg0: i32, %arg1: i32) -> (i32, i32) {
    %c0_i32 = arith.constant 0 : i32
    %c0_i32_0 = arith.constant 0 : i32
    return %arg0, %c0_i32 : i32, i32
  }
  func.func @transform_1(%arg0: i32, %arg1: i32) -> (i32, i32) {
    %c0_i32 = arith.constant 0 : i32
    %c0_i32_0 = arith.constant 0 : i32
    return %c0_i32, %arg1 : i32, i32
  }
  func.func @transform_2(%arg0: i32, %arg1: i32) -> (i32, i32) {
    %c0_i32 = arith.constant 0 : i32
    %c0_i32_0 = arith.constant 0 : i32
    return %c0_i32, %arg1 : i32, i32
  }
  func.func @transform_3(%arg0: i32, %arg1: i32) -> (i32, i32) {
    %c0_i32 = arith.constant 0 : i32
    return %arg0, %arg1 : i32, i32
  }
}

module attributes {stable_mosaic.version = 11 : i64} {
  func.func @_conv3x3_proj_kernel(%arg0: i32, %arg1: i32, %arg2: memref<1x10x10x128xf32, #tpu.memory_space<vmem>>, %arg3: memref<9x128x128xbf16, #tpu.memory_space<vmem>>, %arg4: memref<1x128xf32, #tpu.memory_space<vmem>>, %arg5: memref<1x8x8x4xf32, #tpu.memory_space<vmem>>, %arg6: memref<4x128xbf16, #tpu.memory_space<vmem>>, %arg7: memref<1x128xf32, #tpu.memory_space<vmem>>, %arg8: memref<1x8x8x128xf32, #tpu.memory_space<vmem>>) attributes {dimension_semantics = [#tpu.dimension_semantics<parallel>, #tpu.dimension_semantics<parallel>], iteration_bounds = array<i64: 2, 1>, scalar_prefetch = 0 : i64, scratch_operands = 0 : i64, tpu.core_type = #tpu.core_type<tc>, window_params = [{transform_indices = @transform_0, window_bounds = array<i64: 1, 10, 10, 128>}, {transform_indices = @transform_1, window_bounds = array<i64: 9, 128, 128>}, {transform_indices = @transform_2, window_bounds = array<i64: 1, 128>}, {transform_indices = @transform_3, window_bounds = array<i64: 1, 8, 8, 4>}, {transform_indices = @transform_4, window_bounds = array<i64: 4, 128>}, {transform_indices = @transform_5, window_bounds = array<i64: 1, 128>}, {transform_indices = @transform_6, window_bounds = array<i64: 1, 8, 8, 128>}]} {
    %cst = arith.constant 0.000000e+00 : f32
    %0 = vector.broadcast %cst : f32 to vector<64x128xf32>
    %c0 = arith.constant 0 : index
    %c0_0 = arith.constant 0 : index
    %c0_1 = arith.constant 0 : index
    %c0_2 = arith.constant 0 : index
    %1 = vector.load %arg2[%c0, %c0_0, %c0_1, %c0_2] : memref<1x10x10x128xf32, #tpu.memory_space<vmem>>, vector<1x8x8x128xf32>
    %2 = vector.shape_cast %1 : vector<1x8x8x128xf32> to vector<8x8x128xf32>
    %3 = vector.shape_cast %2 : vector<8x8x128xf32> to vector<64x128xf32>
    %4 = arith.truncf %3 : vector<64x128xf32> to vector<64x128xbf16>
    %c0_3 = arith.constant 0 : index
    %c0_4 = arith.constant 0 : index
    %c0_5 = arith.constant 0 : index
    %5 = vector.load %arg3[%c0_3, %c0_4, %c0_5] : memref<9x128x128xbf16, #tpu.memory_space<vmem>>, vector<1x128x128xbf16>
    %6 = vector.shape_cast %5 : vector<1x128x128xbf16> to vector<128x128xbf16>
    %cst_6 = arith.constant dense<0.000000e+00> : vector<64x128xf32>
    %7 = tpu.matmul %4, %6, %cst_6 {dimension_numbers = #tpu.dot_dimension_numbers<[1], [0], [0], [1], [0, 0, 1, 1], [], []>} : vector<64x128xbf16>, vector<128x128xbf16>, vector<64x128xf32> -> vector<64x128xf32>
    %8 = arith.addf %0, %7 : vector<64x128xf32>
    %c0_7 = arith.constant 0 : index
    %c0_8 = arith.constant 0 : index
    %c1 = arith.constant 1 : index
    %c0_9 = arith.constant 0 : index
    %9 = vector.load %arg2[%c0_7, %c0_8, %c1, %c0_9] : memref<1x10x10x128xf32, #tpu.memory_space<vmem>>, vector<1x8x8x128xf32>
    %10 = vector.shape_cast %9 : vector<1x8x8x128xf32> to vector<8x8x128xf32>
    %11 = vector.shape_cast %10 : vector<8x8x128xf32> to vector<64x128xf32>
    %12 = arith.truncf %11 : vector<64x128xf32> to vector<64x128xbf16>
    %c1_10 = arith.constant 1 : index
    %c0_11 = arith.constant 0 : index
    %c0_12 = arith.constant 0 : index
    %13 = vector.load %arg3[%c1_10, %c0_11, %c0_12] : memref<9x128x128xbf16, #tpu.memory_space<vmem>>, vector<1x128x128xbf16>
    %14 = vector.shape_cast %13 : vector<1x128x128xbf16> to vector<128x128xbf16>
    %cst_13 = arith.constant dense<0.000000e+00> : vector<64x128xf32>
    %15 = tpu.matmul %12, %14, %cst_13 {dimension_numbers = #tpu.dot_dimension_numbers<[1], [0], [0], [1], [0, 0, 1, 1], [], []>} : vector<64x128xbf16>, vector<128x128xbf16>, vector<64x128xf32> -> vector<64x128xf32>
    %16 = arith.addf %8, %15 : vector<64x128xf32>
    %c0_14 = arith.constant 0 : index
    %c0_15 = arith.constant 0 : index
    %c2 = arith.constant 2 : index
    %c0_16 = arith.constant 0 : index
    %17 = vector.load %arg2[%c0_14, %c0_15, %c2, %c0_16] : memref<1x10x10x128xf32, #tpu.memory_space<vmem>>, vector<1x8x8x128xf32>
    %18 = vector.shape_cast %17 : vector<1x8x8x128xf32> to vector<8x8x128xf32>
    %19 = vector.shape_cast %18 : vector<8x8x128xf32> to vector<64x128xf32>
    %20 = arith.truncf %19 : vector<64x128xf32> to vector<64x128xbf16>
    %c2_17 = arith.constant 2 : index
    %c0_18 = arith.constant 0 : index
    %c0_19 = arith.constant 0 : index
    %21 = vector.load %arg3[%c2_17, %c0_18, %c0_19] : memref<9x128x128xbf16, #tpu.memory_space<vmem>>, vector<1x128x128xbf16>
    %22 = vector.shape_cast %21 : vector<1x128x128xbf16> to vector<128x128xbf16>
    %cst_20 = arith.constant dense<0.000000e+00> : vector<64x128xf32>
    %23 = tpu.matmul %20, %22, %cst_20 {dimension_numbers = #tpu.dot_dimension_numbers<[1], [0], [0], [1], [0, 0, 1, 1], [], []>} : vector<64x128xbf16>, vector<128x128xbf16>, vector<64x128xf32> -> vector<64x128xf32>
    %24 = arith.addf %16, %23 : vector<64x128xf32>
    %c0_21 = arith.constant 0 : index
    %c1_22 = arith.constant 1 : index
    %c0_23 = arith.constant 0 : index
    %c0_24 = arith.constant 0 : index
    %25 = vector.load %arg2[%c0_21, %c1_22, %c0_23, %c0_24] : memref<1x10x10x128xf32, #tpu.memory_space<vmem>>, vector<1x8x8x128xf32>
    %26 = vector.shape_cast %25 : vector<1x8x8x128xf32> to vector<8x8x128xf32>
    %27 = vector.shape_cast %26 : vector<8x8x128xf32> to vector<64x128xf32>
    %28 = arith.truncf %27 : vector<64x128xf32> to vector<64x128xbf16>
    %c3 = arith.constant 3 : index
    %c0_25 = arith.constant 0 : index
    %c0_26 = arith.constant 0 : index
    %29 = vector.load %arg3[%c3, %c0_25, %c0_26] : memref<9x128x128xbf16, #tpu.memory_space<vmem>>, vector<1x128x128xbf16>
    %30 = vector.shape_cast %29 : vector<1x128x128xbf16> to vector<128x128xbf16>
    %cst_27 = arith.constant dense<0.000000e+00> : vector<64x128xf32>
    %31 = tpu.matmul %28, %30, %cst_27 {dimension_numbers = #tpu.dot_dimension_numbers<[1], [0], [0], [1], [0, 0, 1, 1], [], []>} : vector<64x128xbf16>, vector<128x128xbf16>, vector<64x128xf32> -> vector<64x128xf32>
    %32 = arith.addf %24, %31 : vector<64x128xf32>
    %c0_28 = arith.constant 0 : index
    %c1_29 = arith.constant 1 : index
    %c1_30 = arith.constant 1 : index
    %c0_31 = arith.constant 0 : index
    %33 = vector.load %arg2[%c0_28, %c1_29, %c1_30, %c0_31] : memref<1x10x10x128xf32, #tpu.memory_space<vmem>>, vector<1x8x8x128xf32>
    %34 = vector.shape_cast %33 : vector<1x8x8x128xf32> to vector<8x8x128xf32>
    %35 = vector.shape_cast %34 : vector<8x8x128xf32> to vector<64x128xf32>
    %36 = arith.truncf %35 : vector<64x128xf32> to vector<64x128xbf16>
    %c4 = arith.constant 4 : index
    %c0_32 = arith.constant 0 : index
    %c0_33 = arith.constant 0 : index
    %37 = vector.load %arg3[%c4, %c0_32, %c0_33] : memref<9x128x128xbf16, #tpu.memory_space<vmem>>, vector<1x128x128xbf16>
    %38 = vector.shape_cast %37 : vector<1x128x128xbf16> to vector<128x128xbf16>
    %cst_34 = arith.constant dense<0.000000e+00> : vector<64x128xf32>
    %39 = tpu.matmul %36, %38, %cst_34 {dimension_numbers = #tpu.dot_dimension_numbers<[1], [0], [0], [1], [0, 0, 1, 1], [], []>} : vector<64x128xbf16>, vector<128x128xbf16>, vector<64x128xf32> -> vector<64x128xf32>
    %40 = arith.addf %32, %39 : vector<64x128xf32>
    %c0_35 = arith.constant 0 : index
    %c1_36 = arith.constant 1 : index
    %c2_37 = arith.constant 2 : index
    %c0_38 = arith.constant 0 : index
    %41 = vector.load %arg2[%c0_35, %c1_36, %c2_37, %c0_38] : memref<1x10x10x128xf32, #tpu.memory_space<vmem>>, vector<1x8x8x128xf32>
    %42 = vector.shape_cast %41 : vector<1x8x8x128xf32> to vector<8x8x128xf32>
    %43 = vector.shape_cast %42 : vector<8x8x128xf32> to vector<64x128xf32>
    %44 = arith.truncf %43 : vector<64x128xf32> to vector<64x128xbf16>
    %c5 = arith.constant 5 : index
    %c0_39 = arith.constant 0 : index
    %c0_40 = arith.constant 0 : index
    %45 = vector.load %arg3[%c5, %c0_39, %c0_40] : memref<9x128x128xbf16, #tpu.memory_space<vmem>>, vector<1x128x128xbf16>
    %46 = vector.shape_cast %45 : vector<1x128x128xbf16> to vector<128x128xbf16>
    %cst_41 = arith.constant dense<0.000000e+00> : vector<64x128xf32>
    %47 = tpu.matmul %44, %46, %cst_41 {dimension_numbers = #tpu.dot_dimension_numbers<[1], [0], [0], [1], [0, 0, 1, 1], [], []>} : vector<64x128xbf16>, vector<128x128xbf16>, vector<64x128xf32> -> vector<64x128xf32>
    %48 = arith.addf %40, %47 : vector<64x128xf32>
    %c0_42 = arith.constant 0 : index
    %c2_43 = arith.constant 2 : index
    %c0_44 = arith.constant 0 : index
    %c0_45 = arith.constant 0 : index
    %49 = vector.load %arg2[%c0_42, %c2_43, %c0_44, %c0_45] : memref<1x10x10x128xf32, #tpu.memory_space<vmem>>, vector<1x8x8x128xf32>
    %50 = vector.shape_cast %49 : vector<1x8x8x128xf32> to vector<8x8x128xf32>
    %51 = vector.shape_cast %50 : vector<8x8x128xf32> to vector<64x128xf32>
    %52 = arith.truncf %51 : vector<64x128xf32> to vector<64x128xbf16>
    %c6 = arith.constant 6 : index
    %c0_46 = arith.constant 0 : index
    %c0_47 = arith.constant 0 : index
    %53 = vector.load %arg3[%c6, %c0_46, %c0_47] : memref<9x128x128xbf16, #tpu.memory_space<vmem>>, vector<1x128x128xbf16>
    %54 = vector.shape_cast %53 : vector<1x128x128xbf16> to vector<128x128xbf16>
    %cst_48 = arith.constant dense<0.000000e+00> : vector<64x128xf32>
    %55 = tpu.matmul %52, %54, %cst_48 {dimension_numbers = #tpu.dot_dimension_numbers<[1], [0], [0], [1], [0, 0, 1, 1], [], []>} : vector<64x128xbf16>, vector<128x128xbf16>, vector<64x128xf32> -> vector<64x128xf32>
    %56 = arith.addf %48, %55 : vector<64x128xf32>
    %c0_49 = arith.constant 0 : index
    %c2_50 = arith.constant 2 : index
    %c1_51 = arith.constant 1 : index
    %c0_52 = arith.constant 0 : index
    %57 = vector.load %arg2[%c0_49, %c2_50, %c1_51, %c0_52] : memref<1x10x10x128xf32, #tpu.memory_space<vmem>>, vector<1x8x8x128xf32>
    %58 = vector.shape_cast %57 : vector<1x8x8x128xf32> to vector<8x8x128xf32>
    %59 = vector.shape_cast %58 : vector<8x8x128xf32> to vector<64x128xf32>
    %60 = arith.truncf %59 : vector<64x128xf32> to vector<64x128xbf16>
    %c7 = arith.constant 7 : index
    %c0_53 = arith.constant 0 : index
    %c0_54 = arith.constant 0 : index
    %61 = vector.load %arg3[%c7, %c0_53, %c0_54] : memref<9x128x128xbf16, #tpu.memory_space<vmem>>, vector<1x128x128xbf16>
    %62 = vector.shape_cast %61 : vector<1x128x128xbf16> to vector<128x128xbf16>
    %cst_55 = arith.constant dense<0.000000e+00> : vector<64x128xf32>
    %63 = tpu.matmul %60, %62, %cst_55 {dimension_numbers = #tpu.dot_dimension_numbers<[1], [0], [0], [1], [0, 0, 1, 1], [], []>} : vector<64x128xbf16>, vector<128x128xbf16>, vector<64x128xf32> -> vector<64x128xf32>
    %64 = arith.addf %56, %63 : vector<64x128xf32>
    %c0_56 = arith.constant 0 : index
    %c2_57 = arith.constant 2 : index
    %c2_58 = arith.constant 2 : index
    %c0_59 = arith.constant 0 : index
    %65 = vector.load %arg2[%c0_56, %c2_57, %c2_58, %c0_59] : memref<1x10x10x128xf32, #tpu.memory_space<vmem>>, vector<1x8x8x128xf32>
    %66 = vector.shape_cast %65 : vector<1x8x8x128xf32> to vector<8x8x128xf32>
    %67 = vector.shape_cast %66 : vector<8x8x128xf32> to vector<64x128xf32>
    %68 = arith.truncf %67 : vector<64x128xf32> to vector<64x128xbf16>
    %c8 = arith.constant 8 : index
    %c0_60 = arith.constant 0 : index
    %c0_61 = arith.constant 0 : index
    %69 = vector.load %arg3[%c8, %c0_60, %c0_61] : memref<9x128x128xbf16, #tpu.memory_space<vmem>>, vector<1x128x128xbf16>
    %70 = vector.shape_cast %69 : vector<1x128x128xbf16> to vector<128x128xbf16>
    %cst_62 = arith.constant dense<0.000000e+00> : vector<64x128xf32>
    %71 = tpu.matmul %68, %70, %cst_62 {dimension_numbers = #tpu.dot_dimension_numbers<[1], [0], [0], [1], [0, 0, 1, 1], [], []>} : vector<64x128xbf16>, vector<128x128xbf16>, vector<64x128xf32> -> vector<64x128xf32>
    %72 = arith.addf %64, %71 : vector<64x128xf32>
    %c0_63 = arith.constant 0 : index
    %c0_64 = arith.constant 0 : index
    %73 = vector.load %arg4[%c0_63, %c0_64] : memref<1x128xf32, #tpu.memory_space<vmem>>, vector<1x128xf32>
    %74 = vector.broadcast %73 : vector<1x128xf32> to vector<64x128xf32>
    %75 = arith.addf %72, %74 : vector<64x128xf32>
    %c0_65 = arith.constant 0 : index
    %c0_66 = arith.constant 0 : index
    %c0_67 = arith.constant 0 : index
    %c0_68 = arith.constant 0 : index
    %76 = vector.load %arg5[%c0_65, %c0_66, %c0_67, %c0_68] : memref<1x8x8x4xf32, #tpu.memory_space<vmem>>, vector<1x8x8x4xf32>
    %77 = vector.shape_cast %76 : vector<1x8x8x4xf32> to vector<8x8x4xf32>
    %78 = vector.shape_cast %77 : vector<8x8x4xf32> to vector<64x4xf32>
    %79 = arith.truncf %78 : vector<64x4xf32> to vector<64x4xbf16>
    %c0_69 = arith.constant 0 : index
    %c0_70 = arith.constant 0 : index
    %80 = vector.load %arg6[%c0_69, %c0_70] : memref<4x128xbf16, #tpu.memory_space<vmem>>, vector<4x128xbf16>
    %cst_71 = arith.constant dense<0.000000e+00> : vector<64x128xf32>
    %81 = tpu.matmul %79, %80, %cst_71 {dimension_numbers = #tpu.dot_dimension_numbers<[1], [0], [0], [1], [0, 0, 1, 1], [], []>} : vector<64x4xbf16>, vector<4x128xbf16>, vector<64x128xf32> -> vector<64x128xf32>
    %c0_72 = arith.constant 0 : index
    %c0_73 = arith.constant 0 : index
    %82 = vector.load %arg7[%c0_72, %c0_73] : memref<1x128xf32, #tpu.memory_space<vmem>>, vector<1x128xf32>
    %83 = vector.broadcast %82 : vector<1x128xf32> to vector<64x128xf32>
    %84 = arith.addf %81, %83 : vector<64x128xf32>
    %85 = arith.addf %75, %84 : vector<64x128xf32>
    %cst_74 = arith.constant 0.000000e+00 : f32
    %86 = vector.broadcast %cst_74 : f32 to vector<64x128xf32>
    %87 = arith.maximumf %85, %86 : vector<64x128xf32>
    %88 = vector.shape_cast %87 : vector<64x128xf32> to vector<1x8x8x128xf32>
    %c0_75 = arith.constant 0 : index
    %c0_76 = arith.constant 0 : index
    %c0_77 = arith.constant 0 : index
    %c0_78 = arith.constant 0 : index
    %89 = vector.load %arg8[%c0_75, %c0_76, %c0_77, %c0_78] : memref<1x8x8x128xf32, #tpu.memory_space<vmem>>, vector<1x8x8x128xf32>
    tpu.vector_store %arg8[%c0_75, %c0_76, %c0_77, %c0_78], %88 {strides = array<i32>} : memref<1x8x8x128xf32, #tpu.memory_space<vmem>>, vector<1x8x8x128xf32>,
    return
  }
  func.func @transform_0(%arg0: i32, %arg1: i32) -> (i32, i32, i32, i32) {
    %c0_i32 = arith.constant 0 : i32
    %c0_i32_0 = arith.constant 0 : i32
    %c0_i32_1 = arith.constant 0 : i32
    %c0_i32_2 = arith.constant 0 : i32
    return %arg0, %c0_i32, %c0_i32_0, %c0_i32_1 : i32, i32, i32, i32
  }
  func.func @transform_1(%arg0: i32, %arg1: i32) -> (i32, i32, i32) {
    %c0_i32 = arith.constant 0 : i32
    %c0_i32_0 = arith.constant 0 : i32
    %c0_i32_1 = arith.constant 0 : i32
    return %c0_i32, %c0_i32_0, %arg1 : i32, i32, i32
  }
  func.func @transform_2(%arg0: i32, %arg1: i32) -> (i32, i32) {
    %c0_i32 = arith.constant 0 : i32
    %c0_i32_0 = arith.constant 0 : i32
    return %c0_i32, %arg1 : i32, i32
  }
  func.func @transform_3(%arg0: i32, %arg1: i32) -> (i32, i32, i32, i32) {
    %c0_i32 = arith.constant 0 : i32
    %c0_i32_0 = arith.constant 0 : i32
    %c0_i32_1 = arith.constant 0 : i32
    %c0_i32_2 = arith.constant 0 : i32
    return %arg0, %c0_i32, %c0_i32_0, %c0_i32_1 : i32, i32, i32, i32
  }
  func.func @transform_4(%arg0: i32, %arg1: i32) -> (i32, i32) {
    %c0_i32 = arith.constant 0 : i32
    %c0_i32_0 = arith.constant 0 : i32
    return %c0_i32, %arg1 : i32, i32
  }
  func.func @transform_5(%arg0: i32, %arg1: i32) -> (i32, i32) {
    %c0_i32 = arith.constant 0 : i32
    %c0_i32_0 = arith.constant 0 : i32
    return %c0_i32, %arg1 : i32, i32
  }
  func.func @transform_6(%arg0: i32, %arg1: i32) -> (i32, i32, i32, i32) {
    %c0_i32 = arith.constant 0 : i32
    %c0_i32_0 = arith.constant 0 : i32
    %c0_i32_1 = arith.constant 0 : i32
    return %arg0, %c0_i32, %c0_i32_0, %arg1 : i32, i32, i32, i32
  }
}

module attributes {stable_mosaic.version = 11 : i64} {
  func.func @_conv3x3_kernel(%arg0: i32, %arg1: i32, %arg2: memref<1x10x10x128xf32, #tpu.memory_space<vmem>>, %arg3: memref<9x128x128xbf16, #tpu.memory_space<vmem>>, %arg4: memref<1x128xf32, #tpu.memory_space<vmem>>, %arg5: memref<1x8x8x128xf32, #tpu.memory_space<vmem>>) attributes {dimension_semantics = [#tpu.dimension_semantics<parallel>, #tpu.dimension_semantics<parallel>], iteration_bounds = array<i64: 2, 1>, scalar_prefetch = 0 : i64, scratch_operands = 0 : i64, tpu.core_type = #tpu.core_type<tc>, window_params = [{transform_indices = @transform_0, window_bounds = array<i64: 1, 10, 10, 128>}, {transform_indices = @transform_1, window_bounds = array<i64: 9, 128, 128>}, {transform_indices = @transform_2, window_bounds = array<i64: 1, 128>}, {transform_indices = @transform_3, window_bounds = array<i64: 1, 8, 8, 128>}]} {
    %cst = arith.constant 0.000000e+00 : f32
    %0 = vector.broadcast %cst : f32 to vector<64x128xf32>
    %c0 = arith.constant 0 : index
    %c0_0 = arith.constant 0 : index
    %c0_1 = arith.constant 0 : index
    %c0_2 = arith.constant 0 : index
    %1 = vector.load %arg2[%c0, %c0_0, %c0_1, %c0_2] : memref<1x10x10x128xf32, #tpu.memory_space<vmem>>, vector<1x8x8x128xf32>
    %2 = vector.shape_cast %1 : vector<1x8x8x128xf32> to vector<8x8x128xf32>
    %3 = vector.shape_cast %2 : vector<8x8x128xf32> to vector<64x128xf32>
    %4 = arith.truncf %3 : vector<64x128xf32> to vector<64x128xbf16>
    %c0_3 = arith.constant 0 : index
    %c0_4 = arith.constant 0 : index
    %c0_5 = arith.constant 0 : index
    %5 = vector.load %arg3[%c0_3, %c0_4, %c0_5] : memref<9x128x128xbf16, #tpu.memory_space<vmem>>, vector<1x128x128xbf16>
    %6 = vector.shape_cast %5 : vector<1x128x128xbf16> to vector<128x128xbf16>
    %cst_6 = arith.constant dense<0.000000e+00> : vector<64x128xf32>
    %7 = tpu.matmul %4, %6, %cst_6 {dimension_numbers = #tpu.dot_dimension_numbers<[1], [0], [0], [1], [0, 0, 1, 1], [], []>} : vector<64x128xbf16>, vector<128x128xbf16>, vector<64x128xf32> -> vector<64x128xf32>
    %8 = arith.addf %0, %7 : vector<64x128xf32>
    %c0_7 = arith.constant 0 : index
    %c0_8 = arith.constant 0 : index
    %c1 = arith.constant 1 : index
    %c0_9 = arith.constant 0 : index
    %9 = vector.load %arg2[%c0_7, %c0_8, %c1, %c0_9] : memref<1x10x10x128xf32, #tpu.memory_space<vmem>>, vector<1x8x8x128xf32>
    %10 = vector.shape_cast %9 : vector<1x8x8x128xf32> to vector<8x8x128xf32>
    %11 = vector.shape_cast %10 : vector<8x8x128xf32> to vector<64x128xf32>
    %12 = arith.truncf %11 : vector<64x128xf32> to vector<64x128xbf16>
    %c1_10 = arith.constant 1 : index
    %c0_11 = arith.constant 0 : index
    %c0_12 = arith.constant 0 : index
    %13 = vector.load %arg3[%c1_10, %c0_11, %c0_12] : memref<9x128x128xbf16, #tpu.memory_space<vmem>>, vector<1x128x128xbf16>
    %14 = vector.shape_cast %13 : vector<1x128x128xbf16> to vector<128x128xbf16>
    %cst_13 = arith.constant dense<0.000000e+00> : vector<64x128xf32>
    %15 = tpu.matmul %12, %14, %cst_13 {dimension_numbers = #tpu.dot_dimension_numbers<[1], [0], [0], [1], [0, 0, 1, 1], [], []>} : vector<64x128xbf16>, vector<128x128xbf16>, vector<64x128xf32> -> vector<64x128xf32>
    %16 = arith.addf %8, %15 : vector<64x128xf32>
    %c0_14 = arith.constant 0 : index
    %c0_15 = arith.constant 0 : index
    %c2 = arith.constant 2 : index
    %c0_16 = arith.constant 0 : index
    %17 = vector.load %arg2[%c0_14, %c0_15, %c2, %c0_16] : memref<1x10x10x128xf32, #tpu.memory_space<vmem>>, vector<1x8x8x128xf32>
    %18 = vector.shape_cast %17 : vector<1x8x8x128xf32> to vector<8x8x128xf32>
    %19 = vector.shape_cast %18 : vector<8x8x128xf32> to vector<64x128xf32>
    %20 = arith.truncf %19 : vector<64x128xf32> to vector<64x128xbf16>
    %c2_17 = arith.constant 2 : index
    %c0_18 = arith.constant 0 : index
    %c0_19 = arith.constant 0 : index
    %21 = vector.load %arg3[%c2_17, %c0_18, %c0_19] : memref<9x128x128xbf16, #tpu.memory_space<vmem>>, vector<1x128x128xbf16>
    %22 = vector.shape_cast %21 : vector<1x128x128xbf16> to vector<128x128xbf16>
    %cst_20 = arith.constant dense<0.000000e+00> : vector<64x128xf32>
    %23 = tpu.matmul %20, %22, %cst_20 {dimension_numbers = #tpu.dot_dimension_numbers<[1], [0], [0], [1], [0, 0, 1, 1], [], []>} : vector<64x128xbf16>, vector<128x128xbf16>, vector<64x128xf32> -> vector<64x128xf32>
    %24 = arith.addf %16, %23 : vector<64x128xf32>
    %c0_21 = arith.constant 0 : index
    %c1_22 = arith.constant 1 : index
    %c0_23 = arith.constant 0 : index
    %c0_24 = arith.constant 0 : index
    %25 = vector.load %arg2[%c0_21, %c1_22, %c0_23, %c0_24] : memref<1x10x10x128xf32, #tpu.memory_space<vmem>>, vector<1x8x8x128xf32>
    %26 = vector.shape_cast %25 : vector<1x8x8x128xf32> to vector<8x8x128xf32>
    %27 = vector.shape_cast %26 : vector<8x8x128xf32> to vector<64x128xf32>
    %28 = arith.truncf %27 : vector<64x128xf32> to vector<64x128xbf16>
    %c3 = arith.constant 3 : index
    %c0_25 = arith.constant 0 : index
    %c0_26 = arith.constant 0 : index
    %29 = vector.load %arg3[%c3, %c0_25, %c0_26] : memref<9x128x128xbf16, #tpu.memory_space<vmem>>, vector<1x128x128xbf16>
    %30 = vector.shape_cast %29 : vector<1x128x128xbf16> to vector<128x128xbf16>
    %cst_27 = arith.constant dense<0.000000e+00> : vector<64x128xf32>
    %31 = tpu.matmul %28, %30, %cst_27 {dimension_numbers = #tpu.dot_dimension_numbers<[1], [0], [0], [1], [0, 0, 1, 1], [], []>} : vector<64x128xbf16>, vector<128x128xbf16>, vector<64x128xf32> -> vector<64x128xf32>
    %32 = arith.addf %24, %31 : vector<64x128xf32>
    %c0_28 = arith.constant 0 : index
    %c1_29 = arith.constant 1 : index
    %c1_30 = arith.constant 1 : index
    %c0_31 = arith.constant 0 : index
    %33 = vector.load %arg2[%c0_28, %c1_29, %c1_30, %c0_31] : memref<1x10x10x128xf32, #tpu.memory_space<vmem>>, vector<1x8x8x128xf32>
    %34 = vector.shape_cast %33 : vector<1x8x8x128xf32> to vector<8x8x128xf32>
    %35 = vector.shape_cast %34 : vector<8x8x128xf32> to vector<64x128xf32>
    %36 = arith.truncf %35 : vector<64x128xf32> to vector<64x128xbf16>
    %c4 = arith.constant 4 : index
    %c0_32 = arith.constant 0 : index
    %c0_33 = arith.constant 0 : index
    %37 = vector.load %arg3[%c4, %c0_32, %c0_33] : memref<9x128x128xbf16, #tpu.memory_space<vmem>>, vector<1x128x128xbf16>
    %38 = vector.shape_cast %37 : vector<1x128x128xbf16> to vector<128x128xbf16>
    %cst_34 = arith.constant dense<0.000000e+00> : vector<64x128xf32>
    %39 = tpu.matmul %36, %38, %cst_34 {dimension_numbers = #tpu.dot_dimension_numbers<[1], [0], [0], [1], [0, 0, 1, 1], [], []>} : vector<64x128xbf16>, vector<128x128xbf16>, vector<64x128xf32> -> vector<64x128xf32>
    %40 = arith.addf %32, %39 : vector<64x128xf32>
    %c0_35 = arith.constant 0 : index
    %c1_36 = arith.constant 1 : index
    %c2_37 = arith.constant 2 : index
    %c0_38 = arith.constant 0 : index
    %41 = vector.load %arg2[%c0_35, %c1_36, %c2_37, %c0_38] : memref<1x10x10x128xf32, #tpu.memory_space<vmem>>, vector<1x8x8x128xf32>
    %42 = vector.shape_cast %41 : vector<1x8x8x128xf32> to vector<8x8x128xf32>
    %43 = vector.shape_cast %42 : vector<8x8x128xf32> to vector<64x128xf32>
    %44 = arith.truncf %43 : vector<64x128xf32> to vector<64x128xbf16>
    %c5 = arith.constant 5 : index
    %c0_39 = arith.constant 0 : index
    %c0_40 = arith.constant 0 : index
    %45 = vector.load %arg3[%c5, %c0_39, %c0_40] : memref<9x128x128xbf16, #tpu.memory_space<vmem>>, vector<1x128x128xbf16>
    %46 = vector.shape_cast %45 : vector<1x128x128xbf16> to vector<128x128xbf16>
    %cst_41 = arith.constant dense<0.000000e+00> : vector<64x128xf32>
    %47 = tpu.matmul %44, %46, %cst_41 {dimension_numbers = #tpu.dot_dimension_numbers<[1], [0], [0], [1], [0, 0, 1, 1], [], []>} : vector<64x128xbf16>, vector<128x128xbf16>, vector<64x128xf32> -> vector<64x128xf32>
    %48 = arith.addf %40, %47 : vector<64x128xf32>
    %c0_42 = arith.constant 0 : index
    %c2_43 = arith.constant 2 : index
    %c0_44 = arith.constant 0 : index
    %c0_45 = arith.constant 0 : index
    %49 = vector.load %arg2[%c0_42, %c2_43, %c0_44, %c0_45] : memref<1x10x10x128xf32, #tpu.memory_space<vmem>>, vector<1x8x8x128xf32>
    %50 = vector.shape_cast %49 : vector<1x8x8x128xf32> to vector<8x8x128xf32>
    %51 = vector.shape_cast %50 : vector<8x8x128xf32> to vector<64x128xf32>
    %52 = arith.truncf %51 : vector<64x128xf32> to vector<64x128xbf16>
    %c6 = arith.constant 6 : index
    %c0_46 = arith.constant 0 : index
    %c0_47 = arith.constant 0 : index
    %53 = vector.load %arg3[%c6, %c0_46, %c0_47] : memref<9x128x128xbf16, #tpu.memory_space<vmem>>, vector<1x128x128xbf16>
    %54 = vector.shape_cast %53 : vector<1x128x128xbf16> to vector<128x128xbf16>
    %cst_48 = arith.constant dense<0.000000e+00> : vector<64x128xf32>
    %55 = tpu.matmul %52, %54, %cst_48 {dimension_numbers = #tpu.dot_dimension_numbers<[1], [0], [0], [1], [0, 0, 1, 1], [], []>} : vector<64x128xbf16>, vector<128x128xbf16>, vector<64x128xf32> -> vector<64x128xf32>
    %56 = arith.addf %48, %55 : vector<64x128xf32>
    %c0_49 = arith.constant 0 : index
    %c2_50 = arith.constant 2 : index
    %c1_51 = arith.constant 1 : index
    %c0_52 = arith.constant 0 : index
    %57 = vector.load %arg2[%c0_49, %c2_50, %c1_51, %c0_52] : memref<1x10x10x128xf32, #tpu.memory_space<vmem>>, vector<1x8x8x128xf32>
    %58 = vector.shape_cast %57 : vector<1x8x8x128xf32> to vector<8x8x128xf32>
    %59 = vector.shape_cast %58 : vector<8x8x128xf32> to vector<64x128xf32>
    %60 = arith.truncf %59 : vector<64x128xf32> to vector<64x128xbf16>
    %c7 = arith.constant 7 : index
    %c0_53 = arith.constant 0 : index
    %c0_54 = arith.constant 0 : index
    %61 = vector.load %arg3[%c7, %c0_53, %c0_54] : memref<9x128x128xbf16, #tpu.memory_space<vmem>>, vector<1x128x128xbf16>
    %62 = vector.shape_cast %61 : vector<1x128x128xbf16> to vector<128x128xbf16>
    %cst_55 = arith.constant dense<0.000000e+00> : vector<64x128xf32>
    %63 = tpu.matmul %60, %62, %cst_55 {dimension_numbers = #tpu.dot_dimension_numbers<[1], [0], [0], [1], [0, 0, 1, 1], [], []>} : vector<64x128xbf16>, vector<128x128xbf16>, vector<64x128xf32> -> vector<64x128xf32>
    %64 = arith.addf %56, %63 : vector<64x128xf32>
    %c0_56 = arith.constant 0 : index
    %c2_57 = arith.constant 2 : index
    %c2_58 = arith.constant 2 : index
    %c0_59 = arith.constant 0 : index
    %65 = vector.load %arg2[%c0_56, %c2_57, %c2_58, %c0_59] : memref<1x10x10x128xf32, #tpu.memory_space<vmem>>, vector<1x8x8x128xf32>
    %66 = vector.shape_cast %65 : vector<1x8x8x128xf32> to vector<8x8x128xf32>
    %67 = vector.shape_cast %66 : vector<8x8x128xf32> to vector<64x128xf32>
    %68 = arith.truncf %67 : vector<64x128xf32> to vector<64x128xbf16>
    %c8 = arith.constant 8 : index
    %c0_60 = arith.constant 0 : index
    %c0_61 = arith.constant 0 : index
    %69 = vector.load %arg3[%c8, %c0_60, %c0_61] : memref<9x128x128xbf16, #tpu.memory_space<vmem>>, vector<1x128x128xbf16>
    %70 = vector.shape_cast %69 : vector<1x128x128xbf16> to vector<128x128xbf16>
    %cst_62 = arith.constant dense<0.000000e+00> : vector<64x128xf32>
    %71 = tpu.matmul %68, %70, %cst_62 {dimension_numbers = #tpu.dot_dimension_numbers<[1], [0], [0], [1], [0, 0, 1, 1], [], []>} : vector<64x128xbf16>, vector<128x128xbf16>, vector<64x128xf32> -> vector<64x128xf32>
    %72 = arith.addf %64, %71 : vector<64x128xf32>
    %c0_63 = arith.constant 0 : index
    %c0_64 = arith.constant 0 : index
    %73 = vector.load %arg4[%c0_63, %c0_64] : memref<1x128xf32, #tpu.memory_space<vmem>>, vector<1x128xf32>
    %74 = vector.broadcast %73 : vector<1x128xf32> to vector<64x128xf32>
    %75 = arith.addf %72, %74 : vector<64x128xf32>
    %cst_65 = arith.constant 0.000000e+00 : f32
    %76 = vector.broadcast %cst_65 : f32 to vector<64x128xf32>
    %77 = arith.maximumf %75, %76 : vector<64x128xf32>
    %78 = vector.shape_cast %77 : vector<64x128xf32> to vector<1x8x8x128xf32>
    %c0_66 = arith.constant 0 : index
    %c0_67 = arith.constant 0 : index
    %c0_68 = arith.constant 0 : index
    %c0_69 = arith.constant 0 : index
    %79 = vector.load %arg5[%c0_66, %c0_67, %c0_68, %c0_69] : memref<1x8x8x128xf32, #tpu.memory_space<vmem>>, vector<1x8x8x128xf32>
    tpu.vector_store %arg5[%c0_66, %c0_67, %c0_68, %c0_69], %78 {strides = array<i32>} : memref<1x8x8x128xf32, #tpu.memory_space<vmem>>, vector<1x8x8x128xf32>,
    return
  }
  func.func @transform_0(%arg0: i32, %arg1: i32) -> (i32, i32, i32, i32) {
    %c0_i32 = arith.constant 0 : i32
    %c0_i32_0 = arith.constant 0 : i32
    %c0_i32_1 = arith.constant 0 : i32
    %c0_i32_2 = arith.constant 0 : i32
    return %arg0, %c0_i32, %c0_i32_0, %c0_i32_1 : i32, i32, i32, i32
  }
  func.func @transform_1(%arg0: i32, %arg1: i32) -> (i32, i32, i32) {
    %c0_i32 = arith.constant 0 : i32
    %c0_i32_0 = arith.constant 0 : i32
    %c0_i32_1 = arith.constant 0 : i32
    return %c0_i32, %c0_i32_0, %arg1 : i32, i32, i32
  }
  func.func @transform_2(%arg0: i32, %arg1: i32) -> (i32, i32) {
    %c0_i32 = arith.constant 0 : i32
    %c0_i32_0 = arith.constant 0 : i32
    return %c0_i32, %arg1 : i32, i32
  }
  func.func @transform_3(%arg0: i32, %arg1: i32) -> (i32, i32, i32, i32) {
    %c0_i32 = arith.constant 0 : i32
    %c0_i32_0 = arith.constant 0 : i32
    %c0_i32_1 = arith.constant 0 : i32
    return %arg0, %c0_i32, %c0_i32_0, %arg1 : i32, i32, i32, i32
  }
}

module attributes {stable_mosaic.version = 11 : i64} {
  func.func @_conv3x3_res_kernel(%arg0: i32, %arg1: i32, %arg2: memref<1x10x10x128xf32, #tpu.memory_space<vmem>>, %arg3: memref<9x128x128xbf16, #tpu.memory_space<vmem>>, %arg4: memref<1x128xf32, #tpu.memory_space<vmem>>, %arg5: memref<1x8x8x128xf32, #tpu.memory_space<vmem>>, %arg6: memref<1x8x8x128xf32, #tpu.memory_space<vmem>>) attributes {dimension_semantics = [#tpu.dimension_semantics<parallel>, #tpu.dimension_semantics<parallel>], iteration_bounds = array<i64: 2, 1>, scalar_prefetch = 0 : i64, scratch_operands = 0 : i64, tpu.core_type = #tpu.core_type<tc>, window_params = [{transform_indices = @transform_0, window_bounds = array<i64: 1, 10, 10, 128>}, {transform_indices = @transform_1, window_bounds = array<i64: 9, 128, 128>}, {transform_indices = @transform_2, window_bounds = array<i64: 1, 128>}, {transform_indices = @transform_3, window_bounds = array<i64: 1, 8, 8, 128>}, {transform_indices = @transform_4, window_bounds = array<i64: 1, 8, 8, 128>}]} {
    %cst = arith.constant 0.000000e+00 : f32
    %0 = vector.broadcast %cst : f32 to vector<64x128xf32>
    %c0 = arith.constant 0 : index
    %c0_0 = arith.constant 0 : index
    %c0_1 = arith.constant 0 : index
    %c0_2 = arith.constant 0 : index
    %1 = vector.load %arg2[%c0, %c0_0, %c0_1, %c0_2] : memref<1x10x10x128xf32, #tpu.memory_space<vmem>>, vector<1x8x8x128xf32>
    %2 = vector.shape_cast %1 : vector<1x8x8x128xf32> to vector<8x8x128xf32>
    %3 = vector.shape_cast %2 : vector<8x8x128xf32> to vector<64x128xf32>
    %4 = arith.truncf %3 : vector<64x128xf32> to vector<64x128xbf16>
    %c0_3 = arith.constant 0 : index
    %c0_4 = arith.constant 0 : index
    %c0_5 = arith.constant 0 : index
    %5 = vector.load %arg3[%c0_3, %c0_4, %c0_5] : memref<9x128x128xbf16, #tpu.memory_space<vmem>>, vector<1x128x128xbf16>
    %6 = vector.shape_cast %5 : vector<1x128x128xbf16> to vector<128x128xbf16>
    %cst_6 = arith.constant dense<0.000000e+00> : vector<64x128xf32>
    %7 = tpu.matmul %4, %6, %cst_6 {dimension_numbers = #tpu.dot_dimension_numbers<[1], [0], [0], [1], [0, 0, 1, 1], [], []>} : vector<64x128xbf16>, vector<128x128xbf16>, vector<64x128xf32> -> vector<64x128xf32>
    %8 = arith.addf %0, %7 : vector<64x128xf32>
    %c0_7 = arith.constant 0 : index
    %c0_8 = arith.constant 0 : index
    %c1 = arith.constant 1 : index
    %c0_9 = arith.constant 0 : index
    %9 = vector.load %arg2[%c0_7, %c0_8, %c1, %c0_9] : memref<1x10x10x128xf32, #tpu.memory_space<vmem>>, vector<1x8x8x128xf32>
    %10 = vector.shape_cast %9 : vector<1x8x8x128xf32> to vector<8x8x128xf32>
    %11 = vector.shape_cast %10 : vector<8x8x128xf32> to vector<64x128xf32>
    %12 = arith.truncf %11 : vector<64x128xf32> to vector<64x128xbf16>
    %c1_10 = arith.constant 1 : index
    %c0_11 = arith.constant 0 : index
    %c0_12 = arith.constant 0 : index
    %13 = vector.load %arg3[%c1_10, %c0_11, %c0_12] : memref<9x128x128xbf16, #tpu.memory_space<vmem>>, vector<1x128x128xbf16>
    %14 = vector.shape_cast %13 : vector<1x128x128xbf16> to vector<128x128xbf16>
    %cst_13 = arith.constant dense<0.000000e+00> : vector<64x128xf32>
    %15 = tpu.matmul %12, %14, %cst_13 {dimension_numbers = #tpu.dot_dimension_numbers<[1], [0], [0], [1], [0, 0, 1, 1], [], []>} : vector<64x128xbf16>, vector<128x128xbf16>, vector<64x128xf32> -> vector<64x128xf32>
    %16 = arith.addf %8, %15 : vector<64x128xf32>
    %c0_14 = arith.constant 0 : index
    %c0_15 = arith.constant 0 : index
    %c2 = arith.constant 2 : index
    %c0_16 = arith.constant 0 : index
    %17 = vector.load %arg2[%c0_14, %c0_15, %c2, %c0_16] : memref<1x10x10x128xf32, #tpu.memory_space<vmem>>, vector<1x8x8x128xf32>
    %18 = vector.shape_cast %17 : vector<1x8x8x128xf32> to vector<8x8x128xf32>
    %19 = vector.shape_cast %18 : vector<8x8x128xf32> to vector<64x128xf32>
    %20 = arith.truncf %19 : vector<64x128xf32> to vector<64x128xbf16>
    %c2_17 = arith.constant 2 : index
    %c0_18 = arith.constant 0 : index
    %c0_19 = arith.constant 0 : index
    %21 = vector.load %arg3[%c2_17, %c0_18, %c0_19] : memref<9x128x128xbf16, #tpu.memory_space<vmem>>, vector<1x128x128xbf16>
    %22 = vector.shape_cast %21 : vector<1x128x128xbf16> to vector<128x128xbf16>
    %cst_20 = arith.constant dense<0.000000e+00> : vector<64x128xf32>
    %23 = tpu.matmul %20, %22, %cst_20 {dimension_numbers = #tpu.dot_dimension_numbers<[1], [0], [0], [1], [0, 0, 1, 1], [], []>} : vector<64x128xbf16>, vector<128x128xbf16>, vector<64x128xf32> -> vector<64x128xf32>
    %24 = arith.addf %16, %23 : vector<64x128xf32>
    %c0_21 = arith.constant 0 : index
    %c1_22 = arith.constant 1 : index
    %c0_23 = arith.constant 0 : index
    %c0_24 = arith.constant 0 : index
    %25 = vector.load %arg2[%c0_21, %c1_22, %c0_23, %c0_24] : memref<1x10x10x128xf32, #tpu.memory_space<vmem>>, vector<1x8x8x128xf32>
    %26 = vector.shape_cast %25 : vector<1x8x8x128xf32> to vector<8x8x128xf32>
    %27 = vector.shape_cast %26 : vector<8x8x128xf32> to vector<64x128xf32>
    %28 = arith.truncf %27 : vector<64x128xf32> to vector<64x128xbf16>
    %c3 = arith.constant 3 : index
    %c0_25 = arith.constant 0 : index
    %c0_26 = arith.constant 0 : index
    %29 = vector.load %arg3[%c3, %c0_25, %c0_26] : memref<9x128x128xbf16, #tpu.memory_space<vmem>>, vector<1x128x128xbf16>
    %30 = vector.shape_cast %29 : vector<1x128x128xbf16> to vector<128x128xbf16>
    %cst_27 = arith.constant dense<0.000000e+00> : vector<64x128xf32>
    %31 = tpu.matmul %28, %30, %cst_27 {dimension_numbers = #tpu.dot_dimension_numbers<[1], [0], [0], [1], [0, 0, 1, 1], [], []>} : vector<64x128xbf16>, vector<128x128xbf16>, vector<64x128xf32> -> vector<64x128xf32>
    %32 = arith.addf %24, %31 : vector<64x128xf32>
    %c0_28 = arith.constant 0 : index
    %c1_29 = arith.constant 1 : index
    %c1_30 = arith.constant 1 : index
    %c0_31 = arith.constant 0 : index
    %33 = vector.load %arg2[%c0_28, %c1_29, %c1_30, %c0_31] : memref<1x10x10x128xf32, #tpu.memory_space<vmem>>, vector<1x8x8x128xf32>
    %34 = vector.shape_cast %33 : vector<1x8x8x128xf32> to vector<8x8x128xf32>
    %35 = vector.shape_cast %34 : vector<8x8x128xf32> to vector<64x128xf32>
    %36 = arith.truncf %35 : vector<64x128xf32> to vector<64x128xbf16>
    %c4 = arith.constant 4 : index
    %c0_32 = arith.constant 0 : index
    %c0_33 = arith.constant 0 : index
    %37 = vector.load %arg3[%c4, %c0_32, %c0_33] : memref<9x128x128xbf16, #tpu.memory_space<vmem>>, vector<1x128x128xbf16>
    %38 = vector.shape_cast %37 : vector<1x128x128xbf16> to vector<128x128xbf16>
    %cst_34 = arith.constant dense<0.000000e+00> : vector<64x128xf32>
    %39 = tpu.matmul %36, %38, %cst_34 {dimension_numbers = #tpu.dot_dimension_numbers<[1], [0], [0], [1], [0, 0, 1, 1], [], []>} : vector<64x128xbf16>, vector<128x128xbf16>, vector<64x128xf32> -> vector<64x128xf32>
    %40 = arith.addf %32, %39 : vector<64x128xf32>
    %c0_35 = arith.constant 0 : index
    %c1_36 = arith.constant 1 : index
    %c2_37 = arith.constant 2 : index
    %c0_38 = arith.constant 0 : index
    %41 = vector.load %arg2[%c0_35, %c1_36, %c2_37, %c0_38] : memref<1x10x10x128xf32, #tpu.memory_space<vmem>>, vector<1x8x8x128xf32>
    %42 = vector.shape_cast %41 : vector<1x8x8x128xf32> to vector<8x8x128xf32>
    %43 = vector.shape_cast %42 : vector<8x8x128xf32> to vector<64x128xf32>
    %44 = arith.truncf %43 : vector<64x128xf32> to vector<64x128xbf16>
    %c5 = arith.constant 5 : index
    %c0_39 = arith.constant 0 : index
    %c0_40 = arith.constant 0 : index
    %45 = vector.load %arg3[%c5, %c0_39, %c0_40] : memref<9x128x128xbf16, #tpu.memory_space<vmem>>, vector<1x128x128xbf16>
    %46 = vector.shape_cast %45 : vector<1x128x128xbf16> to vector<128x128xbf16>
    %cst_41 = arith.constant dense<0.000000e+00> : vector<64x128xf32>
    %47 = tpu.matmul %44, %46, %cst_41 {dimension_numbers = #tpu.dot_dimension_numbers<[1], [0], [0], [1], [0, 0, 1, 1], [], []>} : vector<64x128xbf16>, vector<128x128xbf16>, vector<64x128xf32> -> vector<64x128xf32>
    %48 = arith.addf %40, %47 : vector<64x128xf32>
    %c0_42 = arith.constant 0 : index
    %c2_43 = arith.constant 2 : index
    %c0_44 = arith.constant 0 : index
    %c0_45 = arith.constant 0 : index
    %49 = vector.load %arg2[%c0_42, %c2_43, %c0_44, %c0_45] : memref<1x10x10x128xf32, #tpu.memory_space<vmem>>, vector<1x8x8x128xf32>
    %50 = vector.shape_cast %49 : vector<1x8x8x128xf32> to vector<8x8x128xf32>
    %51 = vector.shape_cast %50 : vector<8x8x128xf32> to vector<64x128xf32>
    %52 = arith.truncf %51 : vector<64x128xf32> to vector<64x128xbf16>
    %c6 = arith.constant 6 : index
    %c0_46 = arith.constant 0 : index
    %c0_47 = arith.constant 0 : index
    %53 = vector.load %arg3[%c6, %c0_46, %c0_47] : memref<9x128x128xbf16, #tpu.memory_space<vmem>>, vector<1x128x128xbf16>
    %54 = vector.shape_cast %53 : vector<1x128x128xbf16> to vector<128x128xbf16>
    %cst_48 = arith.constant dense<0.000000e+00> : vector<64x128xf32>
    %55 = tpu.matmul %52, %54, %cst_48 {dimension_numbers = #tpu.dot_dimension_numbers<[1], [0], [0], [1], [0, 0, 1, 1], [], []>} : vector<64x128xbf16>, vector<128x128xbf16>, vector<64x128xf32> -> vector<64x128xf32>
    %56 = arith.addf %48, %55 : vector<64x128xf32>
    %c0_49 = arith.constant 0 : index
    %c2_50 = arith.constant 2 : index
    %c1_51 = arith.constant 1 : index
    %c0_52 = arith.constant 0 : index
    %57 = vector.load %arg2[%c0_49, %c2_50, %c1_51, %c0_52] : memref<1x10x10x128xf32, #tpu.memory_space<vmem>>, vector<1x8x8x128xf32>
    %58 = vector.shape_cast %57 : vector<1x8x8x128xf32> to vector<8x8x128xf32>
    %59 = vector.shape_cast %58 : vector<8x8x128xf32> to vector<64x128xf32>
    %60 = arith.truncf %59 : vector<64x128xf32> to vector<64x128xbf16>
    %c7 = arith.constant 7 : index
    %c0_53 = arith.constant 0 : index
    %c0_54 = arith.constant 0 : index
    %61 = vector.load %arg3[%c7, %c0_53, %c0_54] : memref<9x128x128xbf16, #tpu.memory_space<vmem>>, vector<1x128x128xbf16>
    %62 = vector.shape_cast %61 : vector<1x128x128xbf16> to vector<128x128xbf16>
    %cst_55 = arith.constant dense<0.000000e+00> : vector<64x128xf32>
    %63 = tpu.matmul %60, %62, %cst_55 {dimension_numbers = #tpu.dot_dimension_numbers<[1], [0], [0], [1], [0, 0, 1, 1], [], []>} : vector<64x128xbf16>, vector<128x128xbf16>, vector<64x128xf32> -> vector<64x128xf32>
    %64 = arith.addf %56, %63 : vector<64x128xf32>
    %c0_56 = arith.constant 0 : index
    %c2_57 = arith.constant 2 : index
    %c2_58 = arith.constant 2 : index
    %c0_59 = arith.constant 0 : index
    %65 = vector.load %arg2[%c0_56, %c2_57, %c2_58, %c0_59] : memref<1x10x10x128xf32, #tpu.memory_space<vmem>>, vector<1x8x8x128xf32>
    %66 = vector.shape_cast %65 : vector<1x8x8x128xf32> to vector<8x8x128xf32>
    %67 = vector.shape_cast %66 : vector<8x8x128xf32> to vector<64x128xf32>
    %68 = arith.truncf %67 : vector<64x128xf32> to vector<64x128xbf16>
    %c8 = arith.constant 8 : index
    %c0_60 = arith.constant 0 : index
    %c0_61 = arith.constant 0 : index
    %69 = vector.load %arg3[%c8, %c0_60, %c0_61] : memref<9x128x128xbf16, #tpu.memory_space<vmem>>, vector<1x128x128xbf16>
    %70 = vector.shape_cast %69 : vector<1x128x128xbf16> to vector<128x128xbf16>
    %cst_62 = arith.constant dense<0.000000e+00> : vector<64x128xf32>
    %71 = tpu.matmul %68, %70, %cst_62 {dimension_numbers = #tpu.dot_dimension_numbers<[1], [0], [0], [1], [0, 0, 1, 1], [], []>} : vector<64x128xbf16>, vector<128x128xbf16>, vector<64x128xf32> -> vector<64x128xf32>
    %72 = arith.addf %64, %71 : vector<64x128xf32>
    %c0_63 = arith.constant 0 : index
    %c0_64 = arith.constant 0 : index
    %73 = vector.load %arg4[%c0_63, %c0_64] : memref<1x128xf32, #tpu.memory_space<vmem>>, vector<1x128xf32>
    %74 = vector.broadcast %73 : vector<1x128xf32> to vector<64x128xf32>
    %75 = arith.addf %72, %74 : vector<64x128xf32>
    %c0_65 = arith.constant 0 : index
    %c0_66 = arith.constant 0 : index
    %c0_67 = arith.constant 0 : index
    %c0_68 = arith.constant 0 : index
    %76 = vector.load %arg5[%c0_65, %c0_66, %c0_67, %c0_68] : memref<1x8x8x128xf32, #tpu.memory_space<vmem>>, vector<1x8x8x128xf32>
    %77 = vector.shape_cast %76 : vector<1x8x8x128xf32> to vector<8x8x128xf32>
    %78 = vector.shape_cast %77 : vector<8x8x128xf32> to vector<64x128xf32>
    %79 = arith.addf %75, %78 : vector<64x128xf32>
    %cst_69 = arith.constant 0.000000e+00 : f32
    %80 = vector.broadcast %cst_69 : f32 to vector<64x128xf32>
    %81 = arith.maximumf %79, %80 : vector<64x128xf32>
    %82 = vector.shape_cast %81 : vector<64x128xf32> to vector<1x8x8x128xf32>
    %c0_70 = arith.constant 0 : index
    %c0_71 = arith.constant 0 : index
    %c0_72 = arith.constant 0 : index
    %c0_73 = arith.constant 0 : index
    %83 = vector.load %arg6[%c0_70, %c0_71, %c0_72, %c0_73] : memref<1x8x8x128xf32, #tpu.memory_space<vmem>>, vector<1x8x8x128xf32>
    tpu.vector_store %arg6[%c0_70, %c0_71, %c0_72, %c0_73], %82 {strides = array<i32>} : memref<1x8x8x128xf32, #tpu.memory_space<vmem>>, vector<1x8x8x128xf32>,
    return
  }
  func.func @transform_0(%arg0: i32, %arg1: i32) -> (i32, i32, i32, i32) {
    %c0_i32 = arith.constant 0 : i32
    %c0_i32_0 = arith.constant 0 : i32
    %c0_i32_1 = arith.constant 0 : i32
    %c0_i32_2 = arith.constant 0 : i32
    return %arg0, %c0_i32, %c0_i32_0, %c0_i32_1 : i32, i32, i32, i32
  }
  func.func @transform_1(%arg0: i32, %arg1: i32) -> (i32, i32, i32) {
    %c0_i32 = arith.constant 0 : i32
    %c0_i32_0 = arith.constant 0 : i32
    %c0_i32_1 = arith.constant 0 : i32
    return %c0_i32, %c0_i32_0, %arg1 : i32, i32, i32
  }
  func.func @transform_2(%arg0: i32, %arg1: i32) -> (i32, i32) {
    %c0_i32 = arith.constant 0 : i32
    %c0_i32_0 = arith.constant 0 : i32
    return %c0_i32, %arg1 : i32, i32
  }
  func.func @transform_3(%arg0: i32, %arg1: i32) -> (i32, i32, i32, i32) {
    %c0_i32 = arith.constant 0 : i32
    %c0_i32_0 = arith.constant 0 : i32
    %c0_i32_1 = arith.constant 0 : i32
    return %arg0, %c0_i32, %c0_i32_0, %arg1 : i32, i32, i32, i32
  }
  func.func @transform_4(%arg0: i32, %arg1: i32) -> (i32, i32, i32, i32) {
    %c0_i32 = arith.constant 0 : i32
    %c0_i32_0 = arith.constant 0 : i32
    %c0_i32_1 = arith.constant 0 : i32
    return %arg0, %c0_i32, %c0_i32_0, %arg1 : i32, i32, i32, i32
  }
}

</mosaic_0001>

<llo_original>
// kernel: run.4
$region0: #{run.4}
  #allocation0 [shape = 'u32[]', space=smem, size = 0x4, offset = 0x4, fixed_abs, tag = 'smem constant byte address 0x4 - core index']
  #allocation1 [shape = 'u32[144,128]{1,0:T(1,128)}', space=vmem, size = 0x12000, scoped, tag = 'internal scratch']
  %s0 = inlined_call_operand.vmem [shape: bf16[128,36], index: 0, kind: input, shape index: {}]
  %s1 = inlined_call_operand.vmem [shape: bf16[36,128], index: 1, kind: input, shape index: {}]
  %s2 = inlined_call_operand.vmem [shape: f32[1,128], index: 2, kind: input, shape index: {}]
  %s3 = inlined_call_operand.vmem [shape: f32[128,128], index: 3, kind: output, shape index: {}]
  %s4 = sld [smem:[#allocation0]]
  $region22: #{run.4} parent=0
    _
  %s6 = ssub.s32 1, %s4
  %s7 = scalar_select 0, %s6, %s4
  // Predicated region
  $region2: #{run.4} parent=0 // pred_check
    _
  $region3: #{run.4} parent=0 // pred_check_branch
    %9 = sbr.rel (0) target = $region5
  $region4: #{run.4} parent=0 // pred_region
    _
  $region5: #{run.4} parent=0 // pred_fallthru
    _
  // Predicated region
  $region6: #{run.4} parent=0 // pred_check
    _
  $region7: #{run.4} parent=0 // pred_check_branch
    %11 = sbr.rel (0) target = $region9
  $region8: #{run.4} parent=0 // pred_region
    _
  $region9: #{run.4} parent=0 // pred_fallthru
    _
  // Predicated region
  $region10: #{run.4} parent=0 // pred_check
    _
  $region11: #{run.4} parent=0 // pred_check_branch
    %13 = sbr.rel (0) target = $region13
  $region12: #{run.4} parent=0 // pred_region
    _
  $region13: #{run.4} parent=0 // pred_fallthru
    _
  %v15 = vld [vmem:[%s0] sm:$0xf]
  %v16 = vld [vmem:[%s0 + $0x4] sm:$0xf]
  %v17 = vld [vmem:[%s0 + $0x8] sm:$0xf]
  %v18 = vld [vmem:[%s0 + $0xc] sm:$0xf]
  %v19 = vld [vmem:[%s0 + $0x10] sm:$0xf]
  %v20 = vld [vmem:[%s0 + $0x14] sm:$0xf]
  %v21 = vld [vmem:[%s0 + $0x18] sm:$0xf]
  %v22 = vld [vmem:[%s0 + $0x1c] sm:$0xf]
  %v23 = vld [vmem:[%s0 + $0x20] sm:$0xf]
  %v24 = vld [vmem:[%s0 + $0x24] sm:$0xf]
  %v25 = vld [vmem:[%s0 + $0x28] sm:$0xf]
  %v26 = vld [vmem:[%s0 + $0x2c] sm:$0xf]
  %v27 = vld [vmem:[%s0 + $0x30] sm:$0xf]
  %v28 = vld [vmem:[%s0 + $0x34] sm:$0xf]
  %v29 = vld [vmem:[%s0 + $0x38] sm:$0xf]
  %v30 = vld [vmem:[%s0 + $0x3c] sm:$0xf]
  %v31 = vld [vmem:[%s1] sm:$0xf]
  %v32 = vld [vmem:[%s1 + $0x4] sm:$0xf]
  %v33 = vld [vmem:[%s1 + $0x8] sm:$0xf]
  %v34 = vld [vmem:[%s1 + $0xc] sm:$0xf]
  %v35 = vld [vmem:[%s1 + $0x10] sm:$0x3]
  %v36 = vld [vmem:[%s2] sm:$0x1]
  %v38 = vlaneseq
  %v39 = vshrl.u32 %v38, 7
  %v40 = vsub.s32 0, %v39
  %v41 = vrot.slane %v36, %v40
  %v59 = vunpack.c.l.b16 %v15
  %v60 = vunpack.c.l.b16 %v16
  %v61 = vunpack.c.l.b16 %v17
  %v62 = vunpack.c.l.b16 %v18
  %v63 = vunpack.c.l.b16 %v19
  %v64 = vunpack.c.l.b16 %v20
  %v65 = vunpack.c.l.b16 %v21
  %v66 = vunpack.c.l.b16 %v22
  %v67 = vunpack.c.l.b16 %v23
  %v68 = vunpack.c.l.b16 %v24
  %v69 = vunpack.c.l.b16 %v25
  %v70 = vunpack.c.l.b16 %v26
  %v71 = vunpack.c.l.b16 %v27
  %v72 = vunpack.c.l.b16 %v28
  %v73 = vunpack.c.l.b16 %v29
  %v74 = vunpack.c.l.b16 %v30
  %v75 = vpack.c.b16 %v60, %v59
  %v76 = vpack.c.b16 %v62, %v61
  %v77 = vpack.c.b16 %v64, %v63
  %v78 = vpack.c.b16 %v66, %v65
  %v79 = vpack.c.b16 %v68, %v67
  %v80 = vpack.c.b16 %v70, %v69
  %v81 = vpack.c.b16 %v72, %v71
  %v82 = vpack.c.b16 %v74, %v73
  %v88 = vunpack.c.l.b16 %v31
  %v89 = vunpack.c.l.b16 %v32
  %v90 = vunpack.c.l.b16 %v33
  %v91 = vunpack.c.l.b16 %v34
  %v92 = vunpack.c.l.b16 %v35
  %v93 = vpack.c.b16 %v89, %v88
  %v94 = vpack.c.b16 %v91, %v90
  %v95 = vpack.c.b16 %v92, %v92
  %vm98 = vcmask 293888
  %v100 = vsel %vm98, %v75, 0
  %v103 = vsel %vm98, %v76, 0
  %v106 = vsel %vm98, %v77, 0
  %v109 = vsel %vm98, %v78, 0
  %v112 = vsel %vm98, %v79, 0
  %v115 = vsel %vm98, %v80, 0
  %v118 = vsel %vm98, %v81, 0
  %v121 = vsel %vm98, %v82, 0
  %vm123 = vcmask 1041408
  %v125 = vsel %vm123, %v95, 0
  %127 = vmatprep.subr.bf16.mxu0 0
  %128 = vmatpush1.bf16.msra.mxu0 0
  %129 = vmatprep.subr.bf16.mxu0 0
  %130 = vmatpush1.bf16.msra.mxu0 0
  %131 = vmatprep.subr.bf16.mxu0 0
  %132 = vmatpush1.bf16.msra.mxu0 0
  %133 = vmatprep.subr.bf16.mxu0 0
  %134 = vmatpush1.bf16.msra.mxu0 0
  %135 = vmatprep.subr.bf16.mxu0 0
  %136 = vmatpush1.bf16.msra.mxu0 0
  %137 = vmatprep.subr.bf16.mxu0 0
  %138 = vmatpush1.bf16.msra.mxu0 %v125
  %139 = vmatprep.subr.bf16.mxu0 0
  %140 = vmatpush1.bf16.msra.mxu0 %v94
  %141 = vmatprep.subr.bf16.mxu0 0
  %142 = vmatpush1.bf16.msra.mxu0 %v93
  %143 = vmatprep.subr.bf16.mxu0 0
  %144 = vmatpush2.bf16.msra.mxu0 0
  %145 = vmatprep.subr.bf16.mxu0 0
  %146 = vmatpush2.bf16.msra.mxu0 0
  %147 = vmatprep.subr.bf16.mxu0 0
  %148 = vmatpush2.bf16.msra.mxu0 0
  %149 = vmatprep.subr.bf16.mxu0 0
  %150 = vmatpush2.bf16.msra.mxu0 0
  %151 = vmatprep.subr.bf16.mxu0 0
  %152 = vmatpush2.bf16.msra.mxu0 0
  %153 = vmatprep.subr.bf16.mxu0 0
  %154 = vmatpush2.bf16.msra.mxu0 0
  %155 = vmatprep.subr.bf16.mxu0 0
  %156 = vmatpush2.bf16.msra.mxu0 0
  %157 = vmatprep.subr.bf16.mxu0 0
  %158 = vmatpush2.bf16.msra.mxu0 0
  %159 = vmatprep.mubr.bf16.mxu0 0
  %160 = vmatmul.mubr.bf16.gmra.mxu0 %v100
  %v161 = vpop.f32.mrf.mxu0
  %v162 = vadd.f32 %v41, %v161
  %v163 = vpop.f32.mrf.mxu0
  %v164 = vpop.f32.mrf.mxu0
  %v165 = vadd.f32 %v41, %v164
  %v166 = vpop.f32.mrf.mxu0
  %167 = vmatprep.mubr.bf16.mxu0 0
  %168 = vmatmul.mubr.bf16.gmra.mxu0 %v103
  %v169 = vpop.f32.mrf.mxu0
  %v170 = vadd.f32 %v41, %v169
  %v171 = vpop.f32.mrf.mxu0
  %v172 = vpop.f32.mrf.mxu0
  %v173 = vadd.f32 %v41, %v172
  %v174 = vpop.f32.mrf.mxu0
  %175 = vmatprep.mubr.bf16.mxu0 0
  %176 = vmatmul.mubr.bf16.gmra.mxu0 %v106
  %v177 = vpop.f32.mrf.mxu0
  %v178 = vadd.f32 %v41, %v177
  %v179 = vpop.f32.mrf.mxu0
  %v180 = vpop.f32.mrf.mxu0
  %v181 = vadd.f32 %v41, %v180
  %v182 = vpop.f32.mrf.mxu0
  %183 = vmatprep.mubr.bf16.mxu0 0
  %184 = vmatmul.mubr.bf16.gmra.mxu0 %v109
  %v185 = vpop.f32.mrf.mxu0
  %v186 = vadd.f32 %v41, %v185
  %v187 = vpop.f32.mrf.mxu0
  %v188 = vpop.f32.mrf.mxu0
  %v189 = vadd.f32 %v41, %v188
  %v190 = vpop.f32.mrf.mxu0
  %191 = vmatprep.mubr.bf16.mxu0 0
  %192 = vmatmul.mubr.bf16.gmra.mxu0 %v112
  %v193 = vpop.f32.mrf.mxu0
  %v194 = vadd.f32 %v41, %v193
  %v195 = vpop.f32.mrf.mxu0
  %v196 = vpop.f32.mrf.mxu0
  %v197 = vadd.f32 %v41, %v196
  %v198 = vpop.f32.mrf.mxu0
  %199 = vmatprep.mubr.bf16.mxu0 0
  %200 = vmatmul.mubr.bf16.gmra.mxu0 %v115
  %v201 = vpop.f32.mrf.mxu0
  %v202 = vadd.f32 %v41, %v201
  %v203 = vpop.f32.mrf.mxu0
  %v204 = vpop.f32.mrf.mxu0
  %v205 = vadd.f32 %v41, %v204
  %v206 = vpop.f32.mrf.mxu0
  %207 = vmatprep.mubr.bf16.mxu0 0
  %208 = vmatmul.mubr.bf16.gmra.mxu0 %v118
  %v209 = vpop.f32.mrf.mxu0
  %v210 = vadd.f32 %v41, %v209
  %v211 = vpop.f32.mrf.mxu0
  %v212 = vpop.f32.mrf.mxu0
  %v213 = vadd.f32 %v41, %v212
  %v214 = vpop.f32.mrf.mxu0
  %215 = vmatprep.mubr.bf16.mxu0 0
  %216 = vmatmul.mubr.bf16.gmra.mxu0 %v121
  %v217 = vpop.f32.mrf.mxu0
  %v218 = vadd.f32 %v41, %v217
  %v219 = vpop.f32.mrf.mxu0
  %v220 = vpop.f32.mrf.mxu0
  %v221 = vadd.f32 %v41, %v220
  %v222 = vpop.f32.mrf.mxu0
  %223 = vdwg.mxu0
  %v224 = vmax.f32 %v162, 0.0
  %v225 = vmax.f32 %v165, 0.0
  %v226 = vmax.f32 %v170, 0.0
  %v227 = vmax.f32 %v173, 0.0
  %v228 = vmax.f32 %v178, 0.0
  %v229 = vmax.f32 %v181, 0.0
  %v230 = vmax.f32 %v186, 0.0
  %v231 = vmax.f32 %v189, 0.0
  %v232 = vmax.f32 %v194, 0.0
  %v233 = vmax.f32 %v197, 0.0
  %v234 = vmax.f32 %v202, 0.0
  %v235 = vmax.f32 %v205, 0.0
  %v236 = vmax.f32 %v210, 0.0
  %v237 = vmax.f32 %v213, 0.0
  %v238 = vmax.f32 %v218, 0.0
  %v239 = vmax.f32 %v221, 0.0
  %240 = vst [vmem:[%s3] sm:$0xff] %v224
  %241 = vst [vmem:[%s3 + $0x8] sm:$0xff] %v225
  %242 = vst [vmem:[%s3 + $0x10] sm:$0xff] %v226
  %243 = vst [vmem:[%s3 + $0x18] sm:$0xff] %v227
  %244 = vst [vmem:[%s3 + $0x20] sm:$0xff] %v228
  %245 = vst [vmem:[%s3 + $0x28] sm:$0xff] %v229
  %246 = vst [vmem:[%s3 + $0x30] sm:$0xff] %v230
  %247 = vst [vmem:[%s3 + $0x38] sm:$0xff] %v231
  %248 = vst [vmem:[%s3 + $0x40] sm:$0xff] %v232
  %249 = vst [vmem:[%s3 + $0x48] sm:$0xff] %v233
  %250 = vst [vmem:[%s3 + $0x50] sm:$0xff] %v234
  %251 = vst [vmem:[%s3 + $0x58] sm:$0xff] %v235
  %252 = vst [vmem:[%s3 + $0x60] sm:$0xff] %v236
  %253 = vst [vmem:[%s3 + $0x68] sm:$0xff] %v237
  %254 = vst [vmem:[%s3 + $0x70] sm:$0xff] %v238
  %255 = vst [vmem:[%s3 + $0x78] sm:$0xff] %v239
  // Predicated region
  $region14: #{run.4} parent=0 // pred_check
    _
  $region15: #{run.4} parent=0 // pred_check_branch
    %257 = sbr.rel (0) target = $region17
  $region16: #{run.4} parent=0 // pred_region
    _
  $region17: #{run.4} parent=0 // pred_fallthru
    _
  // Predicated region
  $region18: #{run.4} parent=0 // pred_check
    _
  $region19: #{run.4} parent=0 // pred_check_branch
    %259 = sbr.rel (0) target = $region21
  $region20: #{run.4} parent=0 // pred_region
    _
  $region21: #{run.4} parent=0 // pred_fallthru
    _

// kernel: run.5
$region0: #{run.5}
  #allocation0 [shape = 'u32[]', space=smem, size = 0x4, offset = 0x4, fixed_abs, tag = 'smem constant byte address 0x4 - core index']
  #allocation1 [shape = 'u32[144,128]{1,0:T(1,128)}', space=vmem, size = 0x12000, scoped, tag = 'internal scratch']
  %s0 = inlined_call_operand.vmem [shape: f32[2,10,10,128], index: 0, kind: input, shape index: {}]
  %s1 = inlined_call_operand.vmem [shape: bf16[9,128,128], index: 1, kind: input, shape index: {}]
  %s2 = inlined_call_operand.vmem [shape: f32[1,128], index: 2, kind: input, shape index: {}]
  %s3 = inlined_call_operand.vmem [shape: f32[2,8,8,4], index: 3, kind: input, shape index: {}]
  %s4 = inlined_call_operand.vmem [shape: bf16[4,128], index: 4, kind: input, shape index: {}]
  %s5 = inlined_call_operand.vmem [shape: f32[1,128], index: 5, kind: input, shape index: {}]
  %s6 = inlined_call_operand.vmem [shape: f32[2,8,8,128], index: 6, kind: output, shape index: {}]
  %s7 = sld [smem:[#allocation0]]
  $region57: #{run.5} parent=0
    _
  %s9 = ssub.s32 1, %s7
  %s10 = scalar_select 0, %s9, %s7
  loop: start=0, step=1, limit=4
  $region2: #{run.5} parent=0 // loop_pre_header
    _
  $region3: #{run.5} parent=0 // loop_header
    %s12 = sphi 0, %s16
    %p13 = scmp.ge.s32.totalorder %s12, 4
    %s19 = sphi 0, %s31
    %s20 = sphi 0, %s27
    %s21 = sphi 0, %s19
    %s22 = sphi 0, %s20
    %s23 = sphi 0, %s21
    %s24 = sphi 0, %s22
    %s34 = sphi 0, %s36
    %s37 = sphi 0, %s34
    %s38 = sphi 0, %s37
    %s54 = sphi 0, %s38
    %s60 = sphi 0, %s62
    %s63 = sphi 0, %s60
    %s64 = sphi 0, %s63
    %s80 = sphi 0, %s64
    %s86 = sphi 0, %s88
    %s89 = sphi 0, %s86
    %s90 = sphi 0, %s89
    %s106 = sphi 0, %s90
    %s112 = sphi 0, %s114
    %s115 = sphi 0, %s112
    %s116 = sphi 0, %s115
    %s132 = sphi 0, %s116
    %s138 = sphi 0, %s140
    %s141 = sphi 0, %s138
    %s142 = sphi 0, %s141
    %s158 = sphi 0, %s142
    %s164 = sphi 0, %s166
    %s167 = sphi 0, %s164
    %s168 = sphi 0, %s167
    %s184 = sphi 0, %s168
    %s192 = sphi 0, %s194
    %s195 = sphi 0, %s192
    %s196 = sphi 0, %s195
    %s212 = sphi 0, %s196
  $region4: #{run.5} parent=0 // loop_header_branch
    %15 = sbr.rel (%p13) target = $region8
  $region5: #{run.5} parent=0 // loop_body
    %s17 = ssub.s32 %s12, 1
    %s18 = ssub.s32 %s12, 2
    %s25 = sadd.s32 1, %s20
    %p26 = scmp.ge.s32.totalorder %s25, 1
    %s27 = scalar_select %p26, 0, %s25
    %s28 = sadd.s32 1, %s19
    %s29 = scalar_select %p26, %s28, %s19
    %p30 = scmp.ge.s32.totalorder %s29, 2
    %s31 = scalar_select %p30, 0, %s29
    %s32 = ssub.s32 %s19, %s31
    %p33 = scmp.eq.s32.totalorder %s32, 0
    %s35 = sadd.s32 %s34, 1
    %s36 = scalar_select %p33, %s34, %s35
    %p39 = pneg %p33
    %p40 = scmp.eq.s32.totalorder %s12, 1
    %p41 = por %p39, %p40
    %p42 = scmp.ne.s32.totalorder %s34, %s37
    %p43 = scmp.eq.s32.totalorder %s12, 0
    %p44 = por %p42, %p43
    %p45 = scmp.ne.s32.totalorder %s34, %s37
    %p46 = scmp.eq.s32.totalorder %s17, 1
    %p47 = por %p45, %p46
    %p48 = scmp.ne.s32.totalorder %s37, %s38
    %p49 = scmp.eq.s32.totalorder %s17, 0
    %p50 = por %p48, %p49
    %p51 = scmp.ne.s32.totalorder %s37, %s38
    %p52 = scmp.eq.s32.totalorder %s18, 1
    %p53 = por %p51, %p52
    %p55 = scmp.ne.s32.totalorder %s38, %s54
    %p56 = scmp.eq.s32.totalorder %s18, 0
    %p57 = por %p55, %p56
    %s58 = ssub.s32 %s20, %s27
    %p59 = scmp.eq.s32.totalorder %s58, 0
    %s61 = sadd.s32 %s60, 1
    %s62 = scalar_select %p59, %s60, %s61
    %p65 = pneg %p59
    %p66 = scmp.eq.s32.totalorder %s12, 1
    %p67 = por %p65, %p66
    %p68 = scmp.ne.s32.totalorder %s60, %s63
    %p69 = scmp.eq.s32.totalorder %s12, 0
    %p70 = por %p68, %p69
    %p71 = scmp.ne.s32.totalorder %s60, %s63
    %p72 = scmp.eq.s32.totalorder %s17, 1
    %p73 = por %p71, %p72
    %p74 = scmp.ne.s32.totalorder %s63, %s64
    %p75 = scmp.eq.s32.totalorder %s17, 0
    %p76 = por %p74, %p75
    %p77 = scmp.ne.s32.totalorder %s63, %s64
    %p78 = scmp.eq.s32.totalorder %s18, 1
    %p79 = por %p77, %p78
    %p81 = scmp.ne.s32.totalorder %s64, %s80
    %p82 = scmp.eq.s32.totalorder %s18, 0
    %p83 = por %p81, %p82
    %s84 = ssub.s32 %s20, %s27
    %p85 = scmp.eq.s32.totalorder %s84, 0
    %s87 = sadd.s32 %s86, 1
    %s88 = scalar_select %p85, %s86, %s87
    %p91 = pneg %p85
    %p92 = scmp.eq.s32.totalorder %s12, 1
    %p93 = por %p91, %p92
    %p94 = scmp.ne.s32.totalorder %s86, %s89
    %p95 = scmp.eq.s32.totalorder %s12, 0
    %p96 = por %p94, %p95
    %p97 = scmp.ne.s32.totalorder %s86, %s89
    %p98 = scmp.eq.s32.totalorder %s17, 1
    %p99 = por %p97, %p98
    %p100 = scmp.ne.s32.totalorder %s89, %s90
    %p101 = scmp.eq.s32.totalorder %s17, 0
    %p102 = por %p100, %p101
    %p103 = scmp.ne.s32.totalorder %s89, %s90
    %p104 = scmp.eq.s32.totalorder %s18, 1
    %p105 = por %p103, %p104
    %p107 = scmp.ne.s32.totalorder %s90, %s106
    %p108 = scmp.eq.s32.totalorder %s18, 0
    %p109 = por %p107, %p108
    %s110 = ssub.s32 %s19, %s31
    %p111 = scmp.eq.s32.totalorder %s110, 0
    %s113 = sadd.s32 %s112, 1
    %s114 = scalar_select %p111, %s112, %s113
    %p117 = pneg %p111
    %p118 = scmp.eq.s32.totalorder %s12, 1
    %p119 = por %p117, %p118
    %p120 = scmp.ne.s32.totalorder %s112, %s115
    %p121 = scmp.eq.s32.totalorder %s12, 0
    %p122 = por %p120, %p121
    %p123 = scmp.ne.s32.totalorder %s112, %s115
    %p124 = scmp.eq.s32.totalorder %s17, 1
    %p125 = por %p123, %p124
    %p126 = scmp.ne.s32.totalorder %s115, %s116
    %p127 = scmp.eq.s32.totalorder %s17, 0
    %p128 = por %p126, %p127
    %p129 = scmp.ne.s32.totalorder %s115, %s116
    %p130 = scmp.eq.s32.totalorder %s18, 1
    %p131 = por %p129, %p130
    %p133 = scmp.ne.s32.totalorder %s116, %s132
    %p134 = scmp.eq.s32.totalorder %s18, 0
    %p135 = por %p133, %p134
    %s136 = ssub.s32 %s20, %s27
    %p137 = scmp.eq.s32.totalorder %s136, 0
    %s139 = sadd.s32 %s138, 1
    %s140 = scalar_select %p137, %s138, %s139
    %p143 = pneg %p137
    %p144 = scmp.eq.s32.totalorder %s12, 1
    %p145 = por %p143, %p144
    %p146 = scmp.ne.s32.totalorder %s138, %s141
    %p147 = scmp.eq.s32.totalorder %s12, 0
    %p148 = por %p146, %p147
    %p149 = scmp.ne.s32.totalorder %s138, %s141
    %p150 = scmp.eq.s32.totalorder %s17, 1
    %p151 = por %p149, %p150
    %p152 = scmp.ne.s32.totalorder %s141, %s142
    %p153 = scmp.eq.s32.totalorder %s17, 0
    %p154 = por %p152, %p153
    %p155 = scmp.ne.s32.totalorder %s141, %s142
    %p156 = scmp.eq.s32.totalorder %s18, 1
    %p157 = por %p155, %p156
    %p159 = scmp.ne.s32.totalorder %s142, %s158
    %p160 = scmp.eq.s32.totalorder %s18, 0
    %p161 = por %p159, %p160
    %s162 = ssub.s32 %s20, %s27
    %p163 = scmp.eq.s32.totalorder %s162, 0
    %s165 = sadd.s32 %s164, 1
    %s166 = scalar_select %p163, %s164, %s165
    %p169 = pneg %p163
    %p170 = scmp.eq.s32.totalorder %s12, 1
    %p171 = por %p169, %p170
    %p172 = scmp.ne.s32.totalorder %s164, %s167
    %p173 = scmp.eq.s32.totalorder %s12, 0
    %p174 = por %p172, %p173
    %p175 = scmp.ne.s32.totalorder %s164, %s167
    %p176 = scmp.eq.s32.totalorder %s17, 1
    %p177 = por %p175, %p176
    %p178 = scmp.ne.s32.totalorder %s167, %s168
    %p179 = scmp.eq.s32.totalorder %s17, 0
    %p180 = por %p178, %p179
    %p181 = scmp.ne.s32.totalorder %s167, %s168
    %p182 = scmp.eq.s32.totalorder %s18, 1
    %p183 = por %p181, %p182
    %p185 = scmp.ne.s32.totalorder %s168, %s184
    %p186 = scmp.eq.s32.totalorder %s18, 0
    %p187 = por %p185, %p186
    %s188 = ssub.s32 %s19, %s31
    %s189 = ssub.s32 %s20, %s27
    %s190 = sor.u32 %s188, %s189
    %p191 = scmp.eq.s32.totalorder %s190, 0
    %s193 = sadd.s32 %s192, 1
    %s194 = scalar_select %p191, %s192, %s193
    %p197 = pneg %p191
    %p198 = scmp.eq.s32.totalorder %s12, 1
    %p199 = por %p197, %p198
    %p200 = scmp.ne.s32.totalorder %s192, %s195
    %p201 = scmp.eq.s32.totalorder %s12, 0
    %p202 = por %p200, %p201
    %p203 = scmp.ne.s32.totalorder %s192, %s195
    %p204 = scmp.eq.s32.totalorder %s17, 1
    %p205 = por %p203, %p204
    %p206 = scmp.ne.s32.totalorder %s195, %s196
    %p207 = scmp.eq.s32.totalorder %s17, 0
    %p208 = por %p206, %p207
    %p209 = scmp.ne.s32.totalorder %s195, %s196
    %p210 = scmp.eq.s32.totalorder %s18, 1
    %p211 = por %p209, %p210
    %p213 = scmp.ne.s32.totalorder %s196, %s212
    %p214 = scmp.eq.s32.totalorder %s18, 0
    %p215 = por %p213, %p214
    %p216 = scmp.le.s32.totalorder 1, %s12
    %p217 = scmp.lt.s32.totalorder %s12, 3
    %p218 = pnand %p216, %p217
    %p219 = pneg %p218
    // Predicated region
    $region9: #{run.5} parent=5 // pred_check
      _
    $region10: #{run.5} parent=5 // pred_check_branch
      %221 = sbr.rel (%p218) target = $region12
    $region11: #{run.5} parent=5 // pred_region
      %s222 = ssub.s32 %s12, 1
      // Predicated region
      $region13: #{run.5} parent=11 // pred_check
        %p223 = pneg %p76
      $region14: #{run.5} parent=11 // pred_check_branch
        %225 = sbr.rel (%p223) target = $region16
      $region15: #{run.5} parent=11 // pred_region
        %p226 = scmp.lt.s32.totalorder %s22, 0
        %s227 = scalar_select %p226, %s22, 0
        %s228 = smul.addr %s227, 4
        %s229 = scalar_lea.vmem %s1, %s228
      $region16: #{run.5} parent=11 // pred_fallthru
        _
      // Predicated region
      $region17: #{run.5} parent=11 // pred_check
        %p230 = pneg %p102
      $region18: #{run.5} parent=11 // pred_check_branch
        %232 = sbr.rel (%p230) target = $region20
      $region19: #{run.5} parent=11 // pred_region
        %p233 = scmp.lt.s32.totalorder %s22, 0
        %s234 = scalar_select %p233, %s22, 0
        %s235 = scalar_lea.vmem %s2, %s234
      $region20: #{run.5} parent=11 // pred_fallthru
        _
      // Predicated region
      $region21: #{run.5} parent=11 // pred_check
        %p236 = pneg %p154
      $region22: #{run.5} parent=11 // pred_check_branch
        %238 = sbr.rel (%p236) target = $region24
      $region23: #{run.5} parent=11 // pred_region
        %p239 = scmp.lt.s32.totalorder %s22, 0
        %s240 = scalar_select %p239, %s22, 0
        %s241 = smul.addr %s240, 2
        %s242 = scalar_lea.vmem %s4, %s241
      $region24: #{run.5} parent=11 // pred_fallthru
        _
      // Predicated region
      $region25: #{run.5} parent=11 // pred_check
        %p243 = pneg %p180
      $region26: #{run.5} parent=11 // pred_check_branch
        %245 = sbr.rel (%p243) target = $region28
      $region27: #{run.5} parent=11 // pred_region
        %p246 = scmp.lt.s32.totalorder %s22, 0
        %s247 = scalar_select %p246, %s22, 0
        %s248 = scalar_lea.vmem %s5, %s247
      $region28: #{run.5} parent=11 // pred_fallthru
        _
    $region12: #{run.5} parent=5 // pred_fallthru
      _
    %p249 = scmp.lt.s32.totalorder %s12, 2
    // Predicated region
    $region29: #{run.5} parent=5 // pred_check
      %p250 = pneg %p249
    $region30: #{run.5} parent=5 // pred_check_branch
      %252 = sbr.rel (%p250) target = $region32
    $region31: #{run.5} parent=5 // pred_region
      // Predicated region
      $region33: #{run.5} parent=31 // pred_check
        %p253 = pneg %p44
      $region34: #{run.5} parent=31 // pred_check_branch
        %255 = sbr.rel (%p253) target = $region36
      $region35: #{run.5} parent=31 // pred_region
        %p256 = scmp.lt.s32.totalorder %s19, 1
        %s257 = scalar_select %p256, %s19, 1
        %s258 = smul.addr %s257, 20
        %s259 = smul.addr %s258, 8
        %s260 = scalar_lea.vmem %s0, %s259
      $region36: #{run.5} parent=31 // pred_fallthru
        _
      // Predicated region
      $region37: #{run.5} parent=31 // pred_check
        %p261 = pneg %p122
      $region38: #{run.5} parent=31 // pred_check_branch
        %263 = sbr.rel (%p261) target = $region40
      $region39: #{run.5} parent=31 // pred_region
        %p264 = scmp.lt.s32.totalorder %s19, 1
        %s265 = scalar_select %p264, %s19, 1
        %s266 = smul.addr %s265, 8
        %s267 = smul.addr %s266, 8
        %s268 = scalar_lea.vmem %s3, %s267
      $region40: #{run.5} parent=31 // pred_fallthru
        _
    $region32: #{run.5} parent=5 // pred_fallthru
      _
    %p269 = scmp.le.s32.totalorder 1, %s12
    %p270 = scmp.lt.s32.totalorder %s12, 3
    %p271 = pnand %p269, %p270
    %p272 = pneg %p271
    // Predicated region
    $region41: #{run.5} parent=5 // pred_check
      _
    $region42: #{run.5} parent=5 // pred_check_branch
      %274 = sbr.rel (%p271) target = $region44
    $region43: #{run.5} parent=5 // pred_region
      %s275 = ssub.s32 %s12, 1
      %p276 = scmp.lt.s32.totalorder %s21, 1
      %s277 = scalar_select %p276, %s21, 1
      %s278 = smul.addr %s277, 20
      %s279 = smul.addr %s278, 8
      %s280 = scalar_lea.vmem %s0, %s279
      %p281 = pneg %p50
      %p282 = pneg %p47
      %p283 = scmp.lt.s32.totalorder %s22, 0
      %s284 = scalar_select %p283, %s22, 0
      %s285 = smul.addr %s284, 4
      %s286 = scalar_lea.vmem %s1, %s285
      %p287 = pneg %p76
      %p288 = pneg %p73
      %p289 = scmp.lt.s32.totalorder %s22, 0
      %s290 = scalar_select %p289, %s22, 0
      %s291 = scalar_lea.vmem %s2, %s290
      %p292 = pneg %p102
      %p293 = pneg %p99
      %p294 = scmp.lt.s32.totalorder %s21, 1
      %s295 = scalar_select %p294, %s21, 1
      %s296 = smul.addr %s295, 8
      %s297 = smul.addr %s296, 8
      %s298 = scalar_lea.vmem %s3, %s297
      %p299 = pneg %p128
      %p300 = pneg %p125
      %p301 = scmp.lt.s32.totalorder %s22, 0
      %s302 = scalar_select %p301, %s22, 0
      %s303 = smul.addr %s302, 2
      %s304 = scalar_lea.vmem %s4, %s303
      %p305 = pneg %p154
      %p306 = pneg %p151
      %p307 = scmp.lt.s32.totalorder %s22, 0
      %s308 = scalar_select %p307, %s22, 0
      %s309 = scalar_lea.vmem %s5, %s308
      %p310 = pneg %p180
      %p311 = pneg %p177
      %p312 = pneg %p208
      %p313 = pneg %p205
      %p314 = scmp.lt.s32.totalorder %s21, 1
      %s315 = scalar_select %p314, %s21, 1
      %p316 = scmp.lt.s32.totalorder %s22, 0
      %s317 = scalar_select %p316, %s22, 0
      %s318 = smul.addr %s315, 8
      %s319 = sadd.s32 %s317, %s318
      %s320 = smul.addr %s319, 8
      %s321 = scalar_lea.vmem %s6, %s320
      %p322 = scmp.lt.s32.totalorder %s21, 1
      %s323 = scalar_select %p322, %s21, 1
      %s324 = smul.addr %s323, 20
      %s325 = smul.addr %s324, 8
      %s326 = scalar_lea.vmem %s0, %s325
      %p327 = scmp.lt.s32.totalorder %s22, 0
      %s328 = scalar_select %p327, %s22, 0
      %s329 = smul.addr %s328, 4
      %s330 = scalar_lea.vmem %s1, %s329
      %p331 = scmp.lt.s32.totalorder %s22, 0
      %s332 = scalar_select %p331, %s22, 0
      %s333 = scalar_lea.vmem %s2, %s332
      %p334 = scmp.lt.s32.totalorder %s21, 1
      %s335 = scalar_select %p334, %s21, 1
      %s336 = smul.addr %s335, 8
      %s337 = smul.addr %s336, 8
      %s338 = scalar_lea.vmem %s3, %s337
      %p339 = scmp.lt.s32.totalorder %s22, 0
      %s340 = scalar_select %p339, %s22, 0
      %s341 = smul.addr %s340, 2
      %s342 = scalar_lea.vmem %s4, %s341
      %p343 = scmp.lt.s32.totalorder %s22, 0
      %s344 = scalar_select %p343, %s22, 0
      %s345 = scalar_lea.vmem %s5, %s344
      %p346 = scmp.lt.s32.totalorder %s21, 1
      %s347 = scalar_select %p346, %s21, 1
      %p348 = scmp.lt.s32.totalorder %s22, 0
      %s349 = scalar_select %p348, %s22, 0
      %s350 = smul.addr %s347, 8
      %s351 = sadd.s32 %s349, %s350
      %s352 = smul.addr %s351, 8
      %s353 = scalar_lea.vmem %s6, %s352
      %v355 = vld [vmem:[%s326] sm:$0xff]
      %v356 = vld [vmem:[%s326 + $0x10] sm:$0xff]
      %v357 = vld [vmem:[%s326 + $0x20] sm:$0xff]
      %v358 = vld [vmem:[%s326 + $0x30] sm:$0xff]
      %v359 = vld [vmem:[%s326 + $0x40] sm:$0xff]
      %v360 = vld [vmem:[%s326 + $0x50] sm:$0xff]
      %v361 = vld [vmem:[%s326 + $0x60] sm:$0xff]
      %v362 = vld [vmem:[%s326 + $0x70] sm:$0xff]
      %v363 = vpack.c.bf16 %v356, %v355
      %v364 = vpack.c.bf16 %v358, %v357
      %v365 = vpack.c.bf16 %v360, %v359
      %v366 = vpack.c.bf16 %v362, %v361
      %v367 = vld [vmem:[%s330] sm:$0xf]
      %v368 = vld [vmem:[%s330 + $0x4] sm:$0xf]
      %v369 = vld [vmem:[%s330 + $0x8] sm:$0xf]
      %v370 = vld [vmem:[%s330 + $0xc] sm:$0xf]
      %v371 = vld [vmem:[%s330 + $0x10] sm:$0xf]
      %v372 = vld [vmem:[%s330 + $0x14] sm:$0xf]
      %v373 = vld [vmem:[%s330 + $0x18] sm:$0xf]
      %v374 = vld [vmem:[%s330 + $0x1c] sm:$0xf]
      %v375 = vld [vmem:[%s330 + $0x20] sm:$0xf]
      %v376 = vld [vmem:[%s330 + $0x24] sm:$0xf]
      %v377 = vld [vmem:[%s330 + $0x28] sm:$0xf]
      %v378 = vld [vmem:[%s330 + $0x2c] sm:$0xf]
      %v379 = vld [vmem:[%s330 + $0x30] sm:$0xf]
      %v380 = vld [vmem:[%s330 + $0x34] sm:$0xf]
      %v381 = vld [vmem:[%s330 + $0x38] sm:$0xf]
      %v382 = vld [vmem:[%s330 + $0x3c] sm:$0xf]
      %v383 = vld [vmem:[%s326 + $0x1] sm:$0xff]
      %v384 = vld [vmem:[%s326 + $0x11] sm:$0xff]
      %v385 = vld [vmem:[%s326 + $0x21] sm:$0xff]
      %v386 = vld [vmem:[%s326 + $0x31] sm:$0xff]
      %v387 = vld [vmem:[%s326 + $0x41] sm:$0xff]
      %v388 = vld [vmem:[%s326 + $0x51] sm:$0xff]
      %v389 = vld [vmem:[%s326 + $0x61] sm:$0xff]
      %v390 = vld [vmem:[%s326 + $0x71] sm:$0xff]
      %v391 = vpack.c.bf16 %v384, %v383
      %v392 = vpack.c.bf16 %v386, %v385
      %v393 = vpack.c.bf16 %v388, %v387
      %v394 = vpack.c.bf16 %v390, %v389
      %s395 = scalar_lea.vmem %s330, 64
      %v396 = vld [vmem:[%s395] sm:$0xf]
      %v397 = vld [vmem:[%s395 + $0x4] sm:$0xf]
      %v398 = vld [vmem:[%s395 + $0x8] sm:$0xf]
      %v399 = vld [vmem:[%s395 + $0xc] sm:$0xf]
      %v400 = vld [vmem:[%s395 + $0x10] sm:$0xf]
      %v401 = vld [vmem:[%s395 + $0x14] sm:$0xf]
      %v402 = vld [vmem:[%s395 + $0x18] sm:$0xf]
      %v403 = vld [vmem:[%s395 + $0x1c] sm:$0xf]
      %v404 = vld [vmem:[%s395 + $0x20] sm:$0xf]
      %v405 = vld [vmem:[%s395 + $0x24] sm:$0xf]
      %v406 = vld [vmem:[%s395 + $0x28] sm:$0xf]
      %v407 = vld [vmem:[%s395 + $0x2c] sm:$0xf]
      %v408 = vld [vmem:[%s395 + $0x30] sm:$0xf]
      %v409 = vld [vmem:[%s395 + $0x34] sm:$0xf]
      %v410 = vld [vmem:[%s395 + $0x38] sm:$0xf]
      %v411 = vld [vmem:[%s395 + $0x3c] sm:$0xf]
      %v428 = vunpack.c.l.b16 %v396
      %v429 = vunpack.c.l.b16 %v397
      %v430 = vunpack.c.l.b16 %v398
      %v431 = vunpack.c.l.b16 %v399
      %v432 = vunpack.c.l.b16 %v400
      %v433 = vunpack.c.l.b16 %v401
      %v434 = vunpack.c.l.b16 %v402
      %v435 = vunpack.c.l.b16 %v403
      %v436 = vunpack.c.l.b16 %v404
      %v437 = vunpack.c.l.b16 %v405
      %v438 = vunpack.c.l.b16 %v406
      %v439 = vunpack.c.l.b16 %v407
      %v440 = vunpack.c.l.b16 %v408
      %v441 = vunpack.c.l.b16 %v409
      %v442 = vunpack.c.l.b16 %v410
      %v443 = vunpack.c.l.b16 %v411
      %v444 = vpack.c.b16 %v429, %v428
      %v445 = vpack.c.b16 %v431, %v430
      %v446 = vpack.c.b16 %v433, %v432
      %v447 = vpack.c.b16 %v435, %v434
      %v448 = vpack.c.b16 %v437, %v436
      %v449 = vpack.c.b16 %v439, %v438
      %v450 = vpack.c.b16 %v441, %v440
      %v451 = vpack.c.b16 %v443, %v442
      %460 = vmatprep.subr.bf16.mxu0 0
      %461 = vmatpush1.bf16.msra.mxu0 %v451
      %462 = vmatprep.subr.bf16.mxu0 0
      %463 = vmatpush1.bf16.msra.mxu0 %v450
      %464 = vmatprep.subr.bf16.mxu0 0
      %465 = vmatpush1.bf16.msra.mxu0 %v449
      %466 = vmatprep.subr.bf16.mxu0 0
      %467 = vmatpush1.bf16.msra.mxu0 %v448
      %468 = vmatprep.subr.bf16.mxu0 0
      %469 = vmatpush1.bf16.msra.mxu0 %v447
      %470 = vmatprep.subr.bf16.mxu0 0
      %471 = vmatpush1.bf16.msra.mxu0 %v446
      %472 = vmatprep.subr.bf16.mxu0 0
      %473 = vmatpush1.bf16.msra.mxu0 %v445
      %474 = vmatprep.subr.bf16.mxu0 0
      %475 = vmatpush1.bf16.msra.mxu0 %v444
      %476 = vmatprep.subr.bf16.mxu0 0
      %477 = vmatpush2.bf16.msra.mxu0 0
      %478 = vmatprep.subr.bf16.mxu0 0
      %479 = vmatpush2.bf16.msra.mxu0 0
      %480 = vmatprep.subr.bf16.mxu0 0
      %481 = vmatpush2.bf16.msra.mxu0 0
      %482 = vmatprep.subr.bf16.mxu0 0
      %483 = vmatpush2.bf16.msra.mxu0 0
      %484 = vmatprep.subr.bf16.mxu0 0
      %485 = vmatpush2.bf16.msra.mxu0 0
      %486 = vmatprep.subr.bf16.mxu0 0
      %487 = vmatpush2.bf16.msra.mxu0 0
      %488 = vmatprep.subr.bf16.mxu0 0
      %489 = vmatpush2.bf16.msra.mxu0 0
      %490 = vmatprep.subr.bf16.mxu0 0
      %491 = vmatpush2.bf16.msra.mxu0 0
      %492 = vmatprep.mubr.bf16.mxu0 0
      %493 = vmatmul.mubr.bf16.gmra.mxu0 %v391
      %v494 = vpop.f32.mrf.mxu0
      %v495 = vadd.f32 0.0, %v494
      %v496 = vpop.f32.mrf.mxu0
      %v497 = vpop.f32.mrf.mxu0
      %v498 = vadd.f32 0.0, %v497
      %v499 = vpop.f32.mrf.mxu0
      %500 = vmatprep.mubr.bf16.mxu0 0
      %501 = vmatmul.mubr.bf16.gmra.mxu0 %v392
      %v502 = vpop.f32.mrf.mxu0
      %v503 = vadd.f32 0.0, %v502
      %v504 = vpop.f32.mrf.mxu0
      %v505 = vpop.f32.mrf.mxu0
      %v506 = vadd.f32 0.0, %v505
      %v507 = vpop.f32.mrf.mxu0
      %508 = vmatprep.mubr.bf16.mxu0 0
      %509 = vmatmul.mubr.bf16.gmra.mxu0 %v393
      %v510 = vpop.f32.mrf.mxu0
      %v511 = vadd.f32 0.0, %v510
      %v512 = vpop.f32.mrf.mxu0
      %v513 = vpop.f32.mrf.mxu0
      %v514 = vadd.f32 0.0, %v513
      %v515 = vpop.f32.mrf.mxu0
      %516 = vmatprep.mubr.bf16.mxu0 0
      %517 = vmatmul.mubr.bf16.gmra.mxu0 %v394
      %v518 = vpop.f32.mrf.mxu0
      %v519 = vadd.f32 0.0, %v518
      %v520 = vpop.f32.mrf.mxu0
      %v521 = vpop.f32.mrf.mxu0
      %v522 = vadd.f32 0.0, %v521
      %v523 = vpop.f32.mrf.mxu0
      %524 = vdwg.mxu0
      %v541 = vunpack.c.l.b16 %v367
      %v542 = vunpack.c.l.b16 %v368
      %v543 = vunpack.c.l.b16 %v369
      %v544 = vunpack.c.l.b16 %v370
      %v545 = vunpack.c.l.b16 %v371
      %v546 = vunpack.c.l.b16 %v372
      %v547 = vunpack.c.l.b16 %v373
      %v548 = vunpack.c.l.b16 %v374
      %v549 = vunpack.c.l.b16 %v375
      %v550 = vunpack.c.l.b16 %v376
      %v551 = vunpack.c.l.b16 %v377
      %v552 = vunpack.c.l.b16 %v378
      %v553 = vunpack.c.l.b16 %v379
      %v554 = vunpack.c.l.b16 %v380
      %v555 = vunpack.c.l.b16 %v381
      %v556 = vunpack.c.l.b16 %v382
      %v557 = vpack.c.b16 %v542, %v541
      %v558 = vpack.c.b16 %v544, %v543
      %v559 = vpack.c.b16 %v546, %v545
      %v560 = vpack.c.b16 %v548, %v547
      %v561 = vpack.c.b16 %v550, %v549
      %v562 = vpack.c.b16 %v552, %v551
      %v563 = vpack.c.b16 %v554, %v553
      %v564 = vpack.c.b16 %v556, %v555
      %573 = vmatprep.subr.bf16.mxu0 0
      %574 = vmatpush1.bf16.msra.mxu0 %v564
      %575 = vmatprep.subr.bf16.mxu0 0
      %576 = vmatpush1.bf16.msra.mxu0 %v563
      %577 = vmatprep.subr.bf16.mxu0 0
      %578 = vmatpush1.bf16.msra.mxu0 %v562
      %579 = vmatprep.subr.bf16.mxu0 0
      %580 = vmatpush1.bf16.msra.mxu0 %v561
      %581 = vmatprep.subr.bf16.mxu0 0
      %582 = vmatpush1.bf16.msra.mxu0 %v560
      %583 = vmatprep.subr.bf16.mxu0 0
      %584 = vmatpush1.bf16.msra.mxu0 %v559
      %585 = vmatprep.subr.bf16.mxu0 0
      %586 = vmatpush1.bf16.msra.mxu0 %v558
      %587 = vmatprep.subr.bf16.mxu0 0
      %588 = vmatpush1.bf16.msra.mxu0 %v557
      %589 = vmatprep.subr.bf16.mxu0 0
      %590 = vmatpush2.bf16.msra.mxu0 0
      %591 = vmatprep.subr.bf16.mxu0 0
      %592 = vmatpush2.bf16.msra.mxu0 0
      %593 = vmatprep.subr.bf16.mxu0 0
      %594 = vmatpush2.bf16.msra.mxu0 0
      %595 = vmatprep.subr.bf16.mxu0 0
      %596 = vmatpush2.bf16.msra.mxu0 0
      %597 = vmatprep.subr.bf16.mxu0 0
      %598 = vmatpush2.bf16.msra.mxu0 0
      %599 = vmatprep.subr.bf16.mxu0 0
      %600 = vmatpush2.bf16.msra.mxu0 0
      %601 = vmatprep.subr.bf16.mxu0 0
      %602 = vmatpush2.bf16.msra.mxu0 0
      %603 = vmatprep.subr.bf16.mxu0 0
      %604 = vmatpush2.bf16.msra.mxu0 0
      %605 = vmatprep.mubr.bf16.mxu0 0
      %606 = vmatmul.mubr.bf16.gmra.mxu0 %v363
      %v607 = vpop.f32.mrf.mxu0
      %v608 = vadd.f32 %v495, %v607
      %v609 = vpop.f32.mrf.mxu0
      %v610 = vpop.f32.mrf.mxu0
      %v611 = vadd.f32 %v498, %v610
      %v612 = vpop.f32.mrf.mxu0
      %613 = vmatprep.mubr.bf16.mxu0 0
      %614 = vmatmul.mubr.bf16.gmra.mxu0 %v364
      %v615 = vpop.f32.mrf.mxu0
      %v616 = vadd.f32 %v503, %v615
      %v617 = vpop.f32.mrf.mxu0
      %v618 = vpop.f32.mrf.mxu0
      %v619 = vadd.f32 %v506, %v618
      %v620 = vpop.f32.mrf.mxu0
      %621 = vmatprep.mubr.bf16.mxu0 0
      %622 = vmatmul.mubr.bf16.gmra.mxu0 %v365
      %v623 = vpop.f32.mrf.mxu0
      %v624 = vadd.f32 %v511, %v623
      %v625 = vpop.f32.mrf.mxu0
      %v626 = vpop.f32.mrf.mxu0
      %v627 = vadd.f32 %v514, %v626
      %v628 = vpop.f32.mrf.mxu0
      %629 = vmatprep.mubr.bf16.mxu0 0
      %630 = vmatmul.mubr.bf16.gmra.mxu0 %v366
      %v631 = vpop.f32.mrf.mxu0
      %v632 = vadd.f32 %v519, %v631
      %v633 = vpop.f32.mrf.mxu0
      %v634 = vpop.f32.mrf.mxu0
      %v635 = vadd.f32 %v522, %v634
      %v636 = vpop.f32.mrf.mxu0
      %637 = vdwg.mxu0
      %v638 = vld [vmem:[%s326 + $0x2] sm:$0xff]
      %v639 = vld [vmem:[%s326 + $0x12] sm:$0xff]
      %v640 = vld [vmem:[%s326 + $0x22] sm:$0xff]
      %v641 = vld [vmem:[%s326 + $0x32] sm:$0xff]
      %v642 = vld [vmem:[%s326 + $0x42] sm:$0xff]
      %v643 = vld [vmem:[%s326 + $0x52] sm:$0xff]
      %v644 = vld [vmem:[%s326 + $0x62] sm:$0xff]
      %v645 = vld [vmem:[%s326 + $0x72] sm:$0xff]
      %v646 = vpack.c.bf16 %v639, %v638
      %v647 = vpack.c.bf16 %v641, %v640
      %v648 = vpack.c.bf16 %v643, %v642
      %v649 = vpack.c.bf16 %v645, %v644
      %s650 = scalar_lea.vmem %s330, 128
      %v651 = vld [vmem:[%s650] sm:$0xf]
      %v652 = vld [vmem:[%s650 + $0x4] sm:$0xf]
      %v653 = vld [vmem:[%s650 + $0x8] sm:$0xf]
      %v654 = vld [vmem:[%s650 + $0xc] sm:$0xf]
      %v655 = vld [vmem:[%s650 + $0x10] sm:$0xf]
      %v656 = vld [vmem:[%s650 + $0x14] sm:$0xf]
      %v657 = vld [vmem:[%s650 + $0x18] sm:$0xf]
      %v658 = vld [vmem:[%s650 + $0x1c] sm:$0xf]
      %v659 = vld [vmem:[%s650 + $0x20] sm:$0xf]
      %v660 = vld [vmem:[%s650 + $0x24] sm:$0xf]
      %v661 = vld [vmem:[%s650 + $0x28] sm:$0xf]
      %v662 = vld [vmem:[%s650 + $0x2c] sm:$0xf]
      %v663 = vld [vmem:[%s650 + $0x30] sm:$0xf]
      %v664 = vld [vmem:[%s650 + $0x34] sm:$0xf]
      %v665 = vld [vmem:[%s650 + $0x38] sm:$0xf]
      %v666 = vld [vmem:[%s650 + $0x3c] sm:$0xf]
      %v683 = vunpack.c.l.b16 %v651
      %v684 = vunpack.c.l.b16 %v652
      %v685 = vunpack.c.l.b16 %v653
      %v686 = vunpack.c.l.b16 %v654
      %v687 = vunpack.c.l.b16 %v655
      %v688 = vunpack.c.l.b16 %v656
      %v689 = vunpack.c.l.b16 %v657
      %v690 = vunpack.c.l.b16 %v658
      %v691 = vunpack.c.l.b16 %v659
      %v692 = vunpack.c.l.b16 %v660
      %v693 = vunpack.c.l.b16 %v661
      %v694 = vunpack.c.l.b16 %v662
      %v695 = vunpack.c.l.b16 %v663
      %v696 = vunpack.c.l.b16 %v664
      %v697 = vunpack.c.l.b16 %v665
      %v698 = vunpack.c.l.b16 %v666
      %v699 = vpack.c.b16 %v684, %v683
      %v700 = vpack.c.b16 %v686, %v685
      %v701 = vpack.c.b16 %v688, %v687
      %v702 = vpack.c.b16 %v690, %v689
      %v703 = vpack.c.b16 %v692, %v691
      %v704 = vpack.c.b16 %v694, %v693
      %v705 = vpack.c.b16 %v696, %v695
      %v706 = vpack.c.b16 %v698, %v697
      %715 = vmatprep.subr.bf16.mxu0 0
      %716 = vmatpush1.bf16.msra.mxu0 %v706
      %717 = vmatprep.subr.bf16.mxu0 0
      %718 = vmatpush1.bf16.msra.mxu0 %v705
      %719 = vmatprep.subr.bf16.mxu0 0
      %720 = vmatpush1.bf16.msra.mxu0 %v704
      %721 = vmatprep.subr.bf16.mxu0 0
      %722 = vmatpush1.bf16.msra.mxu0 %v703
      %723 = vmatprep.subr.bf16.mxu0 0
      %724 = vmatpush1.bf16.msra.mxu0 %v702
      %725 = vmatprep.subr.bf16.mxu0 0
      %726 = vmatpush1.bf16.msra.mxu0 %v701
      %727 = vmatprep.subr.bf16.mxu0 0
      %728 = vmatpush1.bf16.msra.mxu0 %v700
      %729 = vmatprep.subr.bf16.mxu0 0
      %730 = vmatpush1.bf16.msra.mxu0 %v699
      %731 = vmatprep.subr.bf16.mxu0 0
      %732 = vmatpush2.bf16.msra.mxu0 0
      %733 = vmatprep.subr.bf16.mxu0 0
      %734 = vmatpush2.bf16.msra.mxu0 0
      %735 = vmatprep.subr.bf16.mxu0 0
      %736 = vmatpush2.bf16.msra.mxu0 0
      %737 = vmatprep.subr.bf16.mxu0 0
      %738 = vmatpush2.bf16.msra.mxu0 0
      %739 = vmatprep.subr.bf16.mxu0 0
      %740 = vmatpush2.bf16.msra.mxu0 0
      %741 = vmatprep.subr.bf16.mxu0 0
      %742 = vmatpush2.bf16.msra.mxu0 0
      %743 = vmatprep.subr.bf16.mxu0 0
      %744 = vmatpush2.bf16.msra.mxu0 0
      %745 = vmatprep.subr.bf16.mxu0 0
      %746 = vmatpush2.bf16.msra.mxu0 0
      %747 = vmatprep.mubr.bf16.mxu0 0
      %748 = vmatmul.mubr.bf16.gmra.mxu0 %v646
      %v749 = vpop.f32.mrf.mxu0
      %v750 = vadd.f32 0.0, %v749
      %v751 = vpop.f32.mrf.mxu0
      %v752 = vpop.f32.mrf.mxu0
      %v753 = vadd.f32 0.0, %v752
      %v754 = vpop.f32.mrf.mxu0
      %755 = vmatprep.mubr.bf16.mxu0 0
      %756 = vmatmul.mubr.bf16.gmra.mxu0 %v647
      %v757 = vpop.f32.mrf.mxu0
      %v758 = vadd.f32 0.0, %v757
      %v759 = vpop.f32.mrf.mxu0
      %v760 = vpop.f32.mrf.mxu0
      %v761 = vadd.f32 0.0, %v760
      %v762 = vpop.f32.mrf.mxu0
      %763 = vmatprep.mubr.bf16.mxu0 0
      %764 = vmatmul.mubr.bf16.gmra.mxu0 %v648
      %v765 = vpop.f32.mrf.mxu0
      %v766 = vadd.f32 0.0, %v765
      %v767 = vpop.f32.mrf.mxu0
      %v768 = vpop.f32.mrf.mxu0
      %v769 = vadd.f32 0.0, %v768
      %v770 = vpop.f32.mrf.mxu0
      %771 = vmatprep.mubr.bf16.mxu0 0
      %772 = vmatmul.mubr.bf16.gmra.mxu0 %v649
      %v773 = vpop.f32.mrf.mxu0
      %v774 = vadd.f32 0.0, %v773
      %v775 = vpop.f32.mrf.mxu0
      %v776 = vpop.f32.mrf.mxu0
      %v777 = vadd.f32 0.0, %v776
      %v778 = vpop.f32.mrf.mxu0
      %779 = vdwg.mxu0
      %v780 = vadd.f32 %v608, %v750
      %v781 = vadd.f32 %v611, %v753
      %v782 = vadd.f32 %v616, %v758
      %v783 = vadd.f32 %v619, %v761
      %v784 = vadd.f32 %v624, %v766
      %v785 = vadd.f32 %v627, %v769
      %v786 = vadd.f32 %v632, %v774
      %v787 = vadd.f32 %v635, %v777
      %s788 = scalar_lea.vmem %s326, 16
      %v789 = vld [vmem:[%s788] sm:$0xff]
      %v790 = vld [vmem:[%s788 + $0x10] sm:$0xff]
      %v791 = vld [vmem:[%s788 + $0x20] sm:$0xff]
      %v792 = vld [vmem:[%s788 + $0x30] sm:$0xff]
      %v793 = vld [vmem:[%s788 + $0x40] sm:$0xff]
      %v794 = vld [vmem:[%s788 + $0x50] sm:$0xff]
      %v795 = vld [vmem:[%s788 + $0x60] sm:$0xff]
      %v796 = vld [vmem:[%s788 + $0x70] sm:$0xff]
      %v797 = vpack.c.bf16 %v790, %v789
      %v798 = vpack.c.bf16 %v792, %v791
      %v799 = vpack.c.bf16 %v794, %v793
      %v800 = vpack.c.bf16 %v796, %v795
      %s801 = scalar_lea.vmem %s330, 192
      %v802 = vld [vmem:[%s801] sm:$0xf]
      %v803 = vld [vmem:[%s801 + $0x4] sm:$0xf]
      %v804 = vld [vmem:[%s801 + $0x8] sm:$0xf]
      %v805 = vld [vmem:[%s801 + $0xc] sm:$0xf]
      %v806 = vld [vmem:[%s801 + $0x10] sm:$0xf]
      %v807 = vld [vmem:[%s801 + $0x14] sm:$0xf]
      %v808 = vld [vmem:[%s801 + $0x18] sm:$0xf]
      %v809 = vld [vmem:[%s801 + $0x1c] sm:$0xf]
      %v810 = vld [vmem:[%s801 + $0x20] sm:$0xf]
      %v811 = vld [vmem:[%s801 + $0x24] sm:$0xf]
      %v812 = vld [vmem:[%s801 + $0x28] sm:$0xf]
      %v813 = vld [vmem:[%s801 + $0x2c] sm:$0xf]
      %v814 = vld [vmem:[%s801 + $0x30] sm:$0xf]
      %v815 = vld [vmem:[%s801 + $0x34] sm:$0xf]
      %v816 = vld [vmem:[%s801 + $0x38] sm:$0xf]
      %v817 = vld [vmem:[%s801 + $0x3c] sm:$0xf]
      %v834 = vunpack.c.l.b16 %v802
      %v835 = vunpack.c.l.b16 %v803
      %v836 = vunpack.c.l.b16 %v804
      %v837 = vunpack.c.l.b16 %v805
      %v838 = vunpack.c.l.b16 %v806
      %v839 = vunpack.c.l.b16 %v807
      %v840 = vunpack.c.l.b16 %v808
      %v841 = vunpack.c.l.b16 %v809
      %v842 = vunpack.c.l.b16 %v810
      %v843 = vunpack.c.l.b16 %v811
      %v844 = vunpack.c.l.b16 %v812
      %v845 = vunpack.c.l.b16 %v813
      %v846 = vunpack.c.l.b16 %v814
      %v847 = vunpack.c.l.b16 %v815
      %v848 = vunpack.c.l.b16 %v816
      %v849 = vunpack.c.l.b16 %v817
      %v850 = vpack.c.b16 %v835, %v834
      %v851 = vpack.c.b16 %v837, %v836
      %v852 = vpack.c.b16 %v839, %v838
      %v853 = vpack.c.b16 %v841, %v840
      %v854 = vpack.c.b16 %v843, %v842
      %v855 = vpack.c.b16 %v845, %v844
      %v856 = vpack.c.b16 %v847, %v846
      %v857 = vpack.c.b16 %v849, %v848
      %866 = vmatprep.subr.bf16.mxu0 0
      %867 = vmatpush1.bf16.msra.mxu0 %v857
      %868 = vmatprep.subr.bf16.mxu0 0
      %869 = vmatpush1.bf16.msra.mxu0 %v856
      %870 = vmatprep.subr.bf16.mxu0 0
      %871 = vmatpush1.bf16.msra.mxu0 %v855
      %872 = vmatprep.subr.bf16.mxu0 0
      %873 = vmatpush1.bf16.msra.mxu0 %v854
      %874 = vmatprep.subr.bf16.mxu0 0
      %875 = vmatpush1.bf16.msra.mxu0 %v853
      %876 = vmatprep.subr.bf16.mxu0 0
      %877 = vmatpush1.bf16.msra.mxu0 %v852
      %878 = vmatprep.subr.bf16.mxu0 0
      %879 = vmatpush1.bf16.msra.mxu0 %v851
      %880 = vmatprep.subr.bf16.mxu0 0
      %881 = vmatpush1.bf16.msra.mxu0 %v850
      %882 = vmatprep.subr.bf16.mxu0 0
      %883 = vmatpush2.bf16.msra.mxu0 0
      %884 = vmatprep.subr.bf16.mxu0 0
      %885 = vmatpush2.bf16.msra.mxu0 0
      %886 = vmatprep.subr.bf16.mxu0 0
      %887 = vmatpush2.bf16.msra.mxu0 0
      %888 = vmatprep.subr.bf16.mxu0 0
      %889 = vmatpush2.bf16.msra.mxu0 0
      %890 = vmatprep.subr.bf16.mxu0 0
      %891 = vmatpush2.bf16.msra.mxu0 0
      %892 = vmatprep.subr.bf16.mxu0 0
      %893 = vmatpush2.bf16.msra.mxu0 0
      %894 = vmatprep.subr.bf16.mxu0 0
      %895 = vmatpush2.bf16.msra.mxu0 0
      %896 = vmatprep.subr.bf16.mxu0 0
      %897 = vmatpush2.bf16.msra.mxu0 0
      %898 = vmatprep.mubr.bf16.mxu0 0
      %899 = vmatmul.mubr.bf16.gmra.mxu0 %v797
      %v900 = vpop.f32.mrf.mxu0
      %v901 = vadd.f32 0.0, %v900
      %v902 = vpop.f32.mrf.mxu0
      %v903 = vpop.f32.mrf.mxu0
      %v904 = vadd.f32 0.0, %v903
      %v905 = vpop.f32.mrf.mxu0
      %906 = vmatprep.mubr.bf16.mxu0 0
      %907 = vmatmul.mubr.bf16.gmra.mxu0 %v798
      %v908 = vpop.f32.mrf.mxu0
      %v909 = vadd.f32 0.0, %v908
      %v910 = vpop.f32.mrf.mxu0
      %v911 = vpop.f32.mrf.mxu0
      %v912 = vadd.f32 0.0, %v911
      %v913 = vpop.f32.mrf.mxu0
      %914 = vmatprep.mubr.bf16.mxu0 0
      %915 = vmatmul.mubr.bf16.gmra.mxu0 %v799
      %v916 = vpop.f32.mrf.mxu0
      %v917 = vadd.f32 0.0, %v916
      %v918 = vpop.f32.mrf.mxu0
      %v919 = vpop.f32.mrf.mxu0
      %v920 = vadd.f32 0.0, %v919
      %v921 = vpop.f32.mrf.mxu0
      %922 = vmatprep.mubr.bf16.mxu0 0
      %923 = vmatmul.mubr.bf16.gmra.mxu0 %v800
      %v924 = vpop.f32.mrf.mxu0
      %v925 = vadd.f32 0.0, %v924
      %v926 = vpop.f32.mrf.mxu0
      %v927 = vpop.f32.mrf.mxu0
      %v928 = vadd.f32 0.0, %v927
      %v929 = vpop.f32.mrf.mxu0
      %930 = vdwg.mxu0
      %v931 = vadd.f32 %v780, %v901
      %v932 = vadd.f32 %v781, %v904
      %v933 = vadd.f32 %v782, %v909
      %v934 = vadd.f32 %v783, %v912
      %v935 = vadd.f32 %v784, %v917
      %v936 = vadd.f32 %v785, %v920
      %v937 = vadd.f32 %v786, %v925
      %v938 = vadd.f32 %v787, %v928
      %v939 = vld [vmem:[%s788 + $0x1] sm:$0xff]
      %v940 = vld [vmem:[%s788 + $0x11] sm:$0xff]
      %v941 = vld [vmem:[%s788 + $0x21] sm:$0xff]
      %v942 = vld [vmem:[%s788 + $0x31] sm:$0xff]
      %v943 = vld [vmem:[%s788 + $0x41] sm:$0xff]
      %v944 = vld [vmem:[%s788 + $0x51] sm:$0xff]
      %v945 = vld [vmem:[%s788 + $0x61] sm:$0xff]
      %v946 = vld [vmem:[%s788 + $0x71] sm:$0xff]
      %v947 = vpack.c.bf16 %v940, %v939
      %v948 = vpack.c.bf16 %v942, %v941
      %v949 = vpack.c.bf16 %v944, %v943
      %v950 = vpack.c.bf16 %v946, %v945
      %s951 = scalar_lea.vmem %s330, 256
      %v952 = vld [vmem:[%s951] sm:$0xf]
      %v953 = vld [vmem:[%s951 + $0x4] sm:$0xf]
      %v954 = vld [vmem:[%s951 + $0x8] sm:$0xf]
      %v955 = vld [vmem:[%s951 + $0xc] sm:$0xf]
      %v956 = vld [vmem:[%s951 + $0x10] sm:$0xf]
      %v957 = vld [vmem:[%s951 + $0x14] sm:$0xf]
      %v958 = vld [vmem:[%s951 + $0x18] sm:$0xf]
      %v959 = vld [vmem:[%s951 + $0x1c] sm:$0xf]
      %v960 = vld [vmem:[%s951 + $0x20] sm:$0xf]
      %v961 = vld [vmem:[%s951 + $0x24] sm:$0xf]
      %v962 = vld [vmem:[%s951 + $0x28] sm:$0xf]
      %v963 = vld [vmem:[%s951 + $0x2c] sm:$0xf]
      %v964 = vld [vmem:[%s951 + $0x30] sm:$0xf]
      %v965 = vld [vmem:[%s951 + $0x34] sm:$0xf]
      %v966 = vld [vmem:[%s951 + $0x38] sm:$0xf]
      %v967 = vld [vmem:[%s951 + $0x3c] sm:$0xf]
      %v984 = vunpack.c.l.b16 %v952
      %v985 = vunpack.c.l.b16 %v953
      %v986 = vunpack.c.l.b16 %v954
      %v987 = vunpack.c.l.b16 %v955
      %v988 = vunpack.c.l.b16 %v956
      %v989 = vunpack.c.l.b16 %v957
      %v990 = vunpack.c.l.b16 %v958
      %v991 = vunpack.c.l.b16 %v959
      %v992 = vunpack.c.l.b16 %v960
      %v993 = vunpack.c.l.b16 %v961
      %v994 = vunpack.c.l.b16 %v962
      %v995 = vunpack.c.l.b16 %v963
      %v996 = vunpack.c.l.b16 %v964
      %v997 = vunpack.c.l.b16 %v965
      %v998 = vunpack.c.l.b16 %v966
      %v999 = vunpack.c.l.b16 %v967
      %v1000 = vpack.c.b16 %v985, %v984
      %v1001 = vpack.c.b16 %v987, %v986
      %v1002 = vpack.c.b16 %v989, %v988
      %v1003 = vpack.c.b16 %v991, %v990
      %v1004 = vpack.c.b16 %v993, %v992
      %v1005 = vpack.c.b16 %v995, %v994
      %v1006 = vpack.c.b16 %v997, %v996
      %v1007 = vpack.c.b16 %v999, %v998
      %1016 = vmatprep.subr.bf16.mxu0 0
      %1017 = vmatpush1.bf16.msra.mxu0 %v1007
      %1018 = vmatprep.subr.bf16.mxu0 0
      %1019 = vmatpush1.bf16.msra.mxu0 %v1006
      %1020 = vmatprep.subr.bf16.mxu0 0
      %1021 = vmatpush1.bf16.msra.mxu0 %v1005
      %1022 = vmatprep.subr.bf16.mxu0 0
      %1023 = vmatpush1.bf16.msra.mxu0 %v1004
      %1024 = vmatprep.subr.bf16.mxu0 0
      %1025 = vmatpush1.bf16.msra.mxu0 %v1003
      %1026 = vmatprep.subr.bf16.mxu0 0
      %1027 = vmatpush1.bf16.msra.mxu0 %v1002
      %1028 = vmatprep.subr.bf16.mxu0 0
      %1029 = vmatpush1.bf16.msra.mxu0 %v1001
      %1030 = vmatprep.subr.bf16.mxu0 0
      %1031 = vmatpush1.bf16.msra.mxu0 %v1000
      %1032 = vmatprep.subr.bf16.mxu0 0
      %1033 = vmatpush2.bf16.msra.mxu0 0
      %1034 = vmatprep.subr.bf16.mxu0 0
      %1035 = vmatpush2.bf16.msra.mxu0 0
      %1036 = vmatprep.subr.bf16.mxu0 0
      %1037 = vmatpush2.bf16.msra.mxu0 0
      %1038 = vmatprep.subr.bf16.mxu0 0
      %1039 = vmatpush2.bf16.msra.mxu0 0
      %1040 = vmatprep.subr.bf16.mxu0 0
      %1041 = vmatpush2.bf16.msra.mxu0 0
      %1042 = vmatprep.subr.bf16.mxu0 0
      %1043 = vmatpush2.bf16.msra.mxu0 0
      %1044 = vmatprep.subr.bf16.mxu0 0
      %1045 = vmatpush2.bf16.msra.mxu0 0
      %1046 = vmatprep.subr.bf16.mxu0 0
      %1047 = vmatpush2.bf16.msra.mxu0 0
      %1048 = vmatprep.mubr.bf16.mxu0 0
      %1049 = vmatmul.mubr.bf16.gmra.mxu0 %v947
      %v1050 = vpop.f32.mrf.mxu0
      %v1051 = vadd.f32 0.0, %v1050
      %v1052 = vpop.f32.mrf.mxu0
      %v1053 = vpop.f32.mrf.mxu0
      %v1054 = vadd.f32 0.0, %v1053
      %v1055 = vpop.f32.mrf.mxu0
      %1056 = vmatprep.mubr.bf16.mxu0 0
      %1057 = vmatmul.mubr.bf16.gmra.mxu0 %v948
      %v1058 = vpop.f32.mrf.mxu0
      %v1059 = vadd.f32 0.0, %v1058
      %v1060 = vpop.f32.mrf.mxu0
      %v1061 = vpop.f32.mrf.mxu0
      %v1062 = vadd.f32 0.0, %v1061
      %v1063 = vpop.f32.mrf.mxu0
      %1064 = vmatprep.mubr.bf16.mxu0 0
      %1065 = vmatmul.mubr.bf16.gmra.mxu0 %v949
      %v1066 = vpop.f32.mrf.mxu0
      %v1067 = vadd.f32 0.0, %v1066
      %v1068 = vpop.f32.mrf.mxu0
      %v1069 = vpop.f32.mrf.mxu0
      %v1070 = vadd.f32 0.0, %v1069
      %v1071 = vpop.f32.mrf.mxu0
      %1072 = vmatprep.mubr.bf16.mxu0 0
      %1073 = vmatmul.mubr.bf16.gmra.mxu0 %v950
      %v1074 = vpop.f32.mrf.mxu0
      %v1075 = vadd.f32 0.0, %v1074
      %v1076 = vpop.f32.mrf.mxu0
      %v1077 = vpop.f32.mrf.mxu0
      %v1078 = vadd.f32 0.0, %v1077
      %v1079 = vpop.f32.mrf.mxu0
      %1080 = vdwg.mxu0
      %v1081 = vadd.f32 %v931, %v1051
      %v1082 = vadd.f32 %v932, %v1054
      %v1083 = vadd.f32 %v933, %v1059
      %v1084 = vadd.f32 %v934, %v1062
      %v1085 = vadd.f32 %v935, %v1067
      %v1086 = vadd.f32 %v936, %v1070
      %v1087 = vadd.f32 %v937, %v1075
      %v1088 = vadd.f32 %v938, %v1078
      %v1089 = vld [vmem:[%s788 + $0x2] sm:$0xff]
      %v1090 = vld [vmem:[%s788 + $0x12] sm:$0xff]
      %v1091 = vld [vmem:[%s788 + $0x22] sm:$0xff]
      %v1092 = vld [vmem:[%s788 + $0x32] sm:$0xff]
      %v1093 = vld [vmem:[%s788 + $0x42] sm:$0xff]
      %v1094 = vld [vmem:[%s788 + $0x52] sm:$0xff]
      %v1095 = vld [vmem:[%s788 + $0x62] sm:$0xff]
      %v1096 = vld [vmem:[%s788 + $0x72] sm:$0xff]
      %v1097 = vpack.c.bf16 %v1090, %v1089
      %v1098 = vpack.c.bf16 %v1092, %v1091
      %v1099 = vpack.c.bf16 %v1094, %v1093
      %v1100 = vpack.c.bf16 %v1096, %v1095
      %s1101 = scalar_lea.vmem %s330, 320
      %v1102 = vld [vmem:[%s1101] sm:$0xf]
      %v1103 = vld [vmem:[%s1101 + $0x4] sm:$0xf]
      %v1104 = vld [vmem:[%s1101 + $0x8] sm:$0xf]
      %v1105 = vld [vmem:[%s1101 + $0xc] sm:$0xf]
      %v1106 = vld [vmem:[%s1101 + $0x10] sm:$0xf]
      %v1107 = vld [vmem:[%s1101 + $0x14] sm:$0xf]
      %v1108 = vld [vmem:[%s1101 + $0x18] sm:$0xf]
      %v1109 = vld [vmem:[%s1101 + $0x1c] sm:$0xf]
      %v1110 = vld [vmem:[%s1101 + $0x20] sm:$0xf]
      %v1111 = vld [vmem:[%s1101 + $0x24] sm:$0xf]
      %v1112 = vld [vmem:[%s1101 + $0x28] sm:$0xf]
      %v1113 = vld [vmem:[%s1101 + $0x2c] sm:$0xf]
      %v1114 = vld [vmem:[%s1101 + $0x30] sm:$0xf]
      %v1115 = vld [vmem:[%s1101 + $0x34] sm:$0xf]
      %v1116 = vld [vmem:[%s1101 + $0x38] sm:$0xf]
      %v1117 = vld [vmem:[%s1101 + $0x3c] sm:$0xf]
      %v1134 = vunpack.c.l.b16 %v1102
      %v1135 = vunpack.c.l.b16 %v1103
      %v1136 = vunpack.c.l.b16 %v1104
      %v1137 = vunpack.c.l.b16 %v1105
      %v1138 = vunpack.c.l.b16 %v1106
      %v1139 = vunpack.c.l.b16 %v1107
      %v1140 = vunpack.c.l.b16 %v1108
      %v1141 = vunpack.c.l.b16 %v1109
      %v1142 = vunpack.c.l.b16 %v1110
      %v1143 = vunpack.c.l.b16 %v1111
      %v1144 = vunpack.c.l.b16 %v1112
      %v1145 = vunpack.c.l.b16 %v1113
      %v1146 = vunpack.c.l.b16 %v1114
      %v1147 = vunpack.c.l.b16 %v1115
      %v1148 = vunpack.c.l.b16 %v1116
      %v1149 = vunpack.c.l.b16 %v1117
      %v1150 = vpack.c.b16 %v1135, %v1134
      %v1151 = vpack.c.b16 %v1137, %v1136
      %v1152 = vpack.c.b16 %v1139, %v1138
      %v1153 = vpack.c.b16 %v1141, %v1140
      %v1154 = vpack.c.b16 %v1143, %v1142
      %v1155 = vpack.c.b16 %v1145, %v1144
      %v1156 = vpack.c.b16 %v1147, %v1146
      %v1157 = vpack.c.b16 %v1149, %v1148
      %1166 = vmatprep.subr.bf16.mxu0 0
      %1167 = vmatpush1.bf16.msra.mxu0 %v1157
      %1168 = vmatprep.subr.bf16.mxu0 0
      %1169 = vmatpush1.bf16.msra.mxu0 %v1156
      %1170 = vmatprep.subr.bf16.mxu0 0
      %1171 = vmatpush1.bf16.msra.mxu0 %v1155
      %1172 = vmatprep.subr.bf16.mxu0 0
      %1173 = vmatpush1.bf16.msra.mxu0 %v1154
      %1174 = vmatprep.subr.bf16.mxu0 0
      %1175 = vmatpush1.bf16.msra.mxu0 %v1153
      %1176 = vmatprep.subr.bf16.mxu0 0
      %1177 = vmatpush1.bf16.msra.mxu0 %v1152
      %1178 = vmatprep.subr.bf16.mxu0 0
      %1179 = vmatpush1.bf16.msra.mxu0 %v1151
      %1180 = vmatprep.subr.bf16.mxu0 0
      %1181 = vmatpush1.bf16.msra.mxu0 %v1150
      %1182 = vmatprep.subr.bf16.mxu0 0
      %1183 = vmatpush2.bf16.msra.mxu0 0
      %1184 = vmatprep.subr.bf16.mxu0 0
      %1185 = vmatpush2.bf16.msra.mxu0 0
      %1186 = vmatprep.subr.bf16.mxu0 0
      %1187 = vmatpush2.bf16.msra.mxu0 0
      %1188 = vmatprep.subr.bf16.mxu0 0
      %1189 = vmatpush2.bf16.msra.mxu0 0
      %1190 = vmatprep.subr.bf16.mxu0 0
      %1191 = vmatpush2.bf16.msra.mxu0 0
      %1192 = vmatprep.subr.bf16.mxu0 0
      %1193 = vmatpush2.bf16.msra.mxu0 0
      %1194 = vmatprep.subr.bf16.mxu0 0
      %1195 = vmatpush2.bf16.msra.mxu0 0
      %1196 = vmatprep.subr.bf16.mxu0 0
      %1197 = vmatpush2.bf16.msra.mxu0 0
      %1198 = vmatprep.mubr.bf16.mxu0 0
      %1199 = vmatmul.mubr.bf16.gmra.mxu0 %v1097
      %v1200 = vpop.f32.mrf.mxu0
      %v1201 = vadd.f32 0.0, %v1200
      %v1202 = vpop.f32.mrf.mxu0
      %v1203 = vpop.f32.mrf.mxu0
      %v1204 = vadd.f32 0.0, %v1203
      %v1205 = vpop.f32.mrf.mxu0
      %1206 = vmatprep.mubr.bf16.mxu0 0
      %1207 = vmatmul.mubr.bf16.gmra.mxu0 %v1098
      %v1208 = vpop.f32.mrf.mxu0
      %v1209 = vadd.f32 0.0, %v1208
      %v1210 = vpop.f32.mrf.mxu0
      %v1211 = vpop.f32.mrf.mxu0
      %v1212 = vadd.f32 0.0, %v1211
      %v1213 = vpop.f32.mrf.mxu0
      %1214 = vmatprep.mubr.bf16.mxu0 0
      %1215 = vmatmul.mubr.bf16.gmra.mxu0 %v1099
      %v1216 = vpop.f32.mrf.mxu0
      %v1217 = vadd.f32 0.0, %v1216
      %v1218 = vpop.f32.mrf.mxu0
      %v1219 = vpop.f32.mrf.mxu0
      %v1220 = vadd.f32 0.0, %v1219
      %v1221 = vpop.f32.mrf.mxu0
      %1222 = vmatprep.mubr.bf16.mxu0 0
      %1223 = vmatmul.mubr.bf16.gmra.mxu0 %v1100
      %v1224 = vpop.f32.mrf.mxu0
      %v1225 = vadd.f32 0.0, %v1224
      %v1226 = vpop.f32.mrf.mxu0
      %v1227 = vpop.f32.mrf.mxu0
      %v1228 = vadd.f32 0.0, %v1227
      %v1229 = vpop.f32.mrf.mxu0
      %1230 = vdwg.mxu0
      %v1231 = vadd.f32 %v1081, %v1201
      %v1232 = vadd.f32 %v1082, %v1204
      %v1233 = vadd.f32 %v1083, %v1209
      %v1234 = vadd.f32 %v1084, %v1212
      %v1235 = vadd.f32 %v1085, %v1217
      %v1236 = vadd.f32 %v1086, %v1220
      %v1237 = vadd.f32 %v1087, %v1225
      %v1238 = vadd.f32 %v1088, %v1228
      %s1239 = scalar_lea.vmem %s326, 32
      %v1240 = vld [vmem:[%s1239] sm:$0xff]
      %v1241 = vld [vmem:[%s1239 + $0x10] sm:$0xff]
      %v1242 = vld [vmem:[%s1239 + $0x20] sm:$0xff]
      %v1243 = vld [vmem:[%s1239 + $0x30] sm:$0xff]
      %v1244 = vld [vmem:[%s1239 + $0x40] sm:$0xff]
      %v1245 = vld [vmem:[%s1239 + $0x50] sm:$0xff]
      %v1246 = vld [vmem:[%s1239 + $0x60] sm:$0xff]
      %v1247 = vld [vmem:[%s1239 + $0x70] sm:$0xff]
      %v1248 = vpack.c.bf16 %v1241, %v1240
      %v1249 = vpack.c.bf16 %v1243, %v1242
      %v1250 = vpack.c.bf16 %v1245, %v1244
      %v1251 = vpack.c.bf16 %v1247, %v1246
      %s1252 = scalar_lea.vmem %s330, 384
      %v1253 = vld [vmem:[%s1252] sm:$0xf]
      %v1254 = vld [vmem:[%s1252 + $0x4] sm:$0xf]
      %v1255 = vld [vmem:[%s1252 + $0x8] sm:$0xf]
      %v1256 = vld [vmem:[%s1252 + $0xc] sm:$0xf]
      %v1257 = vld [vmem:[%s1252 + $0x10] sm:$0xf]
      %v1258 = vld [vmem:[%s1252 + $0x14] sm:$0xf]
      %v1259 = vld [vmem:[%s1252 + $0x18] sm:$0xf]
      %v1260 = vld [vmem:[%s1252 + $0x1c] sm:$0xf]
      %v1261 = vld [vmem:[%s1252 + $0x20] sm:$0xf]
      %v1262 = vld [vmem:[%s1252 + $0x24] sm:$0xf]
      %v1263 = vld [vmem:[%s1252 + $0x28] sm:$0xf]
      %v1264 = vld [vmem:[%s1252 + $0x2c] sm:$0xf]
      %v1265 = vld [vmem:[%s1252 + $0x30] sm:$0xf]
      %v1266 = vld [vmem:[%s1252 + $0x34] sm:$0xf]
      %v1267 = vld [vmem:[%s1252 + $0x38] sm:$0xf]
      %v1268 = vld [vmem:[%s1252 + $0x3c] sm:$0xf]
      %v1285 = vunpack.c.l.b16 %v1253
      %v1286 = vunpack.c.l.b16 %v1254
      %v1287 = vunpack.c.l.b16 %v1255
      %v1288 = vunpack.c.l.b16 %v1256
      %v1289 = vunpack.c.l.b16 %v1257
      %v1290 = vunpack.c.l.b16 %v1258
      %v1291 = vunpack.c.l.b16 %v1259
      %v1292 = vunpack.c.l.b16 %v1260
      %v1293 = vunpack.c.l.b16 %v1261
      %v1294 = vunpack.c.l.b16 %v1262
      %v1295 = vunpack.c.l.b16 %v1263
      %v1296 = vunpack.c.l.b16 %v1264
      %v1297 = vunpack.c.l.b16 %v1265
      %v1298 = vunpack.c.l.b16 %v1266
      %v1299 = vunpack.c.l.b16 %v1267
      %v1300 = vunpack.c.l.b16 %v1268
      %v1301 = vpack.c.b16 %v1286, %v1285
      %v1302 = vpack.c.b16 %v1288, %v1287
      %v1303 = vpack.c.b16 %v1290, %v1289
      %v1304 = vpack.c.b16 %v1292, %v1291
      %v1305 = vpack.c.b16 %v1294, %v1293
      %v1306 = vpack.c.b16 %v1296, %v1295
      %v1307 = vpack.c.b16 %v1298, %v1297
      %v1308 = vpack.c.b16 %v1300, %v1299
      %1317 = vmatprep.subr.bf16.mxu0 0
      %1318 = vmatpush1.bf16.msra.mxu0 %v1308
      %1319 = vmatprep.subr.bf16.mxu0 0
      %1320 = vmatpush1.bf16.msra.mxu0 %v1307
      %1321 = vmatprep.subr.bf16.mxu0 0
      %1322 = vmatpush1.bf16.msra.mxu0 %v1306
      %1323 = vmatprep.subr.bf16.mxu0 0
      %1324 = vmatpush1.bf16.msra.mxu0 %v1305
      %1325 = vmatprep.subr.bf16.mxu0 0
      %1326 = vmatpush1.bf16.msra.mxu0 %v1304
      %1327 = vmatprep.subr.bf16.mxu0 0
      %1328 = vmatpush1.bf16.msra.mxu0 %v1303
      %1329 = vmatprep.subr.bf16.mxu0 0
      %1330 = vmatpush1.bf16.msra.mxu0 %v1302
      %1331 = vmatprep.subr.bf16.mxu0 0
      %1332 = vmatpush1.bf16.msra.mxu0 %v1301
      %1333 = vmatprep.subr.bf16.mxu0 0
      %1334 = vmatpush2.bf16.msra.mxu0 0
      %1335 = vmatprep.subr.bf16.mxu0 0
      %1336 = vmatpush2.bf16.msra.mxu0 0
      %1337 = vmatprep.subr.bf16.mxu0 0
      %1338 = vmatpush2.bf16.msra.mxu0 0
      %1339 = vmatprep.subr.bf16.mxu0 0
      %1340 = vmatpush2.bf16.msra.mxu0 0
      %1341 = vmatprep.subr.bf16.mxu0 0
      %1342 = vmatpush2.bf16.msra.mxu0 0
      %1343 = vmatprep.subr.bf16.mxu0 0
      %1344 = vmatpush2.bf16.msra.mxu0 0
      %1345 = vmatprep.subr.bf16.mxu0 0
      %1346 = vmatpush2.bf16.msra.mxu0 0
      %1347 = vmatprep.subr.bf16.mxu0 0
      %1348 = vmatpush2.bf16.msra.mxu0 0
      %1349 = vmatprep.mubr.bf16.mxu0 0
      %1350 = vmatmul.mubr.bf16.gmra.mxu0 %v1248
      %v1351 = vpop.f32.mrf.mxu0
      %v1352 = vadd.f32 0.0, %v1351
      %v1353 = vpop.f32.mrf.mxu0
      %v1354 = vpop.f32.mrf.mxu0
      %v1355 = vadd.f32 0.0, %v1354
      %v1356 = vpop.f32.mrf.mxu0
      %1357 = vmatprep.mubr.bf16.mxu0 0
      %1358 = vmatmul.mubr.bf16.gmra.mxu0 %v1249
      %v1359 = vpop.f32.mrf.mxu0
      %v1360 = vadd.f32 0.0, %v1359
      %v1361 = vpop.f32.mrf.mxu0
      %v1362 = vpop.f32.mrf.mxu0
      %v1363 = vadd.f32 0.0, %v1362
      %v1364 = vpop.f32.mrf.mxu0
      %1365 = vmatprep.mubr.bf16.mxu0 0
      %1366 = vmatmul.mubr.bf16.gmra.mxu0 %v1250
      %v1367 = vpop.f32.mrf.mxu0
      %v1368 = vadd.f32 0.0, %v1367
      %v1369 = vpop.f32.mrf.mxu0
      %v1370 = vpop.f32.mrf.mxu0
      %v1371 = vadd.f32 0.0, %v1370
      %v1372 = vpop.f32.mrf.mxu0
      %1373 = vmatprep.mubr.bf16.mxu0 0
      %1374 = vmatmul.mubr.bf16.gmra.mxu0 %v1251
      %v1375 = vpop.f32.mrf.mxu0
      %v1376 = vadd.f32 0.0, %v1375
      %v1377 = vpop.f32.mrf.mxu0
      %v1378 = vpop.f32.mrf.mxu0
      %v1379 = vadd.f32 0.0, %v1378
      %v1380 = vpop.f32.mrf.mxu0
      %1381 = vdwg.mxu0
      %v1382 = vadd.f32 %v1231, %v1352
      %v1383 = vadd.f32 %v1232, %v1355
      %v1384 = vadd.f32 %v1233, %v1360
      %v1385 = vadd.f32 %v1234, %v1363
      %v1386 = vadd.f32 %v1235, %v1368
      %v1387 = vadd.f32 %v1236, %v1371
      %v1388 = vadd.f32 %v1237, %v1376
      %v1389 = vadd.f32 %v1238, %v1379
      %v1390 = vld [vmem:[%s1239 + $0x1] sm:$0xff]
      %v1391 = vld [vmem:[%s1239 + $0x11] sm:$0xff]
      %v1392 = vld [vmem:[%s1239 + $0x21] sm:$0xff]
      %v1393 = vld [vmem:[%s1239 + $0x31] sm:$0xff]
      %v1394 = vld [vmem:[%s1239 + $0x41] sm:$0xff]
      %v1395 = vld [vmem:[%s1239 + $0x51] sm:$0xff]
      %v1396 = vld [vmem:[%s1239 + $0x61] sm:$0xff]
      %v1397 = vld [vmem:[%s1239 + $0x71] sm:$0xff]
      %v1398 = vpack.c.bf16 %v1391, %v1390
      %v1399 = vpack.c.bf16 %v1393, %v1392
      %v1400 = vpack.c.bf16 %v1395, %v1394
      %v1401 = vpack.c.bf16 %v1397, %v1396
      %s1402 = scalar_lea.vmem %s330, 448
      %v1403 = vld [vmem:[%s1402] sm:$0xf]
      %v1404 = vld [vmem:[%s1402 + $0x4] sm:$0xf]
      %v1405 = vld [vmem:[%s1402 + $0x8] sm:$0xf]
      %v1406 = vld [vmem:[%s1402 + $0xc] sm:$0xf]
      %v1407 = vld [vmem:[%s1402 + $0x10] sm:$0xf]
      %v1408 = vld [vmem:[%s1402 + $0x14] sm:$0xf]
      %v1409 = vld [vmem:[%s1402 + $0x18] sm:$0xf]
      %v1410 = vld [vmem:[%s1402 + $0x1c] sm:$0xf]
      %v1411 = vld [vmem:[%s1402 + $0x20] sm:$0xf]
      %v1412 = vld [vmem:[%s1402 + $0x24] sm:$0xf]
      %v1413 = vld [vmem:[%s1402 + $0x28] sm:$0xf]
      %v1414 = vld [vmem:[%s1402 + $0x2c] sm:$0xf]
      %v1415 = vld [vmem:[%s1402 + $0x30] sm:$0xf]
      %v1416 = vld [vmem:[%s1402 + $0x34] sm:$0xf]
      %v1417 = vld [vmem:[%s1402 + $0x38] sm:$0xf]
      %v1418 = vld [vmem:[%s1402 + $0x3c] sm:$0xf]
      %v1435 = vunpack.c.l.b16 %v1403
      %v1436 = vunpack.c.l.b16 %v1404
      %v1437 = vunpack.c.l.b16 %v1405
      %v1438 = vunpack.c.l.b16 %v1406
      %v1439 = vunpack.c.l.b16 %v1407
      %v1440 = vunpack.c.l.b16 %v1408
      %v1441 = vunpack.c.l.b16 %v1409
      %v1442 = vunpack.c.l.b16 %v1410
      %v1443 = vunpack.c.l.b16 %v1411
      %v1444 = vunpack.c.l.b16 %v1412
      %v1445 = vunpack.c.l.b16 %v1413
      %v1446 = vunpack.c.l.b16 %v1414
      %v1447 = vunpack.c.l.b16 %v1415
      %v1448 = vunpack.c.l.b16 %v1416
      %v1449 = vunpack.c.l.b16 %v1417
      %v1450 = vunpack.c.l.b16 %v1418
      %v1451 = vpack.c.b16 %v1436, %v1435
      %v1452 = vpack.c.b16 %v1438, %v1437
      %v1453 = vpack.c.b16 %v1440, %v1439
      %v1454 = vpack.c.b16 %v1442, %v1441
      %v1455 = vpack.c.b16 %v1444, %v1443
      %v1456 = vpack.c.b16 %v1446, %v1445
      %v1457 = vpack.c.b16 %v1448, %v1447
      %v1458 = vpack.c.b16 %v1450, %v1449
      %1467 = vmatprep.subr.bf16.mxu0 0
      %1468 = vmatpush1.bf16.msra.mxu0 %v1458
      %1469 = vmatprep.subr.bf16.mxu0 0
      %1470 = vmatpush1.bf16.msra.mxu0 %v1457
      %1471 = vmatprep.subr.bf16.mxu0 0
      %1472 = vmatpush1.bf16.msra.mxu0 %v1456
      %1473 = vmatprep.subr.bf16.mxu0 0
      %1474 = vmatpush1.bf16.msra.mxu0 %v1455
      %1475 = vmatprep.subr.bf16.mxu0 0
      %1476 = vmatpush1.bf16.msra.mxu0 %v1454
      %1477 = vmatprep.subr.bf16.mxu0 0
      %1478 = vmatpush1.bf16.msra.mxu0 %v1453
      %1479 = vmatprep.subr.bf16.mxu0 0
      %1480 = vmatpush1.bf16.msra.mxu0 %v1452
      %1481 = vmatprep.subr.bf16.mxu0 0
      %1482 = vmatpush1.bf16.msra.mxu0 %v1451
      %1483 = vmatprep.subr.bf16.mxu0 0
      %1484 = vmatpush2.bf16.msra.mxu0 0
      %1485 = vmatprep.subr.bf16.mxu0 0
      %1486 = vmatpush2.bf16.msra.mxu0 0
      %1487 = vmatprep.subr.bf16.mxu0 0
      %1488 = vmatpush2.bf16.msra.mxu0 0
      %1489 = vmatprep.subr.bf16.mxu0 0
      %1490 = vmatpush2.bf16.msra.mxu0 0
      %1491 = vmatprep.subr.bf16.mxu0 0
      %1492 = vmatpush2.bf16.msra.mxu0 0
      %1493 = vmatprep.subr.bf16.mxu0 0
      %1494 = vmatpush2.bf16.msra.mxu0 0
      %1495 = vmatprep.subr.bf16.mxu0 0
      %1496 = vmatpush2.bf16.msra.mxu0 0
      %1497 = vmatprep.subr.bf16.mxu0 0
      %1498 = vmatpush2.bf16.msra.mxu0 0
      %1499 = vmatprep.mubr.bf16.mxu0 0
      %1500 = vmatmul.mubr.bf16.gmra.mxu0 %v1398
      %v1501 = vpop.f32.mrf.mxu0
      %v1502 = vadd.f32 0.0, %v1501
      %v1503 = vpop.f32.mrf.mxu0
      %v1504 = vpop.f32.mrf.mxu0
      %v1505 = vadd.f32 0.0, %v1504
      %v1506 = vpop.f32.mrf.mxu0
      %1507 = vmatprep.mubr.bf16.mxu0 0
      %1508 = vmatmul.mubr.bf16.gmra.mxu0 %v1399
      %v1509 = vpop.f32.mrf.mxu0
      %v1510 = vadd.f32 0.0, %v1509
      %v1511 = vpop.f32.mrf.mxu0
      %v1512 = vpop.f32.mrf.mxu0
      %v1513 = vadd.f32 0.0, %v1512
      %v1514 = vpop.f32.mrf.mxu0
      %1515 = vmatprep.mubr.bf16.mxu0 0
      %1516 = vmatmul.mubr.bf16.gmra.mxu0 %v1400
      %v1517 = vpop.f32.mrf.mxu0
      %v1518 = vadd.f32 0.0, %v1517
      %v1519 = vpop.f32.mrf.mxu0
      %v1520 = vpop.f32.mrf.mxu0
      %v1521 = vadd.f32 0.0, %v1520
      %v1522 = vpop.f32.mrf.mxu0
      %1523 = vmatprep.mubr.bf16.mxu0 0
      %1524 = vmatmul.mubr.bf16.gmra.mxu0 %v1401
      %v1525 = vpop.f32.mrf.mxu0
      %v1526 = vadd.f32 0.0, %v1525
      %v1527 = vpop.f32.mrf.mxu0
      %v1528 = vpop.f32.mrf.mxu0
      %v1529 = vadd.f32 0.0, %v1528
      %v1530 = vpop.f32.mrf.mxu0
      %1531 = vdwg.mxu0
      %v1532 = vadd.f32 %v1382, %v1502
      %v1533 = vadd.f32 %v1383, %v1505
      %v1534 = vadd.f32 %v1384, %v1510
      %v1535 = vadd.f32 %v1385, %v1513
      %v1536 = vadd.f32 %v1386, %v1518
      %v1537 = vadd.f32 %v1387, %v1521
      %v1538 = vadd.f32 %v1388, %v1526
      %v1539 = vadd.f32 %v1389, %v1529
      %v1540 = vld [vmem:[%s1239 + $0x2] sm:$0xff]
      %v1541 = vld [vmem:[%s1239 + $0x12] sm:$0xff]
      %v1542 = vld [vmem:[%s1239 + $0x22] sm:$0xff]
      %v1543 = vld [vmem:[%s1239 + $0x32] sm:$0xff]
      %v1544 = vld [vmem:[%s1239 + $0x42] sm:$0xff]
      %v1545 = vld [vmem:[%s1239 + $0x52] sm:$0xff]
      %v1546 = vld [vmem:[%s1239 + $0x62] sm:$0xff]
      %v1547 = vld [vmem:[%s1239 + $0x72] sm:$0xff]
      %v1548 = vpack.c.bf16 %v1541, %v1540
      %v1549 = vpack.c.bf16 %v1543, %v1542
      %v1550 = vpack.c.bf16 %v1545, %v1544
      %v1551 = vpack.c.bf16 %v1547, %v1546
      %s1552 = scalar_lea.vmem %s330, 512
      %v1553 = vld [vmem:[%s1552] sm:$0xf]
      %v1554 = vld [vmem:[%s1552 + $0x4] sm:$0xf]
      %v1555 = vld [vmem:[%s1552 + $0x8] sm:$0xf]
      %v1556 = vld [vmem:[%s1552 + $0xc] sm:$0xf]
      %v1557 = vld [vmem:[%s1552 + $0x10] sm:$0xf]
      %v1558 = vld [vmem:[%s1552 + $0x14] sm:$0xf]
      %v1559 = vld [vmem:[%s1552 + $0x18] sm:$0xf]
      %v1560 = vld [vmem:[%s1552 + $0x1c] sm:$0xf]
      %v1561 = vld [vmem:[%s1552 + $0x20] sm:$0xf]
      %v1562 = vld [vmem:[%s1552 + $0x24] sm:$0xf]
      %v1563 = vld [vmem:[%s1552 + $0x28] sm:$0xf]
      %v1564 = vld [vmem:[%s1552 + $0x2c] sm:$0xf]
      %v1565 = vld [vmem:[%s1552 + $0x30] sm:$0xf]
      %v1566 = vld [vmem:[%s1552 + $0x34] sm:$0xf]
      %v1567 = vld [vmem:[%s1552 + $0x38] sm:$0xf]
      %v1568 = vld [vmem:[%s1552 + $0x3c] sm:$0xf]
      %v1585 = vunpack.c.l.b16 %v1553
      %v1586 = vunpack.c.l.b16 %v1554
      %v1587 = vunpack.c.l.b16 %v1555
      %v1588 = vunpack.c.l.b16 %v1556
      %v1589 = vunpack.c.l.b16 %v1557
      %v1590 = vunpack.c.l.b16 %v1558
      %v1591 = vunpack.c.l.b16 %v1559
      %v1592 = vunpack.c.l.b16 %v1560
      %v1593 = vunpack.c.l.b16 %v1561
      %v1594 = vunpack.c.l.b16 %v1562
      %v1595 = vunpack.c.l.b16 %v1563
      %v1596 = vunpack.c.l.b16 %v1564
      %v1597 = vunpack.c.l.b16 %v1565
      %v1598 = vunpack.c.l.b16 %v1566
      %v1599 = vunpack.c.l.b16 %v1567
      %v1600 = vunpack.c.l.b16 %v1568
      %v1601 = vpack.c.b16 %v1586, %v1585
      %v1602 = vpack.c.b16 %v1588, %v1587
      %v1603 = vpack.c.b16 %v1590, %v1589
      %v1604 = vpack.c.b16 %v1592, %v1591
      %v1605 = vpack.c.b16 %v1594, %v1593
      %v1606 = vpack.c.b16 %v1596, %v1595
      %v1607 = vpack.c.b16 %v1598, %v1597
      %v1608 = vpack.c.b16 %v1600, %v1599
      %1617 = vmatprep.subr.bf16.mxu0 0
      %1618 = vmatpush1.bf16.msra.mxu0 %v1608
      %1619 = vmatprep.subr.bf16.mxu0 0
      %1620 = vmatpush1.bf16.msra.mxu0 %v1607
      %1621 = vmatprep.subr.bf16.mxu0 0
      %1622 = vmatpush1.bf16.msra.mxu0 %v1606
      %1623 = vmatprep.subr.bf16.mxu0 0
      %1624 = vmatpush1.bf16.msra.mxu0 %v1605
      %1625 = vmatprep.subr.bf16.mxu0 0
      %1626 = vmatpush1.bf16.msra.mxu0 %v1604
      %1627 = vmatprep.subr.bf16.mxu0 0
      %1628 = vmatpush1.bf16.msra.mxu0 %v1603
      %1629 = vmatprep.subr.bf16.mxu0 0
      %1630 = vmatpush1.bf16.msra.mxu0 %v1602
      %1631 = vmatprep.subr.bf16.mxu0 0
      %1632 = vmatpush1.bf16.msra.mxu0 %v1601
      %1633 = vmatprep.subr.bf16.mxu0 0
      %1634 = vmatpush2.bf16.msra.mxu0 0
      %1635 = vmatprep.subr.bf16.mxu0 0
      %1636 = vmatpush2.bf16.msra.mxu0 0
      %1637 = vmatprep.subr.bf16.mxu0 0
      %1638 = vmatpush2.bf16.msra.mxu0 0
      %1639 = vmatprep.subr.bf16.mxu0 0
      %1640 = vmatpush2.bf16.msra.mxu0 0
      %1641 = vmatprep.subr.bf16.mxu0 0
      %1642 = vmatpush2.bf16.msra.mxu0 0
      %1643 = vmatprep.subr.bf16.mxu0 0
      %1644 = vmatpush2.bf16.msra.mxu0 0
      %1645 = vmatprep.subr.bf16.mxu0 0
      %1646 = vmatpush2.bf16.msra.mxu0 0
      %1647 = vmatprep.subr.bf16.mxu0 0
      %1648 = vmatpush2.bf16.msra.mxu0 0
      %1649 = vmatprep.mubr.bf16.mxu0 0
      %1650 = vmatmul.mubr.bf16.gmra.mxu0 %v1548
      %v1651 = vpop.f32.mrf.mxu0
      %v1652 = vadd.f32 0.0, %v1651
      %v1653 = vpop.f32.mrf.mxu0
      %v1654 = vpop.f32.mrf.mxu0
      %v1655 = vadd.f32 0.0, %v1654
      %v1656 = vpop.f32.mrf.mxu0
      %1657 = vmatprep.mubr.bf16.mxu0 0
      %1658 = vmatmul.mubr.bf16.gmra.mxu0 %v1549
      %v1659 = vpop.f32.mrf.mxu0
      %v1660 = vadd.f32 0.0, %v1659
      %v1661 = vpop.f32.mrf.mxu0
      %v1662 = vpop.f32.mrf.mxu0
      %v1663 = vadd.f32 0.0, %v1662
      %v1664 = vpop.f32.mrf.mxu0
      %1665 = vmatprep.mubr.bf16.mxu0 0
      %1666 = vmatmul.mubr.bf16.gmra.mxu0 %v1550
      %v1667 = vpop.f32.mrf.mxu0
      %v1668 = vadd.f32 0.0, %v1667
      %v1669 = vpop.f32.mrf.mxu0
      %v1670 = vpop.f32.mrf.mxu0
      %v1671 = vadd.f32 0.0, %v1670
      %v1672 = vpop.f32.mrf.mxu0
      %1673 = vmatprep.mubr.bf16.mxu0 0
      %1674 = vmatmul.mubr.bf16.gmra.mxu0 %v1551
      %v1675 = vpop.f32.mrf.mxu0
      %v1676 = vadd.f32 0.0, %v1675
      %v1677 = vpop.f32.mrf.mxu0
      %v1678 = vpop.f32.mrf.mxu0
      %v1679 = vadd.f32 0.0, %v1678
      %v1680 = vpop.f32.mrf.mxu0
      %1681 = vdwg.mxu0
      %v1682 = vadd.f32 %v1532, %v1652
      %v1683 = vadd.f32 %v1533, %v1655
      %v1684 = vadd.f32 %v1534, %v1660
      %v1685 = vadd.f32 %v1535, %v1663
      %v1686 = vadd.f32 %v1536, %v1668
      %v1687 = vadd.f32 %v1537, %v1671
      %v1688 = vadd.f32 %v1538, %v1676
      %v1689 = vadd.f32 %v1539, %v1679
      %v1690 = vld [vmem:[%s333] sm:$0x1]
      %v1692 = vlaneseq
      %v1693 = vshrl.u32 %v1692, 7
      %v1694 = vsub.s32 0, %v1693
      %v1695 = vrot.slane %v1690, %v1694
      %v1697 = vadd.f32 %v1682, %v1695
      %v1698 = vadd.f32 %v1683, %v1695
      %v1699 = vadd.f32 %v1684, %v1695
      %v1700 = vadd.f32 %v1685, %v1695
      %v1701 = vadd.f32 %v1686, %v1695
      %v1702 = vadd.f32 %v1687, %v1695
      %v1703 = vadd.f32 %v1688, %v1695
      %v1704 = vadd.f32 %v1689, %v1695
      %v1705 = vld [vmem:[%s338] sm:$0xff]
      %v1706 = vld [vmem:[%s338 + $0x8] sm:$0xff]
      %v1707 = vld [vmem:[%s338 + $0x10] sm:$0xff]
      %v1708 = vld [vmem:[%s338 + $0x18] sm:$0xff]
      %v1709 = vld [vmem:[%s338 + $0x20] sm:$0xff]
      %v1710 = vld [vmem:[%s338 + $0x28] sm:$0xff]
      %v1711 = vld [vmem:[%s338 + $0x30] sm:$0xff]
      %v1712 = vld [vmem:[%s338 + $0x38] sm:$0xff]
      %v1713 = vpack.c.bf16 %v1706, %v1705
      %v1714 = vpack.c.bf16 %v1708, %v1707
      %v1715 = vpack.c.bf16 %v1710, %v1709
      %v1716 = vpack.c.bf16 %v1712, %v1711
      %v1717 = vld [vmem:[%s342] sm:$0x3]
      %v1718 = vld [vmem:[%s345] sm:$0x1]
      %v1720 = vlaneseq
      %v1721 = vshrl.u32 %v1720, 7
      %v1722 = vsub.s32 0, %v1721
      %v1723 = vrot.slane %v1718, %v1722
      %vm1725 = vcmask 31744
      %v1727 = vsel %vm1725, %v1713, 0
      %v1730 = vsel %vm1725, %v1714, 0
      %v1733 = vsel %vm1725, %v1715, 0
      %v1736 = vsel %vm1725, %v1716, 0
      %vm1738 = vcmask 1041408
      %v1740 = vsel %vm1738, %v1717, 0
      %1742 = vmatprep.subr.bf16.mxu0 0
      %1743 = vmatpush1.bf16.msra.mxu0 0
      %1744 = vmatprep.subr.bf16.mxu0 0
      %1745 = vmatpush1.bf16.msra.mxu0 0
      %1746 = vmatprep.subr.bf16.mxu0 0
      %1747 = vmatpush1.bf16.msra.mxu0 0
      %1748 = vmatprep.subr.bf16.mxu0 0
      %1749 = vmatpush1.bf16.msra.mxu0 0
      %1750 = vmatprep.subr.bf16.mxu0 0
      %1751 = vmatpush1.bf16.msra.mxu0 0
      %1752 = vmatprep.subr.bf16.mxu0 0
      %1753 = vmatpush1.bf16.msra.mxu0 0
      %1754 = vmatprep.subr.bf16.mxu0 0
      %1755 = vmatpush1.bf16.msra.mxu0 0
      %1756 = vmatprep.subr.bf16.mxu0 0
      %1757 = vmatpush1.bf16.msra.mxu0 %v1740
      %1758 = vmatprep.subr.bf16.mxu0 0
      %1759 = vmatpush2.bf16.msra.mxu0 0
      %1760 = vmatprep.subr.bf16.mxu0 0
      %1761 = vmatpush2.bf16.msra.mxu0 0
      %1762 = vmatprep.subr.bf16.mxu0 0
      %1763 = vmatpush2.bf16.msra.mxu0 0
      %1764 = vmatprep.subr.bf16.mxu0 0
      %1765 = vmatpush2.bf16.msra.mxu0 0
      %1766 = vmatprep.subr.bf16.mxu0 0
      %1767 = vmatpush2.bf16.msra.mxu0 0
      %1768 = vmatprep.subr.bf16.mxu0 0
      %1769 = vmatpush2.bf16.msra.mxu0 0
      %1770 = vmatprep.subr.bf16.mxu0 0
      %1771 = vmatpush2.bf16.msra.mxu0 0
      %1772 = vmatprep.subr.bf16.mxu0 0
      %1773 = vmatpush2.bf16.msra.mxu0 0
      %1774 = vmatprep.mubr.bf16.mxu0 0
      %1775 = vmatmul.mubr.bf16.gmra.mxu0 %v1727
      %v1776 = vpop.f32.mrf.mxu0
      %v1777 = vadd.f32 %v1723, %v1776
      %v1778 = vpop.f32.mrf.mxu0
      %v1779 = vpop.f32.mrf.mxu0
      %v1780 = vadd.f32 %v1723, %v1779
      %v1781 = vpop.f32.mrf.mxu0
      %1782 = vmatprep.mubr.bf16.mxu0 0
      %1783 = vmatmul.mubr.bf16.gmra.mxu0 %v1730
      %v1784 = vpop.f32.mrf.mxu0
      %v1785 = vadd.f32 %v1723, %v1784
      %v1786 = vpop.f32.mrf.mxu0
      %v1787 = vpop.f32.mrf.mxu0
      %v1788 = vadd.f32 %v1723, %v1787
      %v1789 = vpop.f32.mrf.mxu0
      %1790 = vmatprep.mubr.bf16.mxu0 0
      %1791 = vmatmul.mubr.bf16.gmra.mxu0 %v1733
      %v1792 = vpop.f32.mrf.mxu0
      %v1793 = vadd.f32 %v1723, %v1792
      %v1794 = vpop.f32.mrf.mxu0
      %v1795 = vpop.f32.mrf.mxu0
      %v1796 = vadd.f32 %v1723, %v1795
      %v1797 = vpop.f32.mrf.mxu0
      %1798 = vmatprep.mubr.bf16.mxu0 0
      %1799 = vmatmul.mubr.bf16.gmra.mxu0 %v1736
      %v1800 = vpop.f32.mrf.mxu0
      %v1801 = vadd.f32 %v1723, %v1800
      %v1802 = vpop.f32.mrf.mxu0
      %v1803 = vpop.f32.mrf.mxu0
      %v1804 = vadd.f32 %v1723, %v1803
      %v1805 = vpop.f32.mrf.mxu0
      %1806 = vdwg.mxu0
      %v1807 = vadd.f32 %v1697, %v1777
      %v1808 = vadd.f32 %v1698, %v1780
      %v1809 = vadd.f32 %v1699, %v1785
      %v1810 = vadd.f32 %v1700, %v1788
      %v1811 = vadd.f32 %v1701, %v1793
      %v1812 = vadd.f32 %v1702, %v1796
      %v1813 = vadd.f32 %v1703, %v1801
      %v1814 = vadd.f32 %v1704, %v1804
      %v1815 = vmax.f32 %v1807, 0.0
      %v1816 = vmax.f32 %v1808, 0.0
      %v1817 = vmax.f32 %v1809, 0.0
      %v1818 = vmax.f32 %v1810, 0.0
      %v1819 = vmax.f32 %v1811, 0.0
      %v1820 = vmax.f32 %v1812, 0.0
      %v1821 = vmax.f32 %v1813, 0.0
      %v1822 = vmax.f32 %v1814, 0.0
      %1823 = vst [vmem:[%s353] sm:$0xff] %v1815
      %1824 = vst [vmem:[%s353 + $0x8] sm:$0xff] %v1816
      %1825 = vst [vmem:[%s353 + $0x10] sm:$0xff] %v1817
      %1826 = vst [vmem:[%s353 + $0x18] sm:$0xff] %v1818
      %1827 = vst [vmem:[%s353 + $0x20] sm:$0xff] %v1819
      %1828 = vst [vmem:[%s353 + $0x28] sm:$0xff] %v1820
      %1829 = vst [vmem:[%s353 + $0x30] sm:$0xff] %v1821
      %1830 = vst [vmem:[%s353 + $0x38] sm:$0xff] %v1822
      %p1831 = scmp.lt.s32.totalorder %s21, 1
      %s1832 = scalar_select %p1831, %s21, 1
      %p1833 = scmp.lt.s32.totalorder %s22, 0
      %s1834 = scalar_select %p1833, %s22, 0
      %s1835 = smul.addr %s1832, 8
      %s1836 = sadd.s32 %s1834, %s1835
      %s1837 = smul.addr %s1836, 8
      %s1838 = scalar_lea.vmem %s6, %s1837
      // Predicated region
      $region45: #{run.5} parent=43 // pred_check
        %p1839 = pneg %p205
      $region46: #{run.5} parent=43 // pred_check_branch
        %1841 = sbr.rel (%p1839) target = $region48
      $region47: #{run.5} parent=43 // pred_region
        _
      $region48: #{run.5} parent=43 // pred_fallthru
        _
    $region44: #{run.5} parent=5 // pred_fallthru
      _
    %p1842 = scmp.le.s32.totalorder 2, %s12
    // Predicated region
    $region49: #{run.5} parent=5 // pred_check
      %p1843 = pneg %p1842
    $region50: #{run.5} parent=5 // pred_check_branch
      %1845 = sbr.rel (%p1843) target = $region52
    $region51: #{run.5} parent=5 // pred_region
      %s1846 = ssub.s32 %s12, 2
      // Predicated region
      $region53: #{run.5} parent=51 // pred_check
        %p1847 = pneg %p211
      $region54: #{run.5} parent=51 // pred_check_branch
        %1849 = sbr.rel (%p1847) target = $region56
      $region55: #{run.5} parent=51 // pred_region
        %p1850 = scmp.lt.s32.totalorder %s23, 1
        %s1851 = scalar_select %p1850, %s23, 1
        %p1852 = scmp.lt.s32.totalorder %s24, 0
        %s1853 = scalar_select %p1852, %s24, 0
        %s1854 = smul.addr %s1851, 8
        %s1855 = sadd.s32 %s1853, %s1854
        %s1856 = smul.addr %s1855, 8
        %s1857 = scalar_lea.vmem %s6, %s1856
      $region56: #{run.5} parent=51 // pred_fallthru
        _
    $region52: #{run.5} parent=5 // pred_fallthru
      _
  $region6: #{run.5} parent=0 // loop_footer
    %s16 = sadd.s32 1, %s12
  $region7: #{run.5} parent=0 // loop_footer_branch
    %11 = sbr.rel target = $region3
  $region8: #{run.5} parent=0 // loop_exit
    _

// kernel: run.6
$region0: #{run.6}
  #allocation0 [shape = 'u32[]', space=smem, size = 0x4, offset = 0x4, fixed_abs, tag = 'smem constant byte address 0x4 - core index']
  #allocation1 [shape = 'u32[144,128]{1,0:T(1,128)}', space=vmem, size = 0x12000, scoped, tag = 'internal scratch']
  %s0 = inlined_call_operand.vmem [shape: f32[2,10,10,128], index: 0, kind: input, shape index: {}]
  %s1 = inlined_call_operand.vmem [shape: bf16[9,128,128], index: 1, kind: input, shape index: {}]
  %s2 = inlined_call_operand.vmem [shape: f32[1,128], index: 2, kind: input, shape index: {}]
  %s3 = inlined_call_operand.vmem [shape: f32[2,8,8,128], index: 3, kind: output, shape index: {}]
  %s4 = sld [smem:[#allocation0]]
  $region45: #{run.6} parent=0
    _
  %s6 = ssub.s32 1, %s4
  %s7 = scalar_select 0, %s6, %s4
  loop: start=0, step=1, limit=4
  $region2: #{run.6} parent=0 // loop_pre_header
    _
  $region3: #{run.6} parent=0 // loop_header
    %s9 = sphi 0, %s13
    %p10 = scmp.ge.s32.totalorder %s9, 4
    %s16 = sphi 0, %s28
    %s17 = sphi 0, %s24
    %s18 = sphi 0, %s16
    %s19 = sphi 0, %s17
    %s20 = sphi 0, %s18
    %s21 = sphi 0, %s19
    %s31 = sphi 0, %s33
    %s34 = sphi 0, %s31
    %s35 = sphi 0, %s34
    %s51 = sphi 0, %s35
    %s57 = sphi 0, %s59
    %s60 = sphi 0, %s57
    %s61 = sphi 0, %s60
    %s77 = sphi 0, %s61
    %s83 = sphi 0, %s85
    %s86 = sphi 0, %s83
    %s87 = sphi 0, %s86
    %s103 = sphi 0, %s87
    %s111 = sphi 0, %s113
    %s114 = sphi 0, %s111
    %s115 = sphi 0, %s114
    %s131 = sphi 0, %s115
  $region4: #{run.6} parent=0 // loop_header_branch
    %12 = sbr.rel (%p10) target = $region8
  $region5: #{run.6} parent=0 // loop_body
    %s14 = ssub.s32 %s9, 1
    %s15 = ssub.s32 %s9, 2
    %s22 = sadd.s32 1, %s17
    %p23 = scmp.ge.s32.totalorder %s22, 1
    %s24 = scalar_select %p23, 0, %s22
    %s25 = sadd.s32 1, %s16
    %s26 = scalar_select %p23, %s25, %s16
    %p27 = scmp.ge.s32.totalorder %s26, 2
    %s28 = scalar_select %p27, 0, %s26
    %s29 = ssub.s32 %s16, %s28
    %p30 = scmp.eq.s32.totalorder %s29, 0
    %s32 = sadd.s32 %s31, 1
    %s33 = scalar_select %p30, %s31, %s32
    %p36 = pneg %p30
    %p37 = scmp.eq.s32.totalorder %s9, 1
    %p38 = por %p36, %p37
    %p39 = scmp.ne.s32.totalorder %s31, %s34
    %p40 = scmp.eq.s32.totalorder %s9, 0
    %p41 = por %p39, %p40
    %p42 = scmp.ne.s32.totalorder %s31, %s34
    %p43 = scmp.eq.s32.totalorder %s14, 1
    %p44 = por %p42, %p43
    %p45 = scmp.ne.s32.totalorder %s34, %s35
    %p46 = scmp.eq.s32.totalorder %s14, 0
    %p47 = por %p45, %p46
    %p48 = scmp.ne.s32.totalorder %s34, %s35
    %p49 = scmp.eq.s32.totalorder %s15, 1
    %p50 = por %p48, %p49
    %p52 = scmp.ne.s32.totalorder %s35, %s51
    %p53 = scmp.eq.s32.totalorder %s15, 0
    %p54 = por %p52, %p53
    %s55 = ssub.s32 %s17, %s24
    %p56 = scmp.eq.s32.totalorder %s55, 0
    %s58 = sadd.s32 %s57, 1
    %s59 = scalar_select %p56, %s57, %s58
    %p62 = pneg %p56
    %p63 = scmp.eq.s32.totalorder %s9, 1
    %p64 = por %p62, %p63
    %p65 = scmp.ne.s32.totalorder %s57, %s60
    %p66 = scmp.eq.s32.totalorder %s9, 0
    %p67 = por %p65, %p66
    %p68 = scmp.ne.s32.totalorder %s57, %s60
    %p69 = scmp.eq.s32.totalorder %s14, 1
    %p70 = por %p68, %p69
    %p71 = scmp.ne.s32.totalorder %s60, %s61
    %p72 = scmp.eq.s32.totalorder %s14, 0
    %p73 = por %p71, %p72
    %p74 = scmp.ne.s32.totalorder %s60, %s61
    %p75 = scmp.eq.s32.totalorder %s15, 1
    %p76 = por %p74, %p75
    %p78 = scmp.ne.s32.totalorder %s61, %s77
    %p79 = scmp.eq.s32.totalorder %s15, 0
    %p80 = por %p78, %p79
    %s81 = ssub.s32 %s17, %s24
    %p82 = scmp.eq.s32.totalorder %s81, 0
    %s84 = sadd.s32 %s83, 1
    %s85 = scalar_select %p82, %s83, %s84
    %p88 = pneg %p82
    %p89 = scmp.eq.s32.totalorder %s9, 1
    %p90 = por %p88, %p89
    %p91 = scmp.ne.s32.totalorder %s83, %s86
    %p92 = scmp.eq.s32.totalorder %s9, 0
    %p93 = por %p91, %p92
    %p94 = scmp.ne.s32.totalorder %s83, %s86
    %p95 = scmp.eq.s32.totalorder %s14, 1
    %p96 = por %p94, %p95
    %p97 = scmp.ne.s32.totalorder %s86, %s87
    %p98 = scmp.eq.s32.totalorder %s14, 0
    %p99 = por %p97, %p98
    %p100 = scmp.ne.s32.totalorder %s86, %s87
    %p101 = scmp.eq.s32.totalorder %s15, 1
    %p102 = por %p100, %p101
    %p104 = scmp.ne.s32.totalorder %s87, %s103
    %p105 = scmp.eq.s32.totalorder %s15, 0
    %p106 = por %p104, %p105
    %s107 = ssub.s32 %s16, %s28
    %s108 = ssub.s32 %s17, %s24
    %s109 = sor.u32 %s107, %s108
    %p110 = scmp.eq.s32.totalorder %s109, 0
    %s112 = sadd.s32 %s111, 1
    %s113 = scalar_select %p110, %s111, %s112
    %p116 = pneg %p110
    %p117 = scmp.eq.s32.totalorder %s9, 1
    %p118 = por %p116, %p117
    %p119 = scmp.ne.s32.totalorder %s111, %s114
    %p120 = scmp.eq.s32.totalorder %s9, 0
    %p121 = por %p119, %p120
    %p122 = scmp.ne.s32.totalorder %s111, %s114
    %p123 = scmp.eq.s32.totalorder %s14, 1
    %p124 = por %p122, %p123
    %p125 = scmp.ne.s32.totalorder %s114, %s115
    %p126 = scmp.eq.s32.totalorder %s14, 0
    %p127 = por %p125, %p126
    %p128 = scmp.ne.s32.totalorder %s114, %s115
    %p129 = scmp.eq.s32.totalorder %s15, 1
    %p130 = por %p128, %p129
    %p132 = scmp.ne.s32.totalorder %s115, %s131
    %p133 = scmp.eq.s32.totalorder %s15, 0
    %p134 = por %p132, %p133
    %p135 = scmp.le.s32.totalorder 1, %s9
    %p136 = scmp.lt.s32.totalorder %s9, 3
    %p137 = pnand %p135, %p136
    %p138 = pneg %p137
    // Predicated region
    $region9: #{run.6} parent=5 // pred_check
      _
    $region10: #{run.6} parent=5 // pred_check_branch
      %140 = sbr.rel (%p137) target = $region12
    $region11: #{run.6} parent=5 // pred_region
      %s141 = ssub.s32 %s9, 1
      // Predicated region
      $region13: #{run.6} parent=11 // pred_check
        %p142 = pneg %p73
      $region14: #{run.6} parent=11 // pred_check_branch
        %144 = sbr.rel (%p142) target = $region16
      $region15: #{run.6} parent=11 // pred_region
        %p145 = scmp.lt.s32.totalorder %s19, 0
        %s146 = scalar_select %p145, %s19, 0
        %s147 = smul.addr %s146, 4
        %s148 = scalar_lea.vmem %s1, %s147
      $region16: #{run.6} parent=11 // pred_fallthru
        _
      // Predicated region
      $region17: #{run.6} parent=11 // pred_check
        %p149 = pneg %p99
      $region18: #{run.6} parent=11 // pred_check_branch
        %151 = sbr.rel (%p149) target = $region20
      $region19: #{run.6} parent=11 // pred_region
        %p152 = scmp.lt.s32.totalorder %s19, 0
        %s153 = scalar_select %p152, %s19, 0
        %s154 = scalar_lea.vmem %s2, %s153
      $region20: #{run.6} parent=11 // pred_fallthru
        _
    $region12: #{run.6} parent=5 // pred_fallthru
      _
    %p155 = scmp.lt.s32.totalorder %s9, 2
    // Predicated region
    $region21: #{run.6} parent=5 // pred_check
      %p156 = pneg %p155
    $region22: #{run.6} parent=5 // pred_check_branch
      %158 = sbr.rel (%p156) target = $region24
    $region23: #{run.6} parent=5 // pred_region
      // Predicated region
      $region25: #{run.6} parent=23 // pred_check
        %p159 = pneg %p41
      $region26: #{run.6} parent=23 // pred_check_branch
        %161 = sbr.rel (%p159) target = $region28
      $region27: #{run.6} parent=23 // pred_region
        %p162 = scmp.lt.s32.totalorder %s16, 1
        %s163 = scalar_select %p162, %s16, 1
        %s164 = smul.addr %s163, 20
        %s165 = smul.addr %s164, 8
        %s166 = scalar_lea.vmem %s0, %s165
      $region28: #{run.6} parent=23 // pred_fallthru
        _
    $region24: #{run.6} parent=5 // pred_fallthru
      _
    %p167 = scmp.le.s32.totalorder 1, %s9
    %p168 = scmp.lt.s32.totalorder %s9, 3
    %p169 = pnand %p167, %p168
    %p170 = pneg %p169
    // Predicated region
    $region29: #{run.6} parent=5 // pred_check
      _
    $region30: #{run.6} parent=5 // pred_check_branch
      %172 = sbr.rel (%p169) target = $region32
    $region31: #{run.6} parent=5 // pred_region
      %s173 = ssub.s32 %s9, 1
      %p174 = scmp.lt.s32.totalorder %s18, 1
      %s175 = scalar_select %p174, %s18, 1
      %s176 = smul.addr %s175, 20
      %s177 = smul.addr %s176, 8
      %s178 = scalar_lea.vmem %s0, %s177
      %p179 = pneg %p47
      %p180 = pneg %p44
      %p181 = scmp.lt.s32.totalorder %s19, 0
      %s182 = scalar_select %p181, %s19, 0
      %s183 = smul.addr %s182, 4
      %s184 = scalar_lea.vmem %s1, %s183
      %p185 = pneg %p73
      %p186 = pneg %p70
      %p187 = scmp.lt.s32.totalorder %s19, 0
      %s188 = scalar_select %p187, %s19, 0
      %s189 = scalar_lea.vmem %s2, %s188
      %p190 = pneg %p99
      %p191 = pneg %p96
      %p192 = pneg %p127
      %p193 = pneg %p124
      %p194 = scmp.lt.s32.totalorder %s18, 1
      %s195 = scalar_select %p194, %s18, 1
      %p196 = scmp.lt.s32.totalorder %s19, 0
      %s197 = scalar_select %p196, %s19, 0
      %s198 = smul.addr %s195, 8
      %s199 = sadd.s32 %s197, %s198
      %s200 = smul.addr %s199, 8
      %s201 = scalar_lea.vmem %s3, %s200
      %p202 = scmp.lt.s32.totalorder %s18, 1
      %s203 = scalar_select %p202, %s18, 1
      %s204 = smul.addr %s203, 20
      %s205 = smul.addr %s204, 8
      %s206 = scalar_lea.vmem %s0, %s205
      %p207 = scmp.lt.s32.totalorder %s19, 0
      %s208 = scalar_select %p207, %s19, 0
      %s209 = smul.addr %s208, 4
      %s210 = scalar_lea.vmem %s1, %s209
      %p211 = scmp.lt.s32.totalorder %s19, 0
      %s212 = scalar_select %p211, %s19, 0
      %s213 = scalar_lea.vmem %s2, %s212
      %p214 = scmp.lt.s32.totalorder %s18, 1
      %s215 = scalar_select %p214, %s18, 1
      %p216 = scmp.lt.s32.totalorder %s19, 0
      %s217 = scalar_select %p216, %s19, 0
      %s218 = smul.addr %s215, 8
      %s219 = sadd.s32 %s217, %s218
      %s220 = smul.addr %s219, 8
      %s221 = scalar_lea.vmem %s3, %s220
      %v223 = vld [vmem:[%s206] sm:$0xff]
      %v224 = vld [vmem:[%s206 + $0x10] sm:$0xff]
      %v225 = vld [vmem:[%s206 + $0x20] sm:$0xff]
      %v226 = vld [vmem:[%s206 + $0x30] sm:$0xff]
      %v227 = vld [vmem:[%s206 + $0x40] sm:$0xff]
      %v228 = vld [vmem:[%s206 + $0x50] sm:$0xff]
      %v229 = vld [vmem:[%s206 + $0x60] sm:$0xff]
      %v230 = vld [vmem:[%s206 + $0x70] sm:$0xff]
      %v231 = vpack.c.bf16 %v224, %v223
      %v232 = vpack.c.bf16 %v226, %v225
      %v233 = vpack.c.bf16 %v228, %v227
      %v234 = vpack.c.bf16 %v230, %v229
      %v235 = vld [vmem:[%s210] sm:$0xf]
      %v236 = vld [vmem:[%s210 + $0x4] sm:$0xf]
      %v237 = vld [vmem:[%s210 + $0x8] sm:$0xf]
      %v238 = vld [vmem:[%s210 + $0xc] sm:$0xf]
      %v239 = vld [vmem:[%s210 + $0x10] sm:$0xf]
      %v240 = vld [vmem:[%s210 + $0x14] sm:$0xf]
      %v241 = vld [vmem:[%s210 + $0x18] sm:$0xf]
      %v242 = vld [vmem:[%s210 + $0x1c] sm:$0xf]
      %v243 = vld [vmem:[%s210 + $0x20] sm:$0xf]
      %v244 = vld [vmem:[%s210 + $0x24] sm:$0xf]
      %v245 = vld [vmem:[%s210 + $0x28] sm:$0xf]
      %v246 = vld [vmem:[%s210 + $0x2c] sm:$0xf]
      %v247 = vld [vmem:[%s210 + $0x30] sm:$0xf]
      %v248 = vld [vmem:[%s210 + $0x34] sm:$0xf]
      %v249 = vld [vmem:[%s210 + $0x38] sm:$0xf]
      %v250 = vld [vmem:[%s210 + $0x3c] sm:$0xf]
      %v251 = vld [vmem:[%s206 + $0x1] sm:$0xff]
      %v252 = vld [vmem:[%s206 + $0x11] sm:$0xff]
      %v253 = vld [vmem:[%s206 + $0x21] sm:$0xff]
      %v254 = vld [vmem:[%s206 + $0x31] sm:$0xff]
      %v255 = vld [vmem:[%s206 + $0x41] sm:$0xff]
      %v256 = vld [vmem:[%s206 + $0x51] sm:$0xff]
      %v257 = vld [vmem:[%s206 + $0x61] sm:$0xff]
      %v258 = vld [vmem:[%s206 + $0x71] sm:$0xff]
      %v259 = vpack.c.bf16 %v252, %v251
      %v260 = vpack.c.bf16 %v254, %v253
      %v261 = vpack.c.bf16 %v256, %v255
      %v262 = vpack.c.bf16 %v258, %v257
      %s263 = scalar_lea.vmem %s210, 64
      %v264 = vld [vmem:[%s263] sm:$0xf]
      %v265 = vld [vmem:[%s263 + $0x4] sm:$0xf]
      %v266 = vld [vmem:[%s263 + $0x8] sm:$0xf]
      %v267 = vld [vmem:[%s263 + $0xc] sm:$0xf]
      %v268 = vld [vmem:[%s263 + $0x10] sm:$0xf]
      %v269 = vld [vmem:[%s263 + $0x14] sm:$0xf]
      %v270 = vld [vmem:[%s263 + $0x18] sm:$0xf]
      %v271 = vld [vmem:[%s263 + $0x1c] sm:$0xf]
      %v272 = vld [vmem:[%s263 + $0x20] sm:$0xf]
      %v273 = vld [vmem:[%s263 + $0x24] sm:$0xf]
      %v274 = vld [vmem:[%s263 + $0x28] sm:$0xf]
      %v275 = vld [vmem:[%s263 + $0x2c] sm:$0xf]
      %v276 = vld [vmem:[%s263 + $0x30] sm:$0xf]
      %v277 = vld [vmem:[%s263 + $0x34] sm:$0xf]
      %v278 = vld [vmem:[%s263 + $0x38] sm:$0xf]
      %v279 = vld [vmem:[%s263 + $0x3c] sm:$0xf]
      %v296 = vunpack.c.l.b16 %v264
      %v297 = vunpack.c.l.b16 %v265
      %v298 = vunpack.c.l.b16 %v266
      %v299 = vunpack.c.l.b16 %v267
      %v300 = vunpack.c.l.b16 %v268
      %v301 = vunpack.c.l.b16 %v269
      %v302 = vunpack.c.l.b16 %v270
      %v303 = vunpack.c.l.b16 %v271
      %v304 = vunpack.c.l.b16 %v272
      %v305 = vunpack.c.l.b16 %v273
      %v306 = vunpack.c.l.b16 %v274
      %v307 = vunpack.c.l.b16 %v275
      %v308 = vunpack.c.l.b16 %v276
      %v309 = vunpack.c.l.b16 %v277
      %v310 = vunpack.c.l.b16 %v278
      %v311 = vunpack.c.l.b16 %v279
      %v312 = vpack.c.b16 %v297, %v296
      %v313 = vpack.c.b16 %v299, %v298
      %v314 = vpack.c.b16 %v301, %v300
      %v315 = vpack.c.b16 %v303, %v302
      %v316 = vpack.c.b16 %v305, %v304
      %v317 = vpack.c.b16 %v307, %v306
      %v318 = vpack.c.b16 %v309, %v308
      %v319 = vpack.c.b16 %v311, %v310
      %328 = vmatprep.subr.bf16.mxu0 0
      %329 = vmatpush1.bf16.msra.mxu0 %v319
      %330 = vmatprep.subr.bf16.mxu0 0
      %331 = vmatpush1.bf16.msra.mxu0 %v318
      %332 = vmatprep.subr.bf16.mxu0 0
      %333 = vmatpush1.bf16.msra.mxu0 %v317
      %334 = vmatprep.subr.bf16.mxu0 0
      %335 = vmatpush1.bf16.msra.mxu0 %v316
      %336 = vmatprep.subr.bf16.mxu0 0
      %337 = vmatpush1.bf16.msra.mxu0 %v315
      %338 = vmatprep.subr.bf16.mxu0 0
      %339 = vmatpush1.bf16.msra.mxu0 %v314
      %340 = vmatprep.subr.bf16.mxu0 0
      %341 = vmatpush1.bf16.msra.mxu0 %v313
      %342 = vmatprep.subr.bf16.mxu0 0
      %343 = vmatpush1.bf16.msra.mxu0 %v312
      %344 = vmatprep.subr.bf16.mxu0 0
      %345 = vmatpush2.bf16.msra.mxu0 0
      %346 = vmatprep.subr.bf16.mxu0 0
      %347 = vmatpush2.bf16.msra.mxu0 0
      %348 = vmatprep.subr.bf16.mxu0 0
      %349 = vmatpush2.bf16.msra.mxu0 0
      %350 = vmatprep.subr.bf16.mxu0 0
      %351 = vmatpush2.bf16.msra.mxu0 0
      %352 = vmatprep.subr.bf16.mxu0 0
      %353 = vmatpush2.bf16.msra.mxu0 0
      %354 = vmatprep.subr.bf16.mxu0 0
      %355 = vmatpush2.bf16.msra.mxu0 0
      %356 = vmatprep.subr.bf16.mxu0 0
      %357 = vmatpush2.bf16.msra.mxu0 0
      %358 = vmatprep.subr.bf16.mxu0 0
      %359 = vmatpush2.bf16.msra.mxu0 0
      %360 = vmatprep.mubr.bf16.mxu0 0
      %361 = vmatmul.mubr.bf16.gmra.mxu0 %v259
      %v362 = vpop.f32.mrf.mxu0
      %v363 = vadd.f32 0.0, %v362
      %v364 = vpop.f32.mrf.mxu0
      %v365 = vpop.f32.mrf.mxu0
      %v366 = vadd.f32 0.0, %v365
      %v367 = vpop.f32.mrf.mxu0
      %368 = vmatprep.mubr.bf16.mxu0 0
      %369 = vmatmul.mubr.bf16.gmra.mxu0 %v260
      %v370 = vpop.f32.mrf.mxu0
      %v371 = vadd.f32 0.0, %v370
      %v372 = vpop.f32.mrf.mxu0
      %v373 = vpop.f32.mrf.mxu0
      %v374 = vadd.f32 0.0, %v373
      %v375 = vpop.f32.mrf.mxu0
      %376 = vmatprep.mubr.bf16.mxu0 0
      %377 = vmatmul.mubr.bf16.gmra.mxu0 %v261
      %v378 = vpop.f32.mrf.mxu0
      %v379 = vadd.f32 0.0, %v378
      %v380 = vpop.f32.mrf.mxu0
      %v381 = vpop.f32.mrf.mxu0
      %v382 = vadd.f32 0.0, %v381
      %v383 = vpop.f32.mrf.mxu0
      %384 = vmatprep.mubr.bf16.mxu0 0
      %385 = vmatmul.mubr.bf16.gmra.mxu0 %v262
      %v386 = vpop.f32.mrf.mxu0
      %v387 = vadd.f32 0.0, %v386
      %v388 = vpop.f32.mrf.mxu0
      %v389 = vpop.f32.mrf.mxu0
      %v390 = vadd.f32 0.0, %v389
      %v391 = vpop.f32.mrf.mxu0
      %392 = vdwg.mxu0
      %v409 = vunpack.c.l.b16 %v235
      %v410 = vunpack.c.l.b16 %v236
      %v411 = vunpack.c.l.b16 %v237
      %v412 = vunpack.c.l.b16 %v238
      %v413 = vunpack.c.l.b16 %v239
      %v414 = vunpack.c.l.b16 %v240
      %v415 = vunpack.c.l.b16 %v241
      %v416 = vunpack.c.l.b16 %v242
      %v417 = vunpack.c.l.b16 %v243
      %v418 = vunpack.c.l.b16 %v244
      %v419 = vunpack.c.l.b16 %v245
      %v420 = vunpack.c.l.b16 %v246
      %v421 = vunpack.c.l.b16 %v247
      %v422 = vunpack.c.l.b16 %v248
      %v423 = vunpack.c.l.b16 %v249
      %v424 = vunpack.c.l.b16 %v250
      %v425 = vpack.c.b16 %v410, %v409
      %v426 = vpack.c.b16 %v412, %v411
      %v427 = vpack.c.b16 %v414, %v413
      %v428 = vpack.c.b16 %v416, %v415
      %v429 = vpack.c.b16 %v418, %v417
      %v430 = vpack.c.b16 %v420, %v419
      %v431 = vpack.c.b16 %v422, %v421
      %v432 = vpack.c.b16 %v424, %v423
      %441 = vmatprep.subr.bf16.mxu0 0
      %442 = vmatpush1.bf16.msra.mxu0 %v432
      %443 = vmatprep.subr.bf16.mxu0 0
      %444 = vmatpush1.bf16.msra.mxu0 %v431
      %445 = vmatprep.subr.bf16.mxu0 0
      %446 = vmatpush1.bf16.msra.mxu0 %v430
      %447 = vmatprep.subr.bf16.mxu0 0
      %448 = vmatpush1.bf16.msra.mxu0 %v429
      %449 = vmatprep.subr.bf16.mxu0 0
      %450 = vmatpush1.bf16.msra.mxu0 %v428
      %451 = vmatprep.subr.bf16.mxu0 0
      %452 = vmatpush1.bf16.msra.mxu0 %v427
      %453 = vmatprep.subr.bf16.mxu0 0
      %454 = vmatpush1.bf16.msra.mxu0 %v426
      %455 = vmatprep.subr.bf16.mxu0 0
      %456 = vmatpush1.bf16.msra.mxu0 %v425
      %457 = vmatprep.subr.bf16.mxu0 0
      %458 = vmatpush2.bf16.msra.mxu0 0
      %459 = vmatprep.subr.bf16.mxu0 0
      %460 = vmatpush2.bf16.msra.mxu0 0
      %461 = vmatprep.subr.bf16.mxu0 0
      %462 = vmatpush2.bf16.msra.mxu0 0
      %463 = vmatprep.subr.bf16.mxu0 0
      %464 = vmatpush2.bf16.msra.mxu0 0
      %465 = vmatprep.subr.bf16.mxu0 0
      %466 = vmatpush2.bf16.msra.mxu0 0
      %467 = vmatprep.subr.bf16.mxu0 0
      %468 = vmatpush2.bf16.msra.mxu0 0
      %469 = vmatprep.subr.bf16.mxu0 0
      %470 = vmatpush2.bf16.msra.mxu0 0
      %471 = vmatprep.subr.bf16.mxu0 0
      %472 = vmatpush2.bf16.msra.mxu0 0
      %473 = vmatprep.mubr.bf16.mxu0 0
      %474 = vmatmul.mubr.bf16.gmra.mxu0 %v231
      %v475 = vpop.f32.mrf.mxu0
      %v476 = vadd.f32 %v363, %v475
      %v477 = vpop.f32.mrf.mxu0
      %v478 = vpop.f32.mrf.mxu0
      %v479 = vadd.f32 %v366, %v478
      %v480 = vpop.f32.mrf.mxu0
      %481 = vmatprep.mubr.bf16.mxu0 0
      %482 = vmatmul.mubr.bf16.gmra.mxu0 %v232
      %v483 = vpop.f32.mrf.mxu0
      %v484 = vadd.f32 %v371, %v483
      %v485 = vpop.f32.mrf.mxu0
      %v486 = vpop.f32.mrf.mxu0
      %v487 = vadd.f32 %v374, %v486
      %v488 = vpop.f32.mrf.mxu0
      %489 = vmatprep.mubr.bf16.mxu0 0
      %490 = vmatmul.mubr.bf16.gmra.mxu0 %v233
      %v491 = vpop.f32.mrf.mxu0
      %v492 = vadd.f32 %v379, %v491
      %v493 = vpop.f32.mrf.mxu0
      %v494 = vpop.f32.mrf.mxu0
      %v495 = vadd.f32 %v382, %v494
      %v496 = vpop.f32.mrf.mxu0
      %497 = vmatprep.mubr.bf16.mxu0 0
      %498 = vmatmul.mubr.bf16.gmra.mxu0 %v234
      %v499 = vpop.f32.mrf.mxu0
      %v500 = vadd.f32 %v387, %v499
      %v501 = vpop.f32.mrf.mxu0
      %v502 = vpop.f32.mrf.mxu0
      %v503 = vadd.f32 %v390, %v502
      %v504 = vpop.f32.mrf.mxu0
      %505 = vdwg.mxu0
      %v506 = vld [vmem:[%s206 + $0x2] sm:$0xff]
      %v507 = vld [vmem:[%s206 + $0x12] sm:$0xff]
      %v508 = vld [vmem:[%s206 + $0x22] sm:$0xff]
      %v509 = vld [vmem:[%s206 + $0x32] sm:$0xff]
      %v510 = vld [vmem:[%s206 + $0x42] sm:$0xff]
      %v511 = vld [vmem:[%s206 + $0x52] sm:$0xff]
      %v512 = vld [vmem:[%s206 + $0x62] sm:$0xff]
      %v513 = vld [vmem:[%s206 + $0x72] sm:$0xff]
      %v514 = vpack.c.bf16 %v507, %v506
      %v515 = vpack.c.bf16 %v509, %v508
      %v516 = vpack.c.bf16 %v511, %v510
      %v517 = vpack.c.bf16 %v513, %v512
      %s518 = scalar_lea.vmem %s210, 128
      %v519 = vld [vmem:[%s518] sm:$0xf]
      %v520 = vld [vmem:[%s518 + $0x4] sm:$0xf]
      %v521 = vld [vmem:[%s518 + $0x8] sm:$0xf]
      %v522 = vld [vmem:[%s518 + $0xc] sm:$0xf]
      %v523 = vld [vmem:[%s518 + $0x10] sm:$0xf]
      %v524 = vld [vmem:[%s518 + $0x14] sm:$0xf]
      %v525 = vld [vmem:[%s518 + $0x18] sm:$0xf]
      %v526 = vld [vmem:[%s518 + $0x1c] sm:$0xf]
      %v527 = vld [vmem:[%s518 + $0x20] sm:$0xf]
      %v528 = vld [vmem:[%s518 + $0x24] sm:$0xf]
      %v529 = vld [vmem:[%s518 + $0x28] sm:$0xf]
      %v530 = vld [vmem:[%s518 + $0x2c] sm:$0xf]
      %v531 = vld [vmem:[%s518 + $0x30] sm:$0xf]
      %v532 = vld [vmem:[%s518 + $0x34] sm:$0xf]
      %v533 = vld [vmem:[%s518 + $0x38] sm:$0xf]
      %v534 = vld [vmem:[%s518 + $0x3c] sm:$0xf]
      %v551 = vunpack.c.l.b16 %v519
      %v552 = vunpack.c.l.b16 %v520
      %v553 = vunpack.c.l.b16 %v521
      %v554 = vunpack.c.l.b16 %v522
      %v555 = vunpack.c.l.b16 %v523
      %v556 = vunpack.c.l.b16 %v524
      %v557 = vunpack.c.l.b16 %v525
      %v558 = vunpack.c.l.b16 %v526
      %v559 = vunpack.c.l.b16 %v527
      %v560 = vunpack.c.l.b16 %v528
      %v561 = vunpack.c.l.b16 %v529
      %v562 = vunpack.c.l.b16 %v530
      %v563 = vunpack.c.l.b16 %v531
      %v564 = vunpack.c.l.b16 %v532
      %v565 = vunpack.c.l.b16 %v533
      %v566 = vunpack.c.l.b16 %v534
      %v567 = vpack.c.b16 %v552, %v551
      %v568 = vpack.c.b16 %v554, %v553
      %v569 = vpack.c.b16 %v556, %v555
      %v570 = vpack.c.b16 %v558, %v557
      %v571 = vpack.c.b16 %v560, %v559
      %v572 = vpack.c.b16 %v562, %v561
      %v573 = vpack.c.b16 %v564, %v563
      %v574 = vpack.c.b16 %v566, %v565
      %583 = vmatprep.subr.bf16.mxu0 0
      %584 = vmatpush1.bf16.msra.mxu0 %v574
      %585 = vmatprep.subr.bf16.mxu0 0
      %586 = vmatpush1.bf16.msra.mxu0 %v573
      %587 = vmatprep.subr.bf16.mxu0 0
      %588 = vmatpush1.bf16.msra.mxu0 %v572
      %589 = vmatprep.subr.bf16.mxu0 0
      %590 = vmatpush1.bf16.msra.mxu0 %v571
      %591 = vmatprep.subr.bf16.mxu0 0
      %592 = vmatpush1.bf16.msra.mxu0 %v570
      %593 = vmatprep.subr.bf16.mxu0 0
      %594 = vmatpush1.bf16.msra.mxu0 %v569
      %595 = vmatprep.subr.bf16.mxu0 0
      %596 = vmatpush1.bf16.msra.mxu0 %v568
      %597 = vmatprep.subr.bf16.mxu0 0
      %598 = vmatpush1.bf16.msra.mxu0 %v567
      %599 = vmatprep.subr.bf16.mxu0 0
      %600 = vmatpush2.bf16.msra.mxu0 0
      %601 = vmatprep.subr.bf16.mxu0 0
      %602 = vmatpush2.bf16.msra.mxu0 0
      %603 = vmatprep.subr.bf16.mxu0 0
      %604 = vmatpush2.bf16.msra.mxu0 0
      %605 = vmatprep.subr.bf16.mxu0 0
      %606 = vmatpush2.bf16.msra.mxu0 0
      %607 = vmatprep.subr.bf16.mxu0 0
      %608 = vmatpush2.bf16.msra.mxu0 0
      %609 = vmatprep.subr.bf16.mxu0 0
      %610 = vmatpush2.bf16.msra.mxu0 0
      %611 = vmatprep.subr.bf16.mxu0 0
      %612 = vmatpush2.bf16.msra.mxu0 0
      %613 = vmatprep.subr.bf16.mxu0 0
      %614 = vmatpush2.bf16.msra.mxu0 0
      %615 = vmatprep.mubr.bf16.mxu0 0
      %616 = vmatmul.mubr.bf16.gmra.mxu0 %v514
      %v617 = vpop.f32.mrf.mxu0
      %v618 = vadd.f32 0.0, %v617
      %v619 = vpop.f32.mrf.mxu0
      %v620 = vpop.f32.mrf.mxu0
      %v621 = vadd.f32 0.0, %v620
      %v622 = vpop.f32.mrf.mxu0
      %623 = vmatprep.mubr.bf16.mxu0 0
      %624 = vmatmul.mubr.bf16.gmra.mxu0 %v515
      %v625 = vpop.f32.mrf.mxu0
      %v626 = vadd.f32 0.0, %v625
      %v627 = vpop.f32.mrf.mxu0
      %v628 = vpop.f32.mrf.mxu0
      %v629 = vadd.f32 0.0, %v628
      %v630 = vpop.f32.mrf.mxu0
      %631 = vmatprep.mubr.bf16.mxu0 0
      %632 = vmatmul.mubr.bf16.gmra.mxu0 %v516
      %v633 = vpop.f32.mrf.mxu0
      %v634 = vadd.f32 0.0, %v633
      %v635 = vpop.f32.mrf.mxu0
      %v636 = vpop.f32.mrf.mxu0
      %v637 = vadd.f32 0.0, %v636
      %v638 = vpop.f32.mrf.mxu0
      %639 = vmatprep.mubr.bf16.mxu0 0
      %640 = vmatmul.mubr.bf16.gmra.mxu0 %v517
      %v641 = vpop.f32.mrf.mxu0
      %v642 = vadd.f32 0.0, %v641
      %v643 = vpop.f32.mrf.mxu0
      %v644 = vpop.f32.mrf.mxu0
      %v645 = vadd.f32 0.0, %v644
      %v646 = vpop.f32.mrf.mxu0
      %647 = vdwg.mxu0
      %v648 = vadd.f32 %v476, %v618
      %v649 = vadd.f32 %v479, %v621
      %v650 = vadd.f32 %v484, %v626
      %v651 = vadd.f32 %v487, %v629
      %v652 = vadd.f32 %v492, %v634
      %v653 = vadd.f32 %v495, %v637
      %v654 = vadd.f32 %v500, %v642
      %v655 = vadd.f32 %v503, %v645
      %s656 = scalar_lea.vmem %s206, 16
      %v657 = vld [vmem:[%s656] sm:$0xff]
      %v658 = vld [vmem:[%s656 + $0x10] sm:$0xff]
      %v659 = vld [vmem:[%s656 + $0x20] sm:$0xff]
      %v660 = vld [vmem:[%s656 + $0x30] sm:$0xff]
      %v661 = vld [vmem:[%s656 + $0x40] sm:$0xff]
      %v662 = vld [vmem:[%s656 + $0x50] sm:$0xff]
      %v663 = vld [vmem:[%s656 + $0x60] sm:$0xff]
      %v664 = vld [vmem:[%s656 + $0x70] sm:$0xff]
      %v665 = vpack.c.bf16 %v658, %v657
      %v666 = vpack.c.bf16 %v660, %v659
      %v667 = vpack.c.bf16 %v662, %v661
      %v668 = vpack.c.bf16 %v664, %v663
      %s669 = scalar_lea.vmem %s210, 192
      %v670 = vld [vmem:[%s669] sm:$0xf]
      %v671 = vld [vmem:[%s669 + $0x4] sm:$0xf]
      %v672 = vld [vmem:[%s669 + $0x8] sm:$0xf]
      %v673 = vld [vmem:[%s669 + $0xc] sm:$0xf]
      %v674 = vld [vmem:[%s669 + $0x10] sm:$0xf]
      %v675 = vld [vmem:[%s669 + $0x14] sm:$0xf]
      %v676 = vld [vmem:[%s669 + $0x18] sm:$0xf]
      %v677 = vld [vmem:[%s669 + $0x1c] sm:$0xf]
      %v678 = vld [vmem:[%s669 + $0x20] sm:$0xf]
      %v679 = vld [vmem:[%s669 + $0x24] sm:$0xf]
      %v680 = vld [vmem:[%s669 + $0x28] sm:$0xf]
      %v681 = vld [vmem:[%s669 + $0x2c] sm:$0xf]
      %v682 = vld [vmem:[%s669 + $0x30] sm:$0xf]
      %v683 = vld [vmem:[%s669 + $0x34] sm:$0xf]
      %v684 = vld [vmem:[%s669 + $0x38] sm:$0xf]
      %v685 = vld [vmem:[%s669 + $0x3c] sm:$0xf]
      %v702 = vunpack.c.l.b16 %v670
      %v703 = vunpack.c.l.b16 %v671
      %v704 = vunpack.c.l.b16 %v672
      %v705 = vunpack.c.l.b16 %v673
      %v706 = vunpack.c.l.b16 %v674
      %v707 = vunpack.c.l.b16 %v675
      %v708 = vunpack.c.l.b16 %v676
      %v709 = vunpack.c.l.b16 %v677
      %v710 = vunpack.c.l.b16 %v678
      %v711 = vunpack.c.l.b16 %v679
      %v712 = vunpack.c.l.b16 %v680
      %v713 = vunpack.c.l.b16 %v681
      %v714 = vunpack.c.l.b16 %v682
      %v715 = vunpack.c.l.b16 %v683
      %v716 = vunpack.c.l.b16 %v684
      %v717 = vunpack.c.l.b16 %v685
      %v718 = vpack.c.b16 %v703, %v702
      %v719 = vpack.c.b16 %v705, %v704
      %v720 = vpack.c.b16 %v707, %v706
      %v721 = vpack.c.b16 %v709, %v708
      %v722 = vpack.c.b16 %v711, %v710
      %v723 = vpack.c.b16 %v713, %v712
      %v724 = vpack.c.b16 %v715, %v714
      %v725 = vpack.c.b16 %v717, %v716
      %734 = vmatprep.subr.bf16.mxu0 0
      %735 = vmatpush1.bf16.msra.mxu0 %v725
      %736 = vmatprep.subr.bf16.mxu0 0
      %737 = vmatpush1.bf16.msra.mxu0 %v724
      %738 = vmatprep.subr.bf16.mxu0 0
      %739 = vmatpush1.bf16.msra.mxu0 %v723
      %740 = vmatprep.subr.bf16.mxu0 0
      %741 = vmatpush1.bf16.msra.mxu0 %v722
      %742 = vmatprep.subr.bf16.mxu0 0
      %743 = vmatpush1.bf16.msra.mxu0 %v721
      %744 = vmatprep.subr.bf16.mxu0 0
      %745 = vmatpush1.bf16.msra.mxu0 %v720
      %746 = vmatprep.subr.bf16.mxu0 0
      %747 = vmatpush1.bf16.msra.mxu0 %v719
      %748 = vmatprep.subr.bf16.mxu0 0
      %749 = vmatpush1.bf16.msra.mxu0 %v718
      %750 = vmatprep.subr.bf16.mxu0 0
      %751 = vmatpush2.bf16.msra.mxu0 0
      %752 = vmatprep.subr.bf16.mxu0 0
      %753 = vmatpush2.bf16.msra.mxu0 0
      %754 = vmatprep.subr.bf16.mxu0 0
      %755 = vmatpush2.bf16.msra.mxu0 0
      %756 = vmatprep.subr.bf16.mxu0 0
      %757 = vmatpush2.bf16.msra.mxu0 0
      %758 = vmatprep.subr.bf16.mxu0 0
      %759 = vmatpush2.bf16.msra.mxu0 0
      %760 = vmatprep.subr.bf16.mxu0 0
      %761 = vmatpush2.bf16.msra.mxu0 0
      %762 = vmatprep.subr.bf16.mxu0 0
      %763 = vmatpush2.bf16.msra.mxu0 0
      %764 = vmatprep.subr.bf16.mxu0 0
      %765 = vmatpush2.bf16.msra.mxu0 0
      %766 = vmatprep.mubr.bf16.mxu0 0
      %767 = vmatmul.mubr.bf16.gmra.mxu0 %v665
      %v768 = vpop.f32.mrf.mxu0
      %v769 = vadd.f32 0.0, %v768
      %v770 = vpop.f32.mrf.mxu0
      %v771 = vpop.f32.mrf.mxu0
      %v772 = vadd.f32 0.0, %v771
      %v773 = vpop.f32.mrf.mxu0
      %774 = vmatprep.mubr.bf16.mxu0 0
      %775 = vmatmul.mubr.bf16.gmra.mxu0 %v666
      %v776 = vpop.f32.mrf.mxu0
      %v777 = vadd.f32 0.0, %v776
      %v778 = vpop.f32.mrf.mxu0
      %v779 = vpop.f32.mrf.mxu0
      %v780 = vadd.f32 0.0, %v779
      %v781 = vpop.f32.mrf.mxu0
      %782 = vmatprep.mubr.bf16.mxu0 0
      %783 = vmatmul.mubr.bf16.gmra.mxu0 %v667
      %v784 = vpop.f32.mrf.mxu0
      %v785 = vadd.f32 0.0, %v784
      %v786 = vpop.f32.mrf.mxu0
      %v787 = vpop.f32.mrf.mxu0
      %v788 = vadd.f32 0.0, %v787
      %v789 = vpop.f32.mrf.mxu0
      %790 = vmatprep.mubr.bf16.mxu0 0
      %791 = vmatmul.mubr.bf16.gmra.mxu0 %v668
      %v792 = vpop.f32.mrf.mxu0
      %v793 = vadd.f32 0.0, %v792
      %v794 = vpop.f32.mrf.mxu0
      %v795 = vpop.f32.mrf.mxu0
      %v796 = vadd.f32 0.0, %v795
      %v797 = vpop.f32.mrf.mxu0
      %798 = vdwg.mxu0
      %v799 = vadd.f32 %v648, %v769
      %v800 = vadd.f32 %v649, %v772
      %v801 = vadd.f32 %v650, %v777
      %v802 = vadd.f32 %v651, %v780
      %v803 = vadd.f32 %v652, %v785
      %v804 = vadd.f32 %v653, %v788
      %v805 = vadd.f32 %v654, %v793
      %v806 = vadd.f32 %v655, %v796
      %v807 = vld [vmem:[%s656 + $0x1] sm:$0xff]
      %v808 = vld [vmem:[%s656 + $0x11] sm:$0xff]
      %v809 = vld [vmem:[%s656 + $0x21] sm:$0xff]
      %v810 = vld [vmem:[%s656 + $0x31] sm:$0xff]
      %v811 = vld [vmem:[%s656 + $0x41] sm:$0xff]
      %v812 = vld [vmem:[%s656 + $0x51] sm:$0xff]
      %v813 = vld [vmem:[%s656 + $0x61] sm:$0xff]
      %v814 = vld [vmem:[%s656 + $0x71] sm:$0xff]
      %v815 = vpack.c.bf16 %v808, %v807
      %v816 = vpack.c.bf16 %v810, %v809
      %v817 = vpack.c.bf16 %v812, %v811
      %v818 = vpack.c.bf16 %v814, %v813
      %s819 = scalar_lea.vmem %s210, 256
      %v820 = vld [vmem:[%s819] sm:$0xf]
      %v821 = vld [vmem:[%s819 + $0x4] sm:$0xf]
      %v822 = vld [vmem:[%s819 + $0x8] sm:$0xf]
      %v823 = vld [vmem:[%s819 + $0xc] sm:$0xf]
      %v824 = vld [vmem:[%s819 + $0x10] sm:$0xf]
      %v825 = vld [vmem:[%s819 + $0x14] sm:$0xf]
      %v826 = vld [vmem:[%s819 + $0x18] sm:$0xf]
      %v827 = vld [vmem:[%s819 + $0x1c] sm:$0xf]
      %v828 = vld [vmem:[%s819 + $0x20] sm:$0xf]
      %v829 = vld [vmem:[%s819 + $0x24] sm:$0xf]
      %v830 = vld [vmem:[%s819 + $0x28] sm:$0xf]
      %v831 = vld [vmem:[%s819 + $0x2c] sm:$0xf]
      %v832 = vld [vmem:[%s819 + $0x30] sm:$0xf]
      %v833 = vld [vmem:[%s819 + $0x34] sm:$0xf]
      %v834 = vld [vmem:[%s819 + $0x38] sm:$0xf]
      %v835 = vld [vmem:[%s819 + $0x3c] sm:$0xf]
      %v852 = vunpack.c.l.b16 %v820
      %v853 = vunpack.c.l.b16 %v821
      %v854 = vunpack.c.l.b16 %v822
      %v855 = vunpack.c.l.b16 %v823
      %v856 = vunpack.c.l.b16 %v824
      %v857 = vunpack.c.l.b16 %v825
      %v858 = vunpack.c.l.b16 %v826
      %v859 = vunpack.c.l.b16 %v827
      %v860 = vunpack.c.l.b16 %v828
      %v861 = vunpack.c.l.b16 %v829
      %v862 = vunpack.c.l.b16 %v830
      %v863 = vunpack.c.l.b16 %v831
      %v864 = vunpack.c.l.b16 %v832
      %v865 = vunpack.c.l.b16 %v833
      %v866 = vunpack.c.l.b16 %v834
      %v867 = vunpack.c.l.b16 %v835
      %v868 = vpack.c.b16 %v853, %v852
      %v869 = vpack.c.b16 %v855, %v854
      %v870 = vpack.c.b16 %v857, %v856
      %v871 = vpack.c.b16 %v859, %v858
      %v872 = vpack.c.b16 %v861, %v860
      %v873 = vpack.c.b16 %v863, %v862
      %v874 = vpack.c.b16 %v865, %v864
      %v875 = vpack.c.b16 %v867, %v866
      %884 = vmatprep.subr.bf16.mxu0 0
      %885 = vmatpush1.bf16.msra.mxu0 %v875
      %886 = vmatprep.subr.bf16.mxu0 0
      %887 = vmatpush1.bf16.msra.mxu0 %v874
      %888 = vmatprep.subr.bf16.mxu0 0
      %889 = vmatpush1.bf16.msra.mxu0 %v873
      %890 = vmatprep.subr.bf16.mxu0 0
      %891 = vmatpush1.bf16.msra.mxu0 %v872
      %892 = vmatprep.subr.bf16.mxu0 0
      %893 = vmatpush1.bf16.msra.mxu0 %v871
      %894 = vmatprep.subr.bf16.mxu0 0
      %895 = vmatpush1.bf16.msra.mxu0 %v870
      %896 = vmatprep.subr.bf16.mxu0 0
      %897 = vmatpush1.bf16.msra.mxu0 %v869
      %898 = vmatprep.subr.bf16.mxu0 0
      %899 = vmatpush1.bf16.msra.mxu0 %v868
      %900 = vmatprep.subr.bf16.mxu0 0
      %901 = vmatpush2.bf16.msra.mxu0 0
      %902 = vmatprep.subr.bf16.mxu0 0
      %903 = vmatpush2.bf16.msra.mxu0 0
      %904 = vmatprep.subr.bf16.mxu0 0
      %905 = vmatpush2.bf16.msra.mxu0 0
      %906 = vmatprep.subr.bf16.mxu0 0
      %907 = vmatpush2.bf16.msra.mxu0 0
      %908 = vmatprep.subr.bf16.mxu0 0
      %909 = vmatpush2.bf16.msra.mxu0 0
      %910 = vmatprep.subr.bf16.mxu0 0
      %911 = vmatpush2.bf16.msra.mxu0 0
      %912 = vmatprep.subr.bf16.mxu0 0
      %913 = vmatpush2.bf16.msra.mxu0 0
      %914 = vmatprep.subr.bf16.mxu0 0
      %915 = vmatpush2.bf16.msra.mxu0 0
      %916 = vmatprep.mubr.bf16.mxu0 0
      %917 = vmatmul.mubr.bf16.gmra.mxu0 %v815
      %v918 = vpop.f32.mrf.mxu0
      %v919 = vadd.f32 0.0, %v918
      %v920 = vpop.f32.mrf.mxu0
      %v921 = vpop.f32.mrf.mxu0
      %v922 = vadd.f32 0.0, %v921
      %v923 = vpop.f32.mrf.mxu0
      %924 = vmatprep.mubr.bf16.mxu0 0
      %925 = vmatmul.mubr.bf16.gmra.mxu0 %v816
      %v926 = vpop.f32.mrf.mxu0
      %v927 = vadd.f32 0.0, %v926
      %v928 = vpop.f32.mrf.mxu0
      %v929 = vpop.f32.mrf.mxu0
      %v930 = vadd.f32 0.0, %v929
      %v931 = vpop.f32.mrf.mxu0
      %932 = vmatprep.mubr.bf16.mxu0 0
      %933 = vmatmul.mubr.bf16.gmra.mxu0 %v817
      %v934 = vpop.f32.mrf.mxu0
      %v935 = vadd.f32 0.0, %v934
      %v936 = vpop.f32.mrf.mxu0
      %v937 = vpop.f32.mrf.mxu0
      %v938 = vadd.f32 0.0, %v937
      %v939 = vpop.f32.mrf.mxu0
      %940 = vmatprep.mubr.bf16.mxu0 0
      %941 = vmatmul.mubr.bf16.gmra.mxu0 %v818
      %v942 = vpop.f32.mrf.mxu0
      %v943 = vadd.f32 0.0, %v942
      %v944 = vpop.f32.mrf.mxu0
      %v945 = vpop.f32.mrf.mxu0
      %v946 = vadd.f32 0.0, %v945
      %v947 = vpop.f32.mrf.mxu0
      %948 = vdwg.mxu0
      %v949 = vadd.f32 %v799, %v919
      %v950 = vadd.f32 %v800, %v922
      %v951 = vadd.f32 %v801, %v927
      %v952 = vadd.f32 %v802, %v930
      %v953 = vadd.f32 %v803, %v935
      %v954 = vadd.f32 %v804, %v938
      %v955 = vadd.f32 %v805, %v943
      %v956 = vadd.f32 %v806, %v946
      %v957 = vld [vmem:[%s656 + $0x2] sm:$0xff]
      %v958 = vld [vmem:[%s656 + $0x12] sm:$0xff]
      %v959 = vld [vmem:[%s656 + $0x22] sm:$0xff]
      %v960 = vld [vmem:[%s656 + $0x32] sm:$0xff]
      %v961 = vld [vmem:[%s656 + $0x42] sm:$0xff]
      %v962 = vld [vmem:[%s656 + $0x52] sm:$0xff]
      %v963 = vld [vmem:[%s656 + $0x62] sm:$0xff]
      %v964 = vld [vmem:[%s656 + $0x72] sm:$0xff]
      %v965 = vpack.c.bf16 %v958, %v957
      %v966 = vpack.c.bf16 %v960, %v959
      %v967 = vpack.c.bf16 %v962, %v961
      %v968 = vpack.c.bf16 %v964, %v963
      %s969 = scalar_lea.vmem %s210, 320
      %v970 = vld [vmem:[%s969] sm:$0xf]
      %v971 = vld [vmem:[%s969 + $0x4] sm:$0xf]
      %v972 = vld [vmem:[%s969 + $0x8] sm:$0xf]
      %v973 = vld [vmem:[%s969 + $0xc] sm:$0xf]
      %v974 = vld [vmem:[%s969 + $0x10] sm:$0xf]
      %v975 = vld [vmem:[%s969 + $0x14] sm:$0xf]
      %v976 = vld [vmem:[%s969 + $0x18] sm:$0xf]
      %v977 = vld [vmem:[%s969 + $0x1c] sm:$0xf]
      %v978 = vld [vmem:[%s969 + $0x20] sm:$0xf]
      %v979 = vld [vmem:[%s969 + $0x24] sm:$0xf]
      %v980 = vld [vmem:[%s969 + $0x28] sm:$0xf]
      %v981 = vld [vmem:[%s969 + $0x2c] sm:$0xf]
      %v982 = vld [vmem:[%s969 + $0x30] sm:$0xf]
      %v983 = vld [vmem:[%s969 + $0x34] sm:$0xf]
      %v984 = vld [vmem:[%s969 + $0x38] sm:$0xf]
      %v985 = vld [vmem:[%s969 + $0x3c] sm:$0xf]
      %v1002 = vunpack.c.l.b16 %v970
      %v1003 = vunpack.c.l.b16 %v971
      %v1004 = vunpack.c.l.b16 %v972
      %v1005 = vunpack.c.l.b16 %v973
      %v1006 = vunpack.c.l.b16 %v974
      %v1007 = vunpack.c.l.b16 %v975
      %v1008 = vunpack.c.l.b16 %v976
      %v1009 = vunpack.c.l.b16 %v977
      %v1010 = vunpack.c.l.b16 %v978
      %v1011 = vunpack.c.l.b16 %v979
      %v1012 = vunpack.c.l.b16 %v980
      %v1013 = vunpack.c.l.b16 %v981
      %v1014 = vunpack.c.l.b16 %v982
      %v1015 = vunpack.c.l.b16 %v983
      %v1016 = vunpack.c.l.b16 %v984
      %v1017 = vunpack.c.l.b16 %v985
      %v1018 = vpack.c.b16 %v1003, %v1002
      %v1019 = vpack.c.b16 %v1005, %v1004
      %v1020 = vpack.c.b16 %v1007, %v1006
      %v1021 = vpack.c.b16 %v1009, %v1008
      %v1022 = vpack.c.b16 %v1011, %v1010
      %v1023 = vpack.c.b16 %v1013, %v1012
      %v1024 = vpack.c.b16 %v1015, %v1014
      %v1025 = vpack.c.b16 %v1017, %v1016
      %1034 = vmatprep.subr.bf16.mxu0 0
      %1035 = vmatpush1.bf16.msra.mxu0 %v1025
      %1036 = vmatprep.subr.bf16.mxu0 0
      %1037 = vmatpush1.bf16.msra.mxu0 %v1024
      %1038 = vmatprep.subr.bf16.mxu0 0
      %1039 = vmatpush1.bf16.msra.mxu0 %v1023
      %1040 = vmatprep.subr.bf16.mxu0 0
      %1041 = vmatpush1.bf16.msra.mxu0 %v1022
      %1042 = vmatprep.subr.bf16.mxu0 0
      %1043 = vmatpush1.bf16.msra.mxu0 %v1021
      %1044 = vmatprep.subr.bf16.mxu0 0
      %1045 = vmatpush1.bf16.msra.mxu0 %v1020
      %1046 = vmatprep.subr.bf16.mxu0 0
      %1047 = vmatpush1.bf16.msra.mxu0 %v1019
      %1048 = vmatprep.subr.bf16.mxu0 0
      %1049 = vmatpush1.bf16.msra.mxu0 %v1018
      %1050 = vmatprep.subr.bf16.mxu0 0
      %1051 = vmatpush2.bf16.msra.mxu0 0
      %1052 = vmatprep.subr.bf16.mxu0 0
      %1053 = vmatpush2.bf16.msra.mxu0 0
      %1054 = vmatprep.subr.bf16.mxu0 0
      %1055 = vmatpush2.bf16.msra.mxu0 0
      %1056 = vmatprep.subr.bf16.mxu0 0
      %1057 = vmatpush2.bf16.msra.mxu0 0
      %1058 = vmatprep.subr.bf16.mxu0 0
      %1059 = vmatpush2.bf16.msra.mxu0 0
      %1060 = vmatprep.subr.bf16.mxu0 0
      %1061 = vmatpush2.bf16.msra.mxu0 0
      %1062 = vmatprep.subr.bf16.mxu0 0
      %1063 = vmatpush2.bf16.msra.mxu0 0
      %1064 = vmatprep.subr.bf16.mxu0 0
      %1065 = vmatpush2.bf16.msra.mxu0 0
      %1066 = vmatprep.mubr.bf16.mxu0 0
      %1067 = vmatmul.mubr.bf16.gmra.mxu0 %v965
      %v1068 = vpop.f32.mrf.mxu0
      %v1069 = vadd.f32 0.0, %v1068
      %v1070 = vpop.f32.mrf.mxu0
      %v1071 = vpop.f32.mrf.mxu0
      %v1072 = vadd.f32 0.0, %v1071
      %v1073 = vpop.f32.mrf.mxu0
      %1074 = vmatprep.mubr.bf16.mxu0 0
      %1075 = vmatmul.mubr.bf16.gmra.mxu0 %v966
      %v1076 = vpop.f32.mrf.mxu0
      %v1077 = vadd.f32 0.0, %v1076
      %v1078 = vpop.f32.mrf.mxu0
      %v1079 = vpop.f32.mrf.mxu0
      %v1080 = vadd.f32 0.0, %v1079
      %v1081 = vpop.f32.mrf.mxu0
      %1082 = vmatprep.mubr.bf16.mxu0 0
      %1083 = vmatmul.mubr.bf16.gmra.mxu0 %v967
      %v1084 = vpop.f32.mrf.mxu0
      %v1085 = vadd.f32 0.0, %v1084
      %v1086 = vpop.f32.mrf.mxu0
      %v1087 = vpop.f32.mrf.mxu0
      %v1088 = vadd.f32 0.0, %v1087
      %v1089 = vpop.f32.mrf.mxu0
      %1090 = vmatprep.mubr.bf16.mxu0 0
      %1091 = vmatmul.mubr.bf16.gmra.mxu0 %v968
      %v1092 = vpop.f32.mrf.mxu0
      %v1093 = vadd.f32 0.0, %v1092
      %v1094 = vpop.f32.mrf.mxu0
      %v1095 = vpop.f32.mrf.mxu0
      %v1096 = vadd.f32 0.0, %v1095
      %v1097 = vpop.f32.mrf.mxu0
      %1098 = vdwg.mxu0
      %v1099 = vadd.f32 %v949, %v1069
      %v1100 = vadd.f32 %v950, %v1072
      %v1101 = vadd.f32 %v951, %v1077
      %v1102 = vadd.f32 %v952, %v1080
      %v1103 = vadd.f32 %v953, %v1085
      %v1104 = vadd.f32 %v954, %v1088
      %v1105 = vadd.f32 %v955, %v1093
      %v1106 = vadd.f32 %v956, %v1096
      %s1107 = scalar_lea.vmem %s206, 32
      %v1108 = vld [vmem:[%s1107] sm:$0xff]
      %v1109 = vld [vmem:[%s1107 + $0x10] sm:$0xff]
      %v1110 = vld [vmem:[%s1107 + $0x20] sm:$0xff]
      %v1111 = vld [vmem:[%s1107 + $0x30] sm:$0xff]
      %v1112 = vld [vmem:[%s1107 + $0x40] sm:$0xff]
      %v1113 = vld [vmem:[%s1107 + $0x50] sm:$0xff]
      %v1114 = vld [vmem:[%s1107 + $0x60] sm:$0xff]
      %v1115 = vld [vmem:[%s1107 + $0x70] sm:$0xff]
      %v1116 = vpack.c.bf16 %v1109, %v1108
      %v1117 = vpack.c.bf16 %v1111, %v1110
      %v1118 = vpack.c.bf16 %v1113, %v1112
      %v1119 = vpack.c.bf16 %v1115, %v1114
      %s1120 = scalar_lea.vmem %s210, 384
      %v1121 = vld [vmem:[%s1120] sm:$0xf]
      %v1122 = vld [vmem:[%s1120 + $0x4] sm:$0xf]
      %v1123 = vld [vmem:[%s1120 + $0x8] sm:$0xf]
      %v1124 = vld [vmem:[%s1120 + $0xc] sm:$0xf]
      %v1125 = vld [vmem:[%s1120 + $0x10] sm:$0xf]
      %v1126 = vld [vmem:[%s1120 + $0x14] sm:$0xf]
      %v1127 = vld [vmem:[%s1120 + $0x18] sm:$0xf]
      %v1128 = vld [vmem:[%s1120 + $0x1c] sm:$0xf]
      %v1129 = vld [vmem:[%s1120 + $0x20] sm:$0xf]
      %v1130 = vld [vmem:[%s1120 + $0x24] sm:$0xf]
      %v1131 = vld [vmem:[%s1120 + $0x28] sm:$0xf]
      %v1132 = vld [vmem:[%s1120 + $0x2c] sm:$0xf]
      %v1133 = vld [vmem:[%s1120 + $0x30] sm:$0xf]
      %v1134 = vld [vmem:[%s1120 + $0x34] sm:$0xf]
      %v1135 = vld [vmem:[%s1120 + $0x38] sm:$0xf]
      %v1136 = vld [vmem:[%s1120 + $0x3c] sm:$0xf]
      %v1153 = vunpack.c.l.b16 %v1121
      %v1154 = vunpack.c.l.b16 %v1122
      %v1155 = vunpack.c.l.b16 %v1123
      %v1156 = vunpack.c.l.b16 %v1124
      %v1157 = vunpack.c.l.b16 %v1125
      %v1158 = vunpack.c.l.b16 %v1126
      %v1159 = vunpack.c.l.b16 %v1127
      %v1160 = vunpack.c.l.b16 %v1128
      %v1161 = vunpack.c.l.b16 %v1129
      %v1162 = vunpack.c.l.b16 %v1130
      %v1163 = vunpack.c.l.b16 %v1131
      %v1164 = vunpack.c.l.b16 %v1132
      %v1165 = vunpack.c.l.b16 %v1133
      %v1166 = vunpack.c.l.b16 %v1134
      %v1167 = vunpack.c.l.b16 %v1135
      %v1168 = vunpack.c.l.b16 %v1136
      %v1169 = vpack.c.b16 %v1154, %v1153
      %v1170 = vpack.c.b16 %v1156, %v1155
      %v1171 = vpack.c.b16 %v1158, %v1157
      %v1172 = vpack.c.b16 %v1160, %v1159
      %v1173 = vpack.c.b16 %v1162, %v1161
      %v1174 = vpack.c.b16 %v1164, %v1163
      %v1175 = vpack.c.b16 %v1166, %v1165
      %v1176 = vpack.c.b16 %v1168, %v1167
      %1185 = vmatprep.subr.bf16.mxu0 0
      %1186 = vmatpush1.bf16.msra.mxu0 %v1176
      %1187 = vmatprep.subr.bf16.mxu0 0
      %1188 = vmatpush1.bf16.msra.mxu0 %v1175
      %1189 = vmatprep.subr.bf16.mxu0 0
      %1190 = vmatpush1.bf16.msra.mxu0 %v1174
      %1191 = vmatprep.subr.bf16.mxu0 0
      %1192 = vmatpush1.bf16.msra.mxu0 %v1173
      %1193 = vmatprep.subr.bf16.mxu0 0
      %1194 = vmatpush1.bf16.msra.mxu0 %v1172
      %1195 = vmatprep.subr.bf16.mxu0 0
      %1196 = vmatpush1.bf16.msra.mxu0 %v1171
      %1197 = vmatprep.subr.bf16.mxu0 0
      %1198 = vmatpush1.bf16.msra.mxu0 %v1170
      %1199 = vmatprep.subr.bf16.mxu0 0
      %1200 = vmatpush1.bf16.msra.mxu0 %v1169
      %1201 = vmatprep.subr.bf16.mxu0 0
      %1202 = vmatpush2.bf16.msra.mxu0 0
      %1203 = vmatprep.subr.bf16.mxu0 0
      %1204 = vmatpush2.bf16.msra.mxu0 0
      %1205 = vmatprep.subr.bf16.mxu0 0
      %1206 = vmatpush2.bf16.msra.mxu0 0
      %1207 = vmatprep.subr.bf16.mxu0 0
      %1208 = vmatpush2.bf16.msra.mxu0 0
      %1209 = vmatprep.subr.bf16.mxu0 0
      %1210 = vmatpush2.bf16.msra.mxu0 0
      %1211 = vmatprep.subr.bf16.mxu0 0
      %1212 = vmatpush2.bf16.msra.mxu0 0
      %1213 = vmatprep.subr.bf16.mxu0 0
      %1214 = vmatpush2.bf16.msra.mxu0 0
      %1215 = vmatprep.subr.bf16.mxu0 0
      %1216 = vmatpush2.bf16.msra.mxu0 0
      %1217 = vmatprep.mubr.bf16.mxu0 0
      %1218 = vmatmul.mubr.bf16.gmra.mxu0 %v1116
      %v1219 = vpop.f32.mrf.mxu0
      %v1220 = vadd.f32 0.0, %v1219
      %v1221 = vpop.f32.mrf.mxu0
      %v1222 = vpop.f32.mrf.mxu0
      %v1223 = vadd.f32 0.0, %v1222
      %v1224 = vpop.f32.mrf.mxu0
      %1225 = vmatprep.mubr.bf16.mxu0 0
      %1226 = vmatmul.mubr.bf16.gmra.mxu0 %v1117
      %v1227 = vpop.f32.mrf.mxu0
      %v1228 = vadd.f32 0.0, %v1227
      %v1229 = vpop.f32.mrf.mxu0
      %v1230 = vpop.f32.mrf.mxu0
      %v1231 = vadd.f32 0.0, %v1230
      %v1232 = vpop.f32.mrf.mxu0
      %1233 = vmatprep.mubr.bf16.mxu0 0
      %1234 = vmatmul.mubr.bf16.gmra.mxu0 %v1118
      %v1235 = vpop.f32.mrf.mxu0
      %v1236 = vadd.f32 0.0, %v1235
      %v1237 = vpop.f32.mrf.mxu0
      %v1238 = vpop.f32.mrf.mxu0
      %v1239 = vadd.f32 0.0, %v1238
      %v1240 = vpop.f32.mrf.mxu0
      %1241 = vmatprep.mubr.bf16.mxu0 0
      %1242 = vmatmul.mubr.bf16.gmra.mxu0 %v1119
      %v1243 = vpop.f32.mrf.mxu0
      %v1244 = vadd.f32 0.0, %v1243
      %v1245 = vpop.f32.mrf.mxu0
      %v1246 = vpop.f32.mrf.mxu0
      %v1247 = vadd.f32 0.0, %v1246
      %v1248 = vpop.f32.mrf.mxu0
      %1249 = vdwg.mxu0
      %v1250 = vadd.f32 %v1099, %v1220
      %v1251 = vadd.f32 %v1100, %v1223
      %v1252 = vadd.f32 %v1101, %v1228
      %v1253 = vadd.f32 %v1102, %v1231
      %v1254 = vadd.f32 %v1103, %v1236
      %v1255 = vadd.f32 %v1104, %v1239
      %v1256 = vadd.f32 %v1105, %v1244
      %v1257 = vadd.f32 %v1106, %v1247
      %v1258 = vld [vmem:[%s1107 + $0x1] sm:$0xff]
      %v1259 = vld [vmem:[%s1107 + $0x11] sm:$0xff]
      %v1260 = vld [vmem:[%s1107 + $0x21] sm:$0xff]
      %v1261 = vld [vmem:[%s1107 + $0x31] sm:$0xff]
      %v1262 = vld [vmem:[%s1107 + $0x41] sm:$0xff]
      %v1263 = vld [vmem:[%s1107 + $0x51] sm:$0xff]
      %v1264 = vld [vmem:[%s1107 + $0x61] sm:$0xff]
      %v1265 = vld [vmem:[%s1107 + $0x71] sm:$0xff]
      %v1266 = vpack.c.bf16 %v1259, %v1258
      %v1267 = vpack.c.bf16 %v1261, %v1260
      %v1268 = vpack.c.bf16 %v1263, %v1262
      %v1269 = vpack.c.bf16 %v1265, %v1264
      %s1270 = scalar_lea.vmem %s210, 448
      %v1271 = vld [vmem:[%s1270] sm:$0xf]
      %v1272 = vld [vmem:[%s1270 + $0x4] sm:$0xf]
      %v1273 = vld [vmem:[%s1270 + $0x8] sm:$0xf]
      %v1274 = vld [vmem:[%s1270 + $0xc] sm:$0xf]
      %v1275 = vld [vmem:[%s1270 + $0x10] sm:$0xf]
      %v1276 = vld [vmem:[%s1270 + $0x14] sm:$0xf]
      %v1277 = vld [vmem:[%s1270 + $0x18] sm:$0xf]
      %v1278 = vld [vmem:[%s1270 + $0x1c] sm:$0xf]
      %v1279 = vld [vmem:[%s1270 + $0x20] sm:$0xf]
      %v1280 = vld [vmem:[%s1270 + $0x24] sm:$0xf]
      %v1281 = vld [vmem:[%s1270 + $0x28] sm:$0xf]
      %v1282 = vld [vmem:[%s1270 + $0x2c] sm:$0xf]
      %v1283 = vld [vmem:[%s1270 + $0x30] sm:$0xf]
      %v1284 = vld [vmem:[%s1270 + $0x34] sm:$0xf]
      %v1285 = vld [vmem:[%s1270 + $0x38] sm:$0xf]
      %v1286 = vld [vmem:[%s1270 + $0x3c] sm:$0xf]
      %v1303 = vunpack.c.l.b16 %v1271
      %v1304 = vunpack.c.l.b16 %v1272
      %v1305 = vunpack.c.l.b16 %v1273
      %v1306 = vunpack.c.l.b16 %v1274
      %v1307 = vunpack.c.l.b16 %v1275
      %v1308 = vunpack.c.l.b16 %v1276
      %v1309 = vunpack.c.l.b16 %v1277
      %v1310 = vunpack.c.l.b16 %v1278
      %v1311 = vunpack.c.l.b16 %v1279
      %v1312 = vunpack.c.l.b16 %v1280
      %v1313 = vunpack.c.l.b16 %v1281
      %v1314 = vunpack.c.l.b16 %v1282
      %v1315 = vunpack.c.l.b16 %v1283
      %v1316 = vunpack.c.l.b16 %v1284
      %v1317 = vunpack.c.l.b16 %v1285
      %v1318 = vunpack.c.l.b16 %v1286
      %v1319 = vpack.c.b16 %v1304, %v1303
      %v1320 = vpack.c.b16 %v1306, %v1305
      %v1321 = vpack.c.b16 %v1308, %v1307
      %v1322 = vpack.c.b16 %v1310, %v1309
      %v1323 = vpack.c.b16 %v1312, %v1311
      %v1324 = vpack.c.b16 %v1314, %v1313
      %v1325 = vpack.c.b16 %v1316, %v1315
      %v1326 = vpack.c.b16 %v1318, %v1317
      %1335 = vmatprep.subr.bf16.mxu0 0
      %1336 = vmatpush1.bf16.msra.mxu0 %v1326
      %1337 = vmatprep.subr.bf16.mxu0 0
      %1338 = vmatpush1.bf16.msra.mxu0 %v1325
      %1339 = vmatprep.subr.bf16.mxu0 0
      %1340 = vmatpush1.bf16.msra.mxu0 %v1324
      %1341 = vmatprep.subr.bf16.mxu0 0
      %1342 = vmatpush1.bf16.msra.mxu0 %v1323
      %1343 = vmatprep.subr.bf16.mxu0 0
      %1344 = vmatpush1.bf16.msra.mxu0 %v1322
      %1345 = vmatprep.subr.bf16.mxu0 0
      %1346 = vmatpush1.bf16.msra.mxu0 %v1321
      %1347 = vmatprep.subr.bf16.mxu0 0
      %1348 = vmatpush1.bf16.msra.mxu0 %v1320
      %1349 = vmatprep.subr.bf16.mxu0 0
      %1350 = vmatpush1.bf16.msra.mxu0 %v1319
      %1351 = vmatprep.subr.bf16.mxu0 0
      %1352 = vmatpush2.bf16.msra.mxu0 0
      %1353 = vmatprep.subr.bf16.mxu0 0
      %1354 = vmatpush2.bf16.msra.mxu0 0
      %1355 = vmatprep.subr.bf16.mxu0 0
      %1356 = vmatpush2.bf16.msra.mxu0 0
      %1357 = vmatprep.subr.bf16.mxu0 0
      %1358 = vmatpush2.bf16.msra.mxu0 0
      %1359 = vmatprep.subr.bf16.mxu0 0
      %1360 = vmatpush2.bf16.msra.mxu0 0
      %1361 = vmatprep.subr.bf16.mxu0 0
      %1362 = vmatpush2.bf16.msra.mxu0 0
      %1363 = vmatprep.subr.bf16.mxu0 0
      %1364 = vmatpush2.bf16.msra.mxu0 0
      %1365 = vmatprep.subr.bf16.mxu0 0
      %1366 = vmatpush2.bf16.msra.mxu0 0
      %1367 = vmatprep.mubr.bf16.mxu0 0
      %1368 = vmatmul.mubr.bf16.gmra.mxu0 %v1266
      %v1369 = vpop.f32.mrf.mxu0
      %v1370 = vadd.f32 0.0, %v1369
      %v1371 = vpop.f32.mrf.mxu0
      %v1372 = vpop.f32.mrf.mxu0
      %v1373 = vadd.f32 0.0, %v1372
      %v1374 = vpop.f32.mrf.mxu0
      %1375 = vmatprep.mubr.bf16.mxu0 0
      %1376 = vmatmul.mubr.bf16.gmra.mxu0 %v1267
      %v1377 = vpop.f32.mrf.mxu0
      %v1378 = vadd.f32 0.0, %v1377
      %v1379 = vpop.f32.mrf.mxu0
      %v1380 = vpop.f32.mrf.mxu0
      %v1381 = vadd.f32 0.0, %v1380
      %v1382 = vpop.f32.mrf.mxu0
      %1383 = vmatprep.mubr.bf16.mxu0 0
      %1384 = vmatmul.mubr.bf16.gmra.mxu0 %v1268
      %v1385 = vpop.f32.mrf.mxu0
      %v1386 = vadd.f32 0.0, %v1385
      %v1387 = vpop.f32.mrf.mxu0
      %v1388 = vpop.f32.mrf.mxu0
      %v1389 = vadd.f32 0.0, %v1388
      %v1390 = vpop.f32.mrf.mxu0
      %1391 = vmatprep.mubr.bf16.mxu0 0
      %1392 = vmatmul.mubr.bf16.gmra.mxu0 %v1269
      %v1393 = vpop.f32.mrf.mxu0
      %v1394 = vadd.f32 0.0, %v1393
      %v1395 = vpop.f32.mrf.mxu0
      %v1396 = vpop.f32.mrf.mxu0
      %v1397 = vadd.f32 0.0, %v1396
      %v1398 = vpop.f32.mrf.mxu0
      %1399 = vdwg.mxu0
      %v1400 = vadd.f32 %v1250, %v1370
      %v1401 = vadd.f32 %v1251, %v1373
      %v1402 = vadd.f32 %v1252, %v1378
      %v1403 = vadd.f32 %v1253, %v1381
      %v1404 = vadd.f32 %v1254, %v1386
      %v1405 = vadd.f32 %v1255, %v1389
      %v1406 = vadd.f32 %v1256, %v1394
      %v1407 = vadd.f32 %v1257, %v1397
      %v1408 = vld [vmem:[%s1107 + $0x2] sm:$0xff]
      %v1409 = vld [vmem:[%s1107 + $0x12] sm:$0xff]
      %v1410 = vld [vmem:[%s1107 + $0x22] sm:$0xff]
      %v1411 = vld [vmem:[%s1107 + $0x32] sm:$0xff]
      %v1412 = vld [vmem:[%s1107 + $0x42] sm:$0xff]
      %v1413 = vld [vmem:[%s1107 + $0x52] sm:$0xff]
      %v1414 = vld [vmem:[%s1107 + $0x62] sm:$0xff]
      %v1415 = vld [vmem:[%s1107 + $0x72] sm:$0xff]
      %v1416 = vpack.c.bf16 %v1409, %v1408
      %v1417 = vpack.c.bf16 %v1411, %v1410
      %v1418 = vpack.c.bf16 %v1413, %v1412
      %v1419 = vpack.c.bf16 %v1415, %v1414
      %s1420 = scalar_lea.vmem %s210, 512
      %v1421 = vld [vmem:[%s1420] sm:$0xf]
      %v1422 = vld [vmem:[%s1420 + $0x4] sm:$0xf]
      %v1423 = vld [vmem:[%s1420 + $0x8] sm:$0xf]
      %v1424 = vld [vmem:[%s1420 + $0xc] sm:$0xf]
      %v1425 = vld [vmem:[%s1420 + $0x10] sm:$0xf]
      %v1426 = vld [vmem:[%s1420 + $0x14] sm:$0xf]
      %v1427 = vld [vmem:[%s1420 + $0x18] sm:$0xf]
      %v1428 = vld [vmem:[%s1420 + $0x1c] sm:$0xf]
      %v1429 = vld [vmem:[%s1420 + $0x20] sm:$0xf]
      %v1430 = vld [vmem:[%s1420 + $0x24] sm:$0xf]
      %v1431 = vld [vmem:[%s1420 + $0x28] sm:$0xf]
      %v1432 = vld [vmem:[%s1420 + $0x2c] sm:$0xf]
      %v1433 = vld [vmem:[%s1420 + $0x30] sm:$0xf]
      %v1434 = vld [vmem:[%s1420 + $0x34] sm:$0xf]
      %v1435 = vld [vmem:[%s1420 + $0x38] sm:$0xf]
      %v1436 = vld [vmem:[%s1420 + $0x3c] sm:$0xf]
      %v1453 = vunpack.c.l.b16 %v1421
      %v1454 = vunpack.c.l.b16 %v1422
      %v1455 = vunpack.c.l.b16 %v1423
      %v1456 = vunpack.c.l.b16 %v1424
      %v1457 = vunpack.c.l.b16 %v1425
      %v1458 = vunpack.c.l.b16 %v1426
      %v1459 = vunpack.c.l.b16 %v1427
      %v1460 = vunpack.c.l.b16 %v1428
      %v1461 = vunpack.c.l.b16 %v1429
      %v1462 = vunpack.c.l.b16 %v1430
      %v1463 = vunpack.c.l.b16 %v1431
      %v1464 = vunpack.c.l.b16 %v1432
      %v1465 = vunpack.c.l.b16 %v1433
      %v1466 = vunpack.c.l.b16 %v1434
      %v1467 = vunpack.c.l.b16 %v1435
      %v1468 = vunpack.c.l.b16 %v1436
      %v1469 = vpack.c.b16 %v1454, %v1453
      %v1470 = vpack.c.b16 %v1456, %v1455
      %v1471 = vpack.c.b16 %v1458, %v1457
      %v1472 = vpack.c.b16 %v1460, %v1459
      %v1473 = vpack.c.b16 %v1462, %v1461
      %v1474 = vpack.c.b16 %v1464, %v1463
      %v1475 = vpack.c.b16 %v1466, %v1465
      %v1476 = vpack.c.b16 %v1468, %v1467
      %1485 = vmatprep.subr.bf16.mxu0 0
      %1486 = vmatpush1.bf16.msra.mxu0 %v1476
      %1487 = vmatprep.subr.bf16.mxu0 0
      %1488 = vmatpush1.bf16.msra.mxu0 %v1475
      %1489 = vmatprep.subr.bf16.mxu0 0
      %1490 = vmatpush1.bf16.msra.mxu0 %v1474
      %1491 = vmatprep.subr.bf16.mxu0 0
      %1492 = vmatpush1.bf16.msra.mxu0 %v1473
      %1493 = vmatprep.subr.bf16.mxu0 0
      %1494 = vmatpush1.bf16.msra.mxu0 %v1472
      %1495 = vmatprep.subr.bf16.mxu0 0
      %1496 = vmatpush1.bf16.msra.mxu0 %v1471
      %1497 = vmatprep.subr.bf16.mxu0 0
      %1498 = vmatpush1.bf16.msra.mxu0 %v1470
      %1499 = vmatprep.subr.bf16.mxu0 0
      %1500 = vmatpush1.bf16.msra.mxu0 %v1469
      %1501 = vmatprep.subr.bf16.mxu0 0
      %1502 = vmatpush2.bf16.msra.mxu0 0
      %1503 = vmatprep.subr.bf16.mxu0 0
      %1504 = vmatpush2.bf16.msra.mxu0 0
      %1505 = vmatprep.subr.bf16.mxu0 0
      %1506 = vmatpush2.bf16.msra.mxu0 0
      %1507 = vmatprep.subr.bf16.mxu0 0
      %1508 = vmatpush2.bf16.msra.mxu0 0
      %1509 = vmatprep.subr.bf16.mxu0 0
      %1510 = vmatpush2.bf16.msra.mxu0 0
      %1511 = vmatprep.subr.bf16.mxu0 0
      %1512 = vmatpush2.bf16.msra.mxu0 0
      %1513 = vmatprep.subr.bf16.mxu0 0
      %1514 = vmatpush2.bf16.msra.mxu0 0
      %1515 = vmatprep.subr.bf16.mxu0 0
      %1516 = vmatpush2.bf16.msra.mxu0 0
      %1517 = vmatprep.mubr.bf16.mxu0 0
      %1518 = vmatmul.mubr.bf16.gmra.mxu0 %v1416
      %v1519 = vpop.f32.mrf.mxu0
      %v1520 = vadd.f32 0.0, %v1519
      %v1521 = vpop.f32.mrf.mxu0
      %v1522 = vpop.f32.mrf.mxu0
      %v1523 = vadd.f32 0.0, %v1522
      %v1524 = vpop.f32.mrf.mxu0
      %1525 = vmatprep.mubr.bf16.mxu0 0
      %1526 = vmatmul.mubr.bf16.gmra.mxu0 %v1417
      %v1527 = vpop.f32.mrf.mxu0
      %v1528 = vadd.f32 0.0, %v1527
      %v1529 = vpop.f32.mrf.mxu0
      %v1530 = vpop.f32.mrf.mxu0
      %v1531 = vadd.f32 0.0, %v1530
      %v1532 = vpop.f32.mrf.mxu0
      %1533 = vmatprep.mubr.bf16.mxu0 0
      %1534 = vmatmul.mubr.bf16.gmra.mxu0 %v1418
      %v1535 = vpop.f32.mrf.mxu0
      %v1536 = vadd.f32 0.0, %v1535
      %v1537 = vpop.f32.mrf.mxu0
      %v1538 = vpop.f32.mrf.mxu0
      %v1539 = vadd.f32 0.0, %v1538
      %v1540 = vpop.f32.mrf.mxu0
      %1541 = vmatprep.mubr.bf16.mxu0 0
      %1542 = vmatmul.mubr.bf16.gmra.mxu0 %v1419
      %v1543 = vpop.f32.mrf.mxu0
      %v1544 = vadd.f32 0.0, %v1543
      %v1545 = vpop.f32.mrf.mxu0
      %v1546 = vpop.f32.mrf.mxu0
      %v1547 = vadd.f32 0.0, %v1546
      %v1548 = vpop.f32.mrf.mxu0
      %1549 = vdwg.mxu0
      %v1550 = vadd.f32 %v1400, %v1520
      %v1551 = vadd.f32 %v1401, %v1523
      %v1552 = vadd.f32 %v1402, %v1528
      %v1553 = vadd.f32 %v1403, %v1531
      %v1554 = vadd.f32 %v1404, %v1536
      %v1555 = vadd.f32 %v1405, %v1539
      %v1556 = vadd.f32 %v1406, %v1544
      %v1557 = vadd.f32 %v1407, %v1547
      %v1558 = vld [vmem:[%s213] sm:$0x1]
      %v1560 = vlaneseq
      %v1561 = vshrl.u32 %v1560, 7
      %v1562 = vsub.s32 0, %v1561
      %v1563 = vrot.slane %v1558, %v1562
      %v1565 = vadd.f32 %v1550, %v1563
      %v1566 = vadd.f32 %v1551, %v1563
      %v1567 = vadd.f32 %v1552, %v1563
      %v1568 = vadd.f32 %v1553, %v1563
      %v1569 = vadd.f32 %v1554, %v1563
      %v1570 = vadd.f32 %v1555, %v1563
      %v1571 = vadd.f32 %v1556, %v1563
      %v1572 = vadd.f32 %v1557, %v1563
      %v1573 = vmax.f32 %v1565, 0.0
      %v1574 = vmax.f32 %v1566, 0.0
      %v1575 = vmax.f32 %v1567, 0.0
      %v1576 = vmax.f32 %v1568, 0.0
      %v1577 = vmax.f32 %v1569, 0.0
      %v1578 = vmax.f32 %v1570, 0.0
      %v1579 = vmax.f32 %v1571, 0.0
      %v1580 = vmax.f32 %v1572, 0.0
      %1581 = vst [vmem:[%s221] sm:$0xff] %v1573
      %1582 = vst [vmem:[%s221 + $0x8] sm:$0xff] %v1574
      %1583 = vst [vmem:[%s221 + $0x10] sm:$0xff] %v1575
      %1584 = vst [vmem:[%s221 + $0x18] sm:$0xff] %v1576
      %1585 = vst [vmem:[%s221 + $0x20] sm:$0xff] %v1577
      %1586 = vst [vmem:[%s221 + $0x28] sm:$0xff] %v1578
      %1587 = vst [vmem:[%s221 + $0x30] sm:$0xff] %v1579
      %1588 = vst [vmem:[%s221 + $0x38] sm:$0xff] %v1580
      %p1589 = scmp.lt.s32.totalorder %s18, 1
      %s1590 = scalar_select %p1589, %s18, 1
      %p1591 = scmp.lt.s32.totalorder %s19, 0
      %s1592 = scalar_select %p1591, %s19, 0
      %s1593 = smul.addr %s1590, 8
      %s1594 = sadd.s32 %s1592, %s1593
      %s1595 = smul.addr %s1594, 8
      %s1596 = scalar_lea.vmem %s3, %s1595
      // Predicated region
      $region33: #{run.6} parent=31 // pred_check
        %p1597 = pneg %p124
      $region34: #{run.6} parent=31 // pred_check_branch
        %1599 = sbr.rel (%p1597) target = $region36
      $region35: #{run.6} parent=31 // pred_region
        _
      $region36: #{run.6} parent=31 // pred_fallthru
        _
    $region32: #{run.6} parent=5 // pred_fallthru
      _
    %p1600 = scmp.le.s32.totalorder 2, %s9
    // Predicated region
    $region37: #{run.6} parent=5 // pred_check
      %p1601 = pneg %p1600
    $region38: #{run.6} parent=5 // pred_check_branch
      %1603 = sbr.rel (%p1601) target = $region40
    $region39: #{run.6} parent=5 // pred_region
      %s1604 = ssub.s32 %s9, 2
      // Predicated region
      $region41: #{run.6} parent=39 // pred_check
        %p1605 = pneg %p130
      $region42: #{run.6} parent=39 // pred_check_branch
        %1607 = sbr.rel (%p1605) target = $region44
      $region43: #{run.6} parent=39 // pred_region
        %p1608 = scmp.lt.s32.totalorder %s20, 1
        %s1609 = scalar_select %p1608, %s20, 1
        %p1610 = scmp.lt.s32.totalorder %s21, 0
        %s1611 = scalar_select %p1610, %s21, 0
        %s1612 = smul.addr %s1609, 8
        %s1613 = sadd.s32 %s1611, %s1612
        %s1614 = smul.addr %s1613, 8
        %s1615 = scalar_lea.vmem %s3, %s1614
      $region44: #{run.6} parent=39 // pred_fallthru
        _
    $region40: #{run.6} parent=5 // pred_fallthru
      _
  $region6: #{run.6} parent=0 // loop_footer
    %s13 = sadd.s32 1, %s9
  $region7: #{run.6} parent=0 // loop_footer_branch
    %8 = sbr.rel target = $region3
  $region8: #{run.6} parent=0 // loop_exit
    _

// kernel: run.7
$region0: #{run.7}
  #allocation0 [shape = 'u32[]', space=smem, size = 0x4, offset = 0x4, fixed_abs, tag = 'smem constant byte address 0x4 - core index']
  #allocation1 [shape = 'u32[144,128]{1,0:T(1,128)}', space=vmem, size = 0x12000, scoped, tag = 'internal scratch']
  %s0 = inlined_call_operand.vmem [shape: f32[2,10,10,128], index: 0, kind: input, shape index: {}]
  %s1 = inlined_call_operand.vmem [shape: bf16[9,128,128], index: 1, kind: input, shape index: {}]
  %s2 = inlined_call_operand.vmem [shape: f32[1,128], index: 2, kind: input, shape index: {}]
  %s3 = inlined_call_operand.vmem [shape: f32[2,8,8,128], index: 3, kind: input, shape index: {}]
  %s4 = inlined_call_operand.vmem [shape: f32[2,8,8,128], index: 4, kind: output, shape index: {}]
  %s5 = sld [smem:[#allocation0]]
  $region49: #{run.7} parent=0
    _
  %s7 = ssub.s32 1, %s5
  %s8 = scalar_select 0, %s7, %s5
  loop: start=0, step=1, limit=4
  $region2: #{run.7} parent=0 // loop_pre_header
    _
  $region3: #{run.7} parent=0 // loop_header
    %s10 = sphi 0, %s14
    %p11 = scmp.ge.s32.totalorder %s10, 4
    %s17 = sphi 0, %s29
    %s18 = sphi 0, %s25
    %s19 = sphi 0, %s17
    %s20 = sphi 0, %s18
    %s21 = sphi 0, %s19
    %s22 = sphi 0, %s20
    %s32 = sphi 0, %s34
    %s35 = sphi 0, %s32
    %s36 = sphi 0, %s35
    %s52 = sphi 0, %s36
    %s58 = sphi 0, %s60
    %s61 = sphi 0, %s58
    %s62 = sphi 0, %s61
    %s78 = sphi 0, %s62
    %s84 = sphi 0, %s86
    %s87 = sphi 0, %s84
    %s88 = sphi 0, %s87
    %s104 = sphi 0, %s88
    %s112 = sphi 0, %s114
    %s115 = sphi 0, %s112
    %s116 = sphi 0, %s115
    %s132 = sphi 0, %s116
    %s140 = sphi 0, %s142
    %s143 = sphi 0, %s140
    %s144 = sphi 0, %s143
    %s160 = sphi 0, %s144
  $region4: #{run.7} parent=0 // loop_header_branch
    %13 = sbr.rel (%p11) target = $region8
  $region5: #{run.7} parent=0 // loop_body
    %s15 = ssub.s32 %s10, 1
    %s16 = ssub.s32 %s10, 2
    %s23 = sadd.s32 1, %s18
    %p24 = scmp.ge.s32.totalorder %s23, 1
    %s25 = scalar_select %p24, 0, %s23
    %s26 = sadd.s32 1, %s17
    %s27 = scalar_select %p24, %s26, %s17
    %p28 = scmp.ge.s32.totalorder %s27, 2
    %s29 = scalar_select %p28, 0, %s27
    %s30 = ssub.s32 %s17, %s29
    %p31 = scmp.eq.s32.totalorder %s30, 0
    %s33 = sadd.s32 %s32, 1
    %s34 = scalar_select %p31, %s32, %s33
    %p37 = pneg %p31
    %p38 = scmp.eq.s32.totalorder %s10, 1
    %p39 = por %p37, %p38
    %p40 = scmp.ne.s32.totalorder %s32, %s35
    %p41 = scmp.eq.s32.totalorder %s10, 0
    %p42 = por %p40, %p41
    %p43 = scmp.ne.s32.totalorder %s32, %s35
    %p44 = scmp.eq.s32.totalorder %s15, 1
    %p45 = por %p43, %p44
    %p46 = scmp.ne.s32.totalorder %s35, %s36
    %p47 = scmp.eq.s32.totalorder %s15, 0
    %p48 = por %p46, %p47
    %p49 = scmp.ne.s32.totalorder %s35, %s36
    %p50 = scmp.eq.s32.totalorder %s16, 1
    %p51 = por %p49, %p50
    %p53 = scmp.ne.s32.totalorder %s36, %s52
    %p54 = scmp.eq.s32.totalorder %s16, 0
    %p55 = por %p53, %p54
    %s56 = ssub.s32 %s18, %s25
    %p57 = scmp.eq.s32.totalorder %s56, 0
    %s59 = sadd.s32 %s58, 1
    %s60 = scalar_select %p57, %s58, %s59
    %p63 = pneg %p57
    %p64 = scmp.eq.s32.totalorder %s10, 1
    %p65 = por %p63, %p64
    %p66 = scmp.ne.s32.totalorder %s58, %s61
    %p67 = scmp.eq.s32.totalorder %s10, 0
    %p68 = por %p66, %p67
    %p69 = scmp.ne.s32.totalorder %s58, %s61
    %p70 = scmp.eq.s32.totalorder %s15, 1
    %p71 = por %p69, %p70
    %p72 = scmp.ne.s32.totalorder %s61, %s62
    %p73 = scmp.eq.s32.totalorder %s15, 0
    %p74 = por %p72, %p73
    %p75 = scmp.ne.s32.totalorder %s61, %s62
    %p76 = scmp.eq.s32.totalorder %s16, 1
    %p77 = por %p75, %p76
    %p79 = scmp.ne.s32.totalorder %s62, %s78
    %p80 = scmp.eq.s32.totalorder %s16, 0
    %p81 = por %p79, %p80
    %s82 = ssub.s32 %s18, %s25
    %p83 = scmp.eq.s32.totalorder %s82, 0
    %s85 = sadd.s32 %s84, 1
    %s86 = scalar_select %p83, %s84, %s85
    %p89 = pneg %p83
    %p90 = scmp.eq.s32.totalorder %s10, 1
    %p91 = por %p89, %p90
    %p92 = scmp.ne.s32.totalorder %s84, %s87
    %p93 = scmp.eq.s32.totalorder %s10, 0
    %p94 = por %p92, %p93
    %p95 = scmp.ne.s32.totalorder %s84, %s87
    %p96 = scmp.eq.s32.totalorder %s15, 1
    %p97 = por %p95, %p96
    %p98 = scmp.ne.s32.totalorder %s87, %s88
    %p99 = scmp.eq.s32.totalorder %s15, 0
    %p100 = por %p98, %p99
    %p101 = scmp.ne.s32.totalorder %s87, %s88
    %p102 = scmp.eq.s32.totalorder %s16, 1
    %p103 = por %p101, %p102
    %p105 = scmp.ne.s32.totalorder %s88, %s104
    %p106 = scmp.eq.s32.totalorder %s16, 0
    %p107 = por %p105, %p106
    %s108 = ssub.s32 %s17, %s29
    %s109 = ssub.s32 %s18, %s25
    %s110 = sor.u32 %s108, %s109
    %p111 = scmp.eq.s32.totalorder %s110, 0
    %s113 = sadd.s32 %s112, 1
    %s114 = scalar_select %p111, %s112, %s113
    %p117 = pneg %p111
    %p118 = scmp.eq.s32.totalorder %s10, 1
    %p119 = por %p117, %p118
    %p120 = scmp.ne.s32.totalorder %s112, %s115
    %p121 = scmp.eq.s32.totalorder %s10, 0
    %p122 = por %p120, %p121
    %p123 = scmp.ne.s32.totalorder %s112, %s115
    %p124 = scmp.eq.s32.totalorder %s15, 1
    %p125 = por %p123, %p124
    %p126 = scmp.ne.s32.totalorder %s115, %s116
    %p127 = scmp.eq.s32.totalorder %s15, 0
    %p128 = por %p126, %p127
    %p129 = scmp.ne.s32.totalorder %s115, %s116
    %p130 = scmp.eq.s32.totalorder %s16, 1
    %p131 = por %p129, %p130
    %p133 = scmp.ne.s32.totalorder %s116, %s132
    %p134 = scmp.eq.s32.totalorder %s16, 0
    %p135 = por %p133, %p134
    %s136 = ssub.s32 %s17, %s29
    %s137 = ssub.s32 %s18, %s25
    %s138 = sor.u32 %s136, %s137
    %p139 = scmp.eq.s32.totalorder %s138, 0
    %s141 = sadd.s32 %s140, 1
    %s142 = scalar_select %p139, %s140, %s141
    %p145 = pneg %p139
    %p146 = scmp.eq.s32.totalorder %s10, 1
    %p147 = por %p145, %p146
    %p148 = scmp.ne.s32.totalorder %s140, %s143
    %p149 = scmp.eq.s32.totalorder %s10, 0
    %p150 = por %p148, %p149
    %p151 = scmp.ne.s32.totalorder %s140, %s143
    %p152 = scmp.eq.s32.totalorder %s15, 1
    %p153 = por %p151, %p152
    %p154 = scmp.ne.s32.totalorder %s143, %s144
    %p155 = scmp.eq.s32.totalorder %s15, 0
    %p156 = por %p154, %p155
    %p157 = scmp.ne.s32.totalorder %s143, %s144
    %p158 = scmp.eq.s32.totalorder %s16, 1
    %p159 = por %p157, %p158
    %p161 = scmp.ne.s32.totalorder %s144, %s160
    %p162 = scmp.eq.s32.totalorder %s16, 0
    %p163 = por %p161, %p162
    %p164 = scmp.le.s32.totalorder 1, %s10
    %p165 = scmp.lt.s32.totalorder %s10, 3
    %p166 = pnand %p164, %p165
    %p167 = pneg %p166
    // Predicated region
    $region9: #{run.7} parent=5 // pred_check
      _
    $region10: #{run.7} parent=5 // pred_check_branch
      %169 = sbr.rel (%p166) target = $region12
    $region11: #{run.7} parent=5 // pred_region
      %s170 = ssub.s32 %s10, 1
      // Predicated region
      $region13: #{run.7} parent=11 // pred_check
        %p171 = pneg %p74
      $region14: #{run.7} parent=11 // pred_check_branch
        %173 = sbr.rel (%p171) target = $region16
      $region15: #{run.7} parent=11 // pred_region
        %p174 = scmp.lt.s32.totalorder %s20, 0
        %s175 = scalar_select %p174, %s20, 0
        %s176 = smul.addr %s175, 4
        %s177 = scalar_lea.vmem %s1, %s176
      $region16: #{run.7} parent=11 // pred_fallthru
        _
      // Predicated region
      $region17: #{run.7} parent=11 // pred_check
        %p178 = pneg %p100
      $region18: #{run.7} parent=11 // pred_check_branch
        %180 = sbr.rel (%p178) target = $region20
      $region19: #{run.7} parent=11 // pred_region
        %p181 = scmp.lt.s32.totalorder %s20, 0
        %s182 = scalar_select %p181, %s20, 0
        %s183 = scalar_lea.vmem %s2, %s182
      $region20: #{run.7} parent=11 // pred_fallthru
        _
    $region12: #{run.7} parent=5 // pred_fallthru
      _
    %p184 = scmp.lt.s32.totalorder %s10, 2
    // Predicated region
    $region21: #{run.7} parent=5 // pred_check
      %p185 = pneg %p184
    $region22: #{run.7} parent=5 // pred_check_branch
      %187 = sbr.rel (%p185) target = $region24
    $region23: #{run.7} parent=5 // pred_region
      // Predicated region
      $region25: #{run.7} parent=23 // pred_check
        %p188 = pneg %p42
      $region26: #{run.7} parent=23 // pred_check_branch
        %190 = sbr.rel (%p188) target = $region28
      $region27: #{run.7} parent=23 // pred_region
        %p191 = scmp.lt.s32.totalorder %s17, 1
        %s192 = scalar_select %p191, %s17, 1
        %s193 = smul.addr %s192, 20
        %s194 = smul.addr %s193, 8
        %s195 = scalar_lea.vmem %s0, %s194
      $region28: #{run.7} parent=23 // pred_fallthru
        _
      // Predicated region
      $region29: #{run.7} parent=23 // pred_check
        %p196 = pneg %p122
      $region30: #{run.7} parent=23 // pred_check_branch
        %198 = sbr.rel (%p196) target = $region32
      $region31: #{run.7} parent=23 // pred_region
        %p199 = scmp.lt.s32.totalorder %s17, 1
        %s200 = scalar_select %p199, %s17, 1
        %p201 = scmp.lt.s32.totalorder %s18, 0
        %s202 = scalar_select %p201, %s18, 0
        %s203 = smul.addr %s200, 8
        %s204 = sadd.s32 %s202, %s203
        %s205 = smul.addr %s204, 8
        %s206 = scalar_lea.vmem %s3, %s205
      $region32: #{run.7} parent=23 // pred_fallthru
        _
    $region24: #{run.7} parent=5 // pred_fallthru
      _
    %p207 = scmp.le.s32.totalorder 1, %s10
    %p208 = scmp.lt.s32.totalorder %s10, 3
    %p209 = pnand %p207, %p208
    %p210 = pneg %p209
    // Predicated region
    $region33: #{run.7} parent=5 // pred_check
      _
    $region34: #{run.7} parent=5 // pred_check_branch
      %212 = sbr.rel (%p209) target = $region36
    $region35: #{run.7} parent=5 // pred_region
      %s213 = ssub.s32 %s10, 1
      %p214 = scmp.lt.s32.totalorder %s19, 1
      %s215 = scalar_select %p214, %s19, 1
      %s216 = smul.addr %s215, 20
      %s217 = smul.addr %s216, 8
      %s218 = scalar_lea.vmem %s0, %s217
      %p219 = pneg %p48
      %p220 = pneg %p45
      %p221 = scmp.lt.s32.totalorder %s20, 0
      %s222 = scalar_select %p221, %s20, 0
      %s223 = smul.addr %s222, 4
      %s224 = scalar_lea.vmem %s1, %s223
      %p225 = pneg %p74
      %p226 = pneg %p71
      %p227 = scmp.lt.s32.totalorder %s20, 0
      %s228 = scalar_select %p227, %s20, 0
      %s229 = scalar_lea.vmem %s2, %s228
      %p230 = pneg %p100
      %p231 = pneg %p97
      %p232 = scmp.lt.s32.totalorder %s19, 1
      %s233 = scalar_select %p232, %s19, 1
      %p234 = scmp.lt.s32.totalorder %s20, 0
      %s235 = scalar_select %p234, %s20, 0
      %s236 = smul.addr %s233, 8
      %s237 = sadd.s32 %s235, %s236
      %s238 = smul.addr %s237, 8
      %s239 = scalar_lea.vmem %s3, %s238
      %p240 = pneg %p128
      %p241 = pneg %p125
      %p242 = pneg %p156
      %p243 = pneg %p153
      %p244 = scmp.lt.s32.totalorder %s19, 1
      %s245 = scalar_select %p244, %s19, 1
      %p246 = scmp.lt.s32.totalorder %s20, 0
      %s247 = scalar_select %p246, %s20, 0
      %s248 = smul.addr %s245, 8
      %s249 = sadd.s32 %s247, %s248
      %s250 = smul.addr %s249, 8
      %s251 = scalar_lea.vmem %s4, %s250
      %p252 = scmp.lt.s32.totalorder %s19, 1
      %s253 = scalar_select %p252, %s19, 1
      %s254 = smul.addr %s253, 20
      %s255 = smul.addr %s254, 8
      %s256 = scalar_lea.vmem %s0, %s255
      %p257 = scmp.lt.s32.totalorder %s20, 0
      %s258 = scalar_select %p257, %s20, 0
      %s259 = smul.addr %s258, 4
      %s260 = scalar_lea.vmem %s1, %s259
      %p261 = scmp.lt.s32.totalorder %s20, 0
      %s262 = scalar_select %p261, %s20, 0
      %s263 = scalar_lea.vmem %s2, %s262
      %p264 = scmp.lt.s32.totalorder %s19, 1
      %s265 = scalar_select %p264, %s19, 1
      %p266 = scmp.lt.s32.totalorder %s20, 0
      %s267 = scalar_select %p266, %s20, 0
      %s268 = smul.addr %s265, 8
      %s269 = sadd.s32 %s267, %s268
      %s270 = smul.addr %s269, 8
      %s271 = scalar_lea.vmem %s3, %s270
      %p272 = scmp.lt.s32.totalorder %s19, 1
      %s273 = scalar_select %p272, %s19, 1
      %p274 = scmp.lt.s32.totalorder %s20, 0
      %s275 = scalar_select %p274, %s20, 0
      %s276 = smul.addr %s273, 8
      %s277 = sadd.s32 %s275, %s276
      %s278 = smul.addr %s277, 8
      %s279 = scalar_lea.vmem %s4, %s278
      %v281 = vld [vmem:[%s256] sm:$0xff]
      %v282 = vld [vmem:[%s256 + $0x10] sm:$0xff]
      %v283 = vld [vmem:[%s256 + $0x20] sm:$0xff]
      %v284 = vld [vmem:[%s256 + $0x30] sm:$0xff]
      %v285 = vld [vmem:[%s256 + $0x40] sm:$0xff]
      %v286 = vld [vmem:[%s256 + $0x50] sm:$0xff]
      %v287 = vld [vmem:[%s256 + $0x60] sm:$0xff]
      %v288 = vld [vmem:[%s256 + $0x70] sm:$0xff]
      %v289 = vpack.c.bf16 %v282, %v281
      %v290 = vpack.c.bf16 %v284, %v283
      %v291 = vpack.c.bf16 %v286, %v285
      %v292 = vpack.c.bf16 %v288, %v287
      %v293 = vld [vmem:[%s260] sm:$0xf]
      %v294 = vld [vmem:[%s260 + $0x4] sm:$0xf]
      %v295 = vld [vmem:[%s260 + $0x8] sm:$0xf]
      %v296 = vld [vmem:[%s260 + $0xc] sm:$0xf]
      %v297 = vld [vmem:[%s260 + $0x10] sm:$0xf]
      %v298 = vld [vmem:[%s260 + $0x14] sm:$0xf]
      %v299 = vld [vmem:[%s260 + $0x18] sm:$0xf]
      %v300 = vld [vmem:[%s260 + $0x1c] sm:$0xf]
      %v301 = vld [vmem:[%s260 + $0x20] sm:$0xf]
      %v302 = vld [vmem:[%s260 + $0x24] sm:$0xf]
      %v303 = vld [vmem:[%s260 + $0x28] sm:$0xf]
      %v304 = vld [vmem:[%s260 + $0x2c] sm:$0xf]
      %v305 = vld [vmem:[%s260 + $0x30] sm:$0xf]
      %v306 = vld [vmem:[%s260 + $0x34] sm:$0xf]
      %v307 = vld [vmem:[%s260 + $0x38] sm:$0xf]
      %v308 = vld [vmem:[%s260 + $0x3c] sm:$0xf]
      %v309 = vld [vmem:[%s256 + $0x1] sm:$0xff]
      %v310 = vld [vmem:[%s256 + $0x11] sm:$0xff]
      %v311 = vld [vmem:[%s256 + $0x21] sm:$0xff]
      %v312 = vld [vmem:[%s256 + $0x31] sm:$0xff]
      %v313 = vld [vmem:[%s256 + $0x41] sm:$0xff]
      %v314 = vld [vmem:[%s256 + $0x51] sm:$0xff]
      %v315 = vld [vmem:[%s256 + $0x61] sm:$0xff]
      %v316 = vld [vmem:[%s256 + $0x71] sm:$0xff]
      %v317 = vpack.c.bf16 %v310, %v309
      %v318 = vpack.c.bf16 %v312, %v311
      %v319 = vpack.c.bf16 %v314, %v313
      %v320 = vpack.c.bf16 %v316, %v315
      %s321 = scalar_lea.vmem %s260, 64
      %v322 = vld [vmem:[%s321] sm:$0xf]
      %v323 = vld [vmem:[%s321 + $0x4] sm:$0xf]
      %v324 = vld [vmem:[%s321 + $0x8] sm:$0xf]
      %v325 = vld [vmem:[%s321 + $0xc] sm:$0xf]
      %v326 = vld [vmem:[%s321 + $0x10] sm:$0xf]
      %v327 = vld [vmem:[%s321 + $0x14] sm:$0xf]
      %v328 = vld [vmem:[%s321 + $0x18] sm:$0xf]
      %v329 = vld [vmem:[%s321 + $0x1c] sm:$0xf]
      %v330 = vld [vmem:[%s321 + $0x20] sm:$0xf]
      %v331 = vld [vmem:[%s321 + $0x24] sm:$0xf]
      %v332 = vld [vmem:[%s321 + $0x28] sm:$0xf]
      %v333 = vld [vmem:[%s321 + $0x2c] sm:$0xf]
      %v334 = vld [vmem:[%s321 + $0x30] sm:$0xf]
      %v335 = vld [vmem:[%s321 + $0x34] sm:$0xf]
      %v336 = vld [vmem:[%s321 + $0x38] sm:$0xf]
      %v337 = vld [vmem:[%s321 + $0x3c] sm:$0xf]
      %v354 = vunpack.c.l.b16 %v322
      %v355 = vunpack.c.l.b16 %v323
      %v356 = vunpack.c.l.b16 %v324
      %v357 = vunpack.c.l.b16 %v325
      %v358 = vunpack.c.l.b16 %v326
      %v359 = vunpack.c.l.b16 %v327
      %v360 = vunpack.c.l.b16 %v328
      %v361 = vunpack.c.l.b16 %v329
      %v362 = vunpack.c.l.b16 %v330
      %v363 = vunpack.c.l.b16 %v331
      %v364 = vunpack.c.l.b16 %v332
      %v365 = vunpack.c.l.b16 %v333
      %v366 = vunpack.c.l.b16 %v334
      %v367 = vunpack.c.l.b16 %v335
      %v368 = vunpack.c.l.b16 %v336
      %v369 = vunpack.c.l.b16 %v337
      %v370 = vpack.c.b16 %v355, %v354
      %v371 = vpack.c.b16 %v357, %v356
      %v372 = vpack.c.b16 %v359, %v358
      %v373 = vpack.c.b16 %v361, %v360
      %v374 = vpack.c.b16 %v363, %v362
      %v375 = vpack.c.b16 %v365, %v364
      %v376 = vpack.c.b16 %v367, %v366
      %v377 = vpack.c.b16 %v369, %v368
      %386 = vmatprep.subr.bf16.mxu0 0
      %387 = vmatpush1.bf16.msra.mxu0 %v377
      %388 = vmatprep.subr.bf16.mxu0 0
      %389 = vmatpush1.bf16.msra.mxu0 %v376
      %390 = vmatprep.subr.bf16.mxu0 0
      %391 = vmatpush1.bf16.msra.mxu0 %v375
      %392 = vmatprep.subr.bf16.mxu0 0
      %393 = vmatpush1.bf16.msra.mxu0 %v374
      %394 = vmatprep.subr.bf16.mxu0 0
      %395 = vmatpush1.bf16.msra.mxu0 %v373
      %396 = vmatprep.subr.bf16.mxu0 0
      %397 = vmatpush1.bf16.msra.mxu0 %v372
      %398 = vmatprep.subr.bf16.mxu0 0
      %399 = vmatpush1.bf16.msra.mxu0 %v371
      %400 = vmatprep.subr.bf16.mxu0 0
      %401 = vmatpush1.bf16.msra.mxu0 %v370
      %402 = vmatprep.subr.bf16.mxu0 0
      %403 = vmatpush2.bf16.msra.mxu0 0
      %404 = vmatprep.subr.bf16.mxu0 0
      %405 = vmatpush2.bf16.msra.mxu0 0
      %406 = vmatprep.subr.bf16.mxu0 0
      %407 = vmatpush2.bf16.msra.mxu0 0
      %408 = vmatprep.subr.bf16.mxu0 0
      %409 = vmatpush2.bf16.msra.mxu0 0
      %410 = vmatprep.subr.bf16.mxu0 0
      %411 = vmatpush2.bf16.msra.mxu0 0
      %412 = vmatprep.subr.bf16.mxu0 0
      %413 = vmatpush2.bf16.msra.mxu0 0
      %414 = vmatprep.subr.bf16.mxu0 0
      %415 = vmatpush2.bf16.msra.mxu0 0
      %416 = vmatprep.subr.bf16.mxu0 0
      %417 = vmatpush2.bf16.msra.mxu0 0
      %418 = vmatprep.mubr.bf16.mxu0 0
      %419 = vmatmul.mubr.bf16.gmra.mxu0 %v317
      %v420 = vpop.f32.mrf.mxu0
      %v421 = vadd.f32 0.0, %v420
      %v422 = vpop.f32.mrf.mxu0
      %v423 = vpop.f32.mrf.mxu0
      %v424 = vadd.f32 0.0, %v423
      %v425 = vpop.f32.mrf.mxu0
      %426 = vmatprep.mubr.bf16.mxu0 0
      %427 = vmatmul.mubr.bf16.gmra.mxu0 %v318
      %v428 = vpop.f32.mrf.mxu0
      %v429 = vadd.f32 0.0, %v428
      %v430 = vpop.f32.mrf.mxu0
      %v431 = vpop.f32.mrf.mxu0
      %v432 = vadd.f32 0.0, %v431
      %v433 = vpop.f32.mrf.mxu0
      %434 = vmatprep.mubr.bf16.mxu0 0
      %435 = vmatmul.mubr.bf16.gmra.mxu0 %v319
      %v436 = vpop.f32.mrf.mxu0
      %v437 = vadd.f32 0.0, %v436
      %v438 = vpop.f32.mrf.mxu0
      %v439 = vpop.f32.mrf.mxu0
      %v440 = vadd.f32 0.0, %v439
      %v441 = vpop.f32.mrf.mxu0
      %442 = vmatprep.mubr.bf16.mxu0 0
      %443 = vmatmul.mubr.bf16.gmra.mxu0 %v320
      %v444 = vpop.f32.mrf.mxu0
      %v445 = vadd.f32 0.0, %v444
      %v446 = vpop.f32.mrf.mxu0
      %v447 = vpop.f32.mrf.mxu0
      %v448 = vadd.f32 0.0, %v447
      %v449 = vpop.f32.mrf.mxu0
      %450 = vdwg.mxu0
      %v467 = vunpack.c.l.b16 %v293
      %v468 = vunpack.c.l.b16 %v294
      %v469 = vunpack.c.l.b16 %v295
      %v470 = vunpack.c.l.b16 %v296
      %v471 = vunpack.c.l.b16 %v297
      %v472 = vunpack.c.l.b16 %v298
      %v473 = vunpack.c.l.b16 %v299
      %v474 = vunpack.c.l.b16 %v300
      %v475 = vunpack.c.l.b16 %v301
      %v476 = vunpack.c.l.b16 %v302
      %v477 = vunpack.c.l.b16 %v303
      %v478 = vunpack.c.l.b16 %v304
      %v479 = vunpack.c.l.b16 %v305
      %v480 = vunpack.c.l.b16 %v306
      %v481 = vunpack.c.l.b16 %v307
      %v482 = vunpack.c.l.b16 %v308
      %v483 = vpack.c.b16 %v468, %v467
      %v484 = vpack.c.b16 %v470, %v469
      %v485 = vpack.c.b16 %v472, %v471
      %v486 = vpack.c.b16 %v474, %v473
      %v487 = vpack.c.b16 %v476, %v475
      %v488 = vpack.c.b16 %v478, %v477
      %v489 = vpack.c.b16 %v480, %v479
      %v490 = vpack.c.b16 %v482, %v481
      %499 = vmatprep.subr.bf16.mxu0 0
      %500 = vmatpush1.bf16.msra.mxu0 %v490
      %501 = vmatprep.subr.bf16.mxu0 0
      %502 = vmatpush1.bf16.msra.mxu0 %v489
      %503 = vmatprep.subr.bf16.mxu0 0
      %504 = vmatpush1.bf16.msra.mxu0 %v488
      %505 = vmatprep.subr.bf16.mxu0 0
      %506 = vmatpush1.bf16.msra.mxu0 %v487
      %507 = vmatprep.subr.bf16.mxu0 0
      %508 = vmatpush1.bf16.msra.mxu0 %v486
      %509 = vmatprep.subr.bf16.mxu0 0
      %510 = vmatpush1.bf16.msra.mxu0 %v485
      %511 = vmatprep.subr.bf16.mxu0 0
      %512 = vmatpush1.bf16.msra.mxu0 %v484
      %513 = vmatprep.subr.bf16.mxu0 0
      %514 = vmatpush1.bf16.msra.mxu0 %v483
      %515 = vmatprep.subr.bf16.mxu0 0
      %516 = vmatpush2.bf16.msra.mxu0 0
      %517 = vmatprep.subr.bf16.mxu0 0
      %518 = vmatpush2.bf16.msra.mxu0 0
      %519 = vmatprep.subr.bf16.mxu0 0
      %520 = vmatpush2.bf16.msra.mxu0 0
      %521 = vmatprep.subr.bf16.mxu0 0
      %522 = vmatpush2.bf16.msra.mxu0 0
      %523 = vmatprep.subr.bf16.mxu0 0
      %524 = vmatpush2.bf16.msra.mxu0 0
      %525 = vmatprep.subr.bf16.mxu0 0
      %526 = vmatpush2.bf16.msra.mxu0 0
      %527 = vmatprep.subr.bf16.mxu0 0
      %528 = vmatpush2.bf16.msra.mxu0 0
      %529 = vmatprep.subr.bf16.mxu0 0
      %530 = vmatpush2.bf16.msra.mxu0 0
      %531 = vmatprep.mubr.bf16.mxu0 0
      %532 = vmatmul.mubr.bf16.gmra.mxu0 %v289
      %v533 = vpop.f32.mrf.mxu0
      %v534 = vadd.f32 %v421, %v533
      %v535 = vpop.f32.mrf.mxu0
      %v536 = vpop.f32.mrf.mxu0
      %v537 = vadd.f32 %v424, %v536
      %v538 = vpop.f32.mrf.mxu0
      %539 = vmatprep.mubr.bf16.mxu0 0
      %540 = vmatmul.mubr.bf16.gmra.mxu0 %v290
      %v541 = vpop.f32.mrf.mxu0
      %v542 = vadd.f32 %v429, %v541
      %v543 = vpop.f32.mrf.mxu0
      %v544 = vpop.f32.mrf.mxu0
      %v545 = vadd.f32 %v432, %v544
      %v546 = vpop.f32.mrf.mxu0
      %547 = vmatprep.mubr.bf16.mxu0 0
      %548 = vmatmul.mubr.bf16.gmra.mxu0 %v291
      %v549 = vpop.f32.mrf.mxu0
      %v550 = vadd.f32 %v437, %v549
      %v551 = vpop.f32.mrf.mxu0
      %v552 = vpop.f32.mrf.mxu0
      %v553 = vadd.f32 %v440, %v552
      %v554 = vpop.f32.mrf.mxu0
      %555 = vmatprep.mubr.bf16.mxu0 0
      %556 = vmatmul.mubr.bf16.gmra.mxu0 %v292
      %v557 = vpop.f32.mrf.mxu0
      %v558 = vadd.f32 %v445, %v557
      %v559 = vpop.f32.mrf.mxu0
      %v560 = vpop.f32.mrf.mxu0
      %v561 = vadd.f32 %v448, %v560
      %v562 = vpop.f32.mrf.mxu0
      %563 = vdwg.mxu0
      %v564 = vld [vmem:[%s256 + $0x2] sm:$0xff]
      %v565 = vld [vmem:[%s256 + $0x12] sm:$0xff]
      %v566 = vld [vmem:[%s256 + $0x22] sm:$0xff]
      %v567 = vld [vmem:[%s256 + $0x32] sm:$0xff]
      %v568 = vld [vmem:[%s256 + $0x42] sm:$0xff]
      %v569 = vld [vmem:[%s256 + $0x52] sm:$0xff]
      %v570 = vld [vmem:[%s256 + $0x62] sm:$0xff]
      %v571 = vld [vmem:[%s256 + $0x72] sm:$0xff]
      %v572 = vpack.c.bf16 %v565, %v564
      %v573 = vpack.c.bf16 %v567, %v566
      %v574 = vpack.c.bf16 %v569, %v568
      %v575 = vpack.c.bf16 %v571, %v570
      %s576 = scalar_lea.vmem %s260, 128
      %v577 = vld [vmem:[%s576] sm:$0xf]
      %v578 = vld [vmem:[%s576 + $0x4] sm:$0xf]
      %v579 = vld [vmem:[%s576 + $0x8] sm:$0xf]
      %v580 = vld [vmem:[%s576 + $0xc] sm:$0xf]
      %v581 = vld [vmem:[%s576 + $0x10] sm:$0xf]
      %v582 = vld [vmem:[%s576 + $0x14] sm:$0xf]
      %v583 = vld [vmem:[%s576 + $0x18] sm:$0xf]
      %v584 = vld [vmem:[%s576 + $0x1c] sm:$0xf]
      %v585 = vld [vmem:[%s576 + $0x20] sm:$0xf]
      %v586 = vld [vmem:[%s576 + $0x24] sm:$0xf]
      %v587 = vld [vmem:[%s576 + $0x28] sm:$0xf]
      %v588 = vld [vmem:[%s576 + $0x2c] sm:$0xf]
      %v589 = vld [vmem:[%s576 + $0x30] sm:$0xf]
      %v590 = vld [vmem:[%s576 + $0x34] sm:$0xf]
      %v591 = vld [vmem:[%s576 + $0x38] sm:$0xf]
      %v592 = vld [vmem:[%s576 + $0x3c] sm:$0xf]
      %v609 = vunpack.c.l.b16 %v577
      %v610 = vunpack.c.l.b16 %v578
      %v611 = vunpack.c.l.b16 %v579
      %v612 = vunpack.c.l.b16 %v580
      %v613 = vunpack.c.l.b16 %v581
      %v614 = vunpack.c.l.b16 %v582
      %v615 = vunpack.c.l.b16 %v583
      %v616 = vunpack.c.l.b16 %v584
      %v617 = vunpack.c.l.b16 %v585
      %v618 = vunpack.c.l.b16 %v586
      %v619 = vunpack.c.l.b16 %v587
      %v620 = vunpack.c.l.b16 %v588
      %v621 = vunpack.c.l.b16 %v589
      %v622 = vunpack.c.l.b16 %v590
      %v623 = vunpack.c.l.b16 %v591
      %v624 = vunpack.c.l.b16 %v592
      %v625 = vpack.c.b16 %v610, %v609
      %v626 = vpack.c.b16 %v612, %v611
      %v627 = vpack.c.b16 %v614, %v613
      %v628 = vpack.c.b16 %v616, %v615
      %v629 = vpack.c.b16 %v618, %v617
      %v630 = vpack.c.b16 %v620, %v619
      %v631 = vpack.c.b16 %v622, %v621
      %v632 = vpack.c.b16 %v624, %v623
      %641 = vmatprep.subr.bf16.mxu0 0
      %642 = vmatpush1.bf16.msra.mxu0 %v632
      %643 = vmatprep.subr.bf16.mxu0 0
      %644 = vmatpush1.bf16.msra.mxu0 %v631
      %645 = vmatprep.subr.bf16.mxu0 0
      %646 = vmatpush1.bf16.msra.mxu0 %v630
      %647 = vmatprep.subr.bf16.mxu0 0
      %648 = vmatpush1.bf16.msra.mxu0 %v629
      %649 = vmatprep.subr.bf16.mxu0 0
      %650 = vmatpush1.bf16.msra.mxu0 %v628
      %651 = vmatprep.subr.bf16.mxu0 0
      %652 = vmatpush1.bf16.msra.mxu0 %v627
      %653 = vmatprep.subr.bf16.mxu0 0
      %654 = vmatpush1.bf16.msra.mxu0 %v626
      %655 = vmatprep.subr.bf16.mxu0 0
      %656 = vmatpush1.bf16.msra.mxu0 %v625
      %657 = vmatprep.subr.bf16.mxu0 0
      %658 = vmatpush2.bf16.msra.mxu0 0
      %659 = vmatprep.subr.bf16.mxu0 0
      %660 = vmatpush2.bf16.msra.mxu0 0
      %661 = vmatprep.subr.bf16.mxu0 0
      %662 = vmatpush2.bf16.msra.mxu0 0
      %663 = vmatprep.subr.bf16.mxu0 0
      %664 = vmatpush2.bf16.msra.mxu0 0
      %665 = vmatprep.subr.bf16.mxu0 0
      %666 = vmatpush2.bf16.msra.mxu0 0
      %667 = vmatprep.subr.bf16.mxu0 0
      %668 = vmatpush2.bf16.msra.mxu0 0
      %669 = vmatprep.subr.bf16.mxu0 0
      %670 = vmatpush2.bf16.msra.mxu0 0
      %671 = vmatprep.subr.bf16.mxu0 0
      %672 = vmatpush2.bf16.msra.mxu0 0
      %673 = vmatprep.mubr.bf16.mxu0 0
      %674 = vmatmul.mubr.bf16.gmra.mxu0 %v572
      %v675 = vpop.f32.mrf.mxu0
      %v676 = vadd.f32 0.0, %v675
      %v677 = vpop.f32.mrf.mxu0
      %v678 = vpop.f32.mrf.mxu0
      %v679 = vadd.f32 0.0, %v678
      %v680 = vpop.f32.mrf.mxu0
      %681 = vmatprep.mubr.bf16.mxu0 0
      %682 = vmatmul.mubr.bf16.gmra.mxu0 %v573
      %v683 = vpop.f32.mrf.mxu0
      %v684 = vadd.f32 0.0, %v683
      %v685 = vpop.f32.mrf.mxu0
      %v686 = vpop.f32.mrf.mxu0
      %v687 = vadd.f32 0.0, %v686
      %v688 = vpop.f32.mrf.mxu0
      %689 = vmatprep.mubr.bf16.mxu0 0
      %690 = vmatmul.mubr.bf16.gmra.mxu0 %v574
      %v691 = vpop.f32.mrf.mxu0
      %v692 = vadd.f32 0.0, %v691
      %v693 = vpop.f32.mrf.mxu0
      %v694 = vpop.f32.mrf.mxu0
      %v695 = vadd.f32 0.0, %v694
      %v696 = vpop.f32.mrf.mxu0
      %697 = vmatprep.mubr.bf16.mxu0 0
      %698 = vmatmul.mubr.bf16.gmra.mxu0 %v575
      %v699 = vpop.f32.mrf.mxu0
      %v700 = vadd.f32 0.0, %v699
      %v701 = vpop.f32.mrf.mxu0
      %v702 = vpop.f32.mrf.mxu0
      %v703 = vadd.f32 0.0, %v702
      %v704 = vpop.f32.mrf.mxu0
      %705 = vdwg.mxu0
      %v706 = vadd.f32 %v534, %v676
      %v707 = vadd.f32 %v537, %v679
      %v708 = vadd.f32 %v542, %v684
      %v709 = vadd.f32 %v545, %v687
      %v710 = vadd.f32 %v550, %v692
      %v711 = vadd.f32 %v553, %v695
      %v712 = vadd.f32 %v558, %v700
      %v713 = vadd.f32 %v561, %v703
      %s714 = scalar_lea.vmem %s256, 16
      %v715 = vld [vmem:[%s714] sm:$0xff]
      %v716 = vld [vmem:[%s714 + $0x10] sm:$0xff]
      %v717 = vld [vmem:[%s714 + $0x20] sm:$0xff]
      %v718 = vld [vmem:[%s714 + $0x30] sm:$0xff]
      %v719 = vld [vmem:[%s714 + $0x40] sm:$0xff]
      %v720 = vld [vmem:[%s714 + $0x50] sm:$0xff]
      %v721 = vld [vmem:[%s714 + $0x60] sm:$0xff]
      %v722 = vld [vmem:[%s714 + $0x70] sm:$0xff]
      %v723 = vpack.c.bf16 %v716, %v715
      %v724 = vpack.c.bf16 %v718, %v717
      %v725 = vpack.c.bf16 %v720, %v719
      %v726 = vpack.c.bf16 %v722, %v721
      %s727 = scalar_lea.vmem %s260, 192
      %v728 = vld [vmem:[%s727] sm:$0xf]
      %v729 = vld [vmem:[%s727 + $0x4] sm:$0xf]
      %v730 = vld [vmem:[%s727 + $0x8] sm:$0xf]
      %v731 = vld [vmem:[%s727 + $0xc] sm:$0xf]
      %v732 = vld [vmem:[%s727 + $0x10] sm:$0xf]
      %v733 = vld [vmem:[%s727 + $0x14] sm:$0xf]
      %v734 = vld [vmem:[%s727 + $0x18] sm:$0xf]
      %v735 = vld [vmem:[%s727 + $0x1c] sm:$0xf]
      %v736 = vld [vmem:[%s727 + $0x20] sm:$0xf]
      %v737 = vld [vmem:[%s727 + $0x24] sm:$0xf]
      %v738 = vld [vmem:[%s727 + $0x28] sm:$0xf]
      %v739 = vld [vmem:[%s727 + $0x2c] sm:$0xf]
      %v740 = vld [vmem:[%s727 + $0x30] sm:$0xf]
      %v741 = vld [vmem:[%s727 + $0x34] sm:$0xf]
      %v742 = vld [vmem:[%s727 + $0x38] sm:$0xf]
      %v743 = vld [vmem:[%s727 + $0x3c] sm:$0xf]
      %v760 = vunpack.c.l.b16 %v728
      %v761 = vunpack.c.l.b16 %v729
      %v762 = vunpack.c.l.b16 %v730
      %v763 = vunpack.c.l.b16 %v731
      %v764 = vunpack.c.l.b16 %v732
      %v765 = vunpack.c.l.b16 %v733
      %v766 = vunpack.c.l.b16 %v734
      %v767 = vunpack.c.l.b16 %v735
      %v768 = vunpack.c.l.b16 %v736
      %v769 = vunpack.c.l.b16 %v737
      %v770 = vunpack.c.l.b16 %v738
      %v771 = vunpack.c.l.b16 %v739
      %v772 = vunpack.c.l.b16 %v740
      %v773 = vunpack.c.l.b16 %v741
      %v774 = vunpack.c.l.b16 %v742
      %v775 = vunpack.c.l.b16 %v743
      %v776 = vpack.c.b16 %v761, %v760
      %v777 = vpack.c.b16 %v763, %v762
      %v778 = vpack.c.b16 %v765, %v764
      %v779 = vpack.c.b16 %v767, %v766
      %v780 = vpack.c.b16 %v769, %v768
      %v781 = vpack.c.b16 %v771, %v770
      %v782 = vpack.c.b16 %v773, %v772
      %v783 = vpack.c.b16 %v775, %v774
      %792 = vmatprep.subr.bf16.mxu0 0
      %793 = vmatpush1.bf16.msra.mxu0 %v783
      %794 = vmatprep.subr.bf16.mxu0 0
      %795 = vmatpush1.bf16.msra.mxu0 %v782
      %796 = vmatprep.subr.bf16.mxu0 0
      %797 = vmatpush1.bf16.msra.mxu0 %v781
      %798 = vmatprep.subr.bf16.mxu0 0
      %799 = vmatpush1.bf16.msra.mxu0 %v780
      %800 = vmatprep.subr.bf16.mxu0 0
      %801 = vmatpush1.bf16.msra.mxu0 %v779
      %802 = vmatprep.subr.bf16.mxu0 0
      %803 = vmatpush1.bf16.msra.mxu0 %v778
      %804 = vmatprep.subr.bf16.mxu0 0
      %805 = vmatpush1.bf16.msra.mxu0 %v777
      %806 = vmatprep.subr.bf16.mxu0 0
      %807 = vmatpush1.bf16.msra.mxu0 %v776
      %808 = vmatprep.subr.bf16.mxu0 0
      %809 = vmatpush2.bf16.msra.mxu0 0
      %810 = vmatprep.subr.bf16.mxu0 0
      %811 = vmatpush2.bf16.msra.mxu0 0
      %812 = vmatprep.subr.bf16.mxu0 0
      %813 = vmatpush2.bf16.msra.mxu0 0
      %814 = vmatprep.subr.bf16.mxu0 0
      %815 = vmatpush2.bf16.msra.mxu0 0
      %816 = vmatprep.subr.bf16.mxu0 0
      %817 = vmatpush2.bf16.msra.mxu0 0
      %818 = vmatprep.subr.bf16.mxu0 0
      %819 = vmatpush2.bf16.msra.mxu0 0
      %820 = vmatprep.subr.bf16.mxu0 0
      %821 = vmatpush2.bf16.msra.mxu0 0
      %822 = vmatprep.subr.bf16.mxu0 0
      %823 = vmatpush2.bf16.msra.mxu0 0
      %824 = vmatprep.mubr.bf16.mxu0 0
      %825 = vmatmul.mubr.bf16.gmra.mxu0 %v723
      %v826 = vpop.f32.mrf.mxu0
      %v827 = vadd.f32 0.0, %v826
      %v828 = vpop.f32.mrf.mxu0
      %v829 = vpop.f32.mrf.mxu0
      %v830 = vadd.f32 0.0, %v829
      %v831 = vpop.f32.mrf.mxu0
      %832 = vmatprep.mubr.bf16.mxu0 0
      %833 = vmatmul.mubr.bf16.gmra.mxu0 %v724
      %v834 = vpop.f32.mrf.mxu0
      %v835 = vadd.f32 0.0, %v834
      %v836 = vpop.f32.mrf.mxu0
      %v837 = vpop.f32.mrf.mxu0
      %v838 = vadd.f32 0.0, %v837
      %v839 = vpop.f32.mrf.mxu0
      %840 = vmatprep.mubr.bf16.mxu0 0
      %841 = vmatmul.mubr.bf16.gmra.mxu0 %v725
      %v842 = vpop.f32.mrf.mxu0
      %v843 = vadd.f32 0.0, %v842
      %v844 = vpop.f32.mrf.mxu0
      %v845 = vpop.f32.mrf.mxu0
      %v846 = vadd.f32 0.0, %v845
      %v847 = vpop.f32.mrf.mxu0
      %848 = vmatprep.mubr.bf16.mxu0 0
      %849 = vmatmul.mubr.bf16.gmra.mxu0 %v726
      %v850 = vpop.f32.mrf.mxu0
      %v851 = vadd.f32 0.0, %v850
      %v852 = vpop.f32.mrf.mxu0
      %v853 = vpop.f32.mrf.mxu0
      %v854 = vadd.f32 0.0, %v853
      %v855 = vpop.f32.mrf.mxu0
      %856 = vdwg.mxu0
      %v857 = vadd.f32 %v706, %v827
      %v858 = vadd.f32 %v707, %v830
      %v859 = vadd.f32 %v708, %v835
      %v860 = vadd.f32 %v709, %v838
      %v861 = vadd.f32 %v710, %v843
      %v862 = vadd.f32 %v711, %v846
      %v863 = vadd.f32 %v712, %v851
      %v864 = vadd.f32 %v713, %v854
      %v865 = vld [vmem:[%s714 + $0x1] sm:$0xff]
      %v866 = vld [vmem:[%s714 + $0x11] sm:$0xff]
      %v867 = vld [vmem:[%s714 + $0x21] sm:$0xff]
      %v868 = vld [vmem:[%s714 + $0x31] sm:$0xff]
      %v869 = vld [vmem:[%s714 + $0x41] sm:$0xff]
      %v870 = vld [vmem:[%s714 + $0x51] sm:$0xff]
      %v871 = vld [vmem:[%s714 + $0x61] sm:$0xff]
      %v872 = vld [vmem:[%s714 + $0x71] sm:$0xff]
      %v873 = vpack.c.bf16 %v866, %v865
      %v874 = vpack.c.bf16 %v868, %v867
      %v875 = vpack.c.bf16 %v870, %v869
      %v876 = vpack.c.bf16 %v872, %v871
      %s877 = scalar_lea.vmem %s260, 256
      %v878 = vld [vmem:[%s877] sm:$0xf]
      %v879 = vld [vmem:[%s877 + $0x4] sm:$0xf]
      %v880 = vld [vmem:[%s877 + $0x8] sm:$0xf]
      %v881 = vld [vmem:[%s877 + $0xc] sm:$0xf]
      %v882 = vld [vmem:[%s877 + $0x10] sm:$0xf]
      %v883 = vld [vmem:[%s877 + $0x14] sm:$0xf]
      %v884 = vld [vmem:[%s877 + $0x18] sm:$0xf]
      %v885 = vld [vmem:[%s877 + $0x1c] sm:$0xf]
      %v886 = vld [vmem:[%s877 + $0x20] sm:$0xf]
      %v887 = vld [vmem:[%s877 + $0x24] sm:$0xf]
      %v888 = vld [vmem:[%s877 + $0x28] sm:$0xf]
      %v889 = vld [vmem:[%s877 + $0x2c] sm:$0xf]
      %v890 = vld [vmem:[%s877 + $0x30] sm:$0xf]
      %v891 = vld [vmem:[%s877 + $0x34] sm:$0xf]
      %v892 = vld [vmem:[%s877 + $0x38] sm:$0xf]
      %v893 = vld [vmem:[%s877 + $0x3c] sm:$0xf]
      %v910 = vunpack.c.l.b16 %v878
      %v911 = vunpack.c.l.b16 %v879
      %v912 = vunpack.c.l.b16 %v880
      %v913 = vunpack.c.l.b16 %v881
      %v914 = vunpack.c.l.b16 %v882
      %v915 = vunpack.c.l.b16 %v883
      %v916 = vunpack.c.l.b16 %v884
      %v917 = vunpack.c.l.b16 %v885
      %v918 = vunpack.c.l.b16 %v886
      %v919 = vunpack.c.l.b16 %v887
      %v920 = vunpack.c.l.b16 %v888
      %v921 = vunpack.c.l.b16 %v889
      %v922 = vunpack.c.l.b16 %v890
      %v923 = vunpack.c.l.b16 %v891
      %v924 = vunpack.c.l.b16 %v892
      %v925 = vunpack.c.l.b16 %v893
      %v926 = vpack.c.b16 %v911, %v910
      %v927 = vpack.c.b16 %v913, %v912
      %v928 = vpack.c.b16 %v915, %v914
      %v929 = vpack.c.b16 %v917, %v916
      %v930 = vpack.c.b16 %v919, %v918
      %v931 = vpack.c.b16 %v921, %v920
      %v932 = vpack.c.b16 %v923, %v922
      %v933 = vpack.c.b16 %v925, %v924
      %942 = vmatprep.subr.bf16.mxu0 0
      %943 = vmatpush1.bf16.msra.mxu0 %v933
      %944 = vmatprep.subr.bf16.mxu0 0
      %945 = vmatpush1.bf16.msra.mxu0 %v932
      %946 = vmatprep.subr.bf16.mxu0 0
      %947 = vmatpush1.bf16.msra.mxu0 %v931
      %948 = vmatprep.subr.bf16.mxu0 0
      %949 = vmatpush1.bf16.msra.mxu0 %v930
      %950 = vmatprep.subr.bf16.mxu0 0
      %951 = vmatpush1.bf16.msra.mxu0 %v929
      %952 = vmatprep.subr.bf16.mxu0 0
      %953 = vmatpush1.bf16.msra.mxu0 %v928
      %954 = vmatprep.subr.bf16.mxu0 0
      %955 = vmatpush1.bf16.msra.mxu0 %v927
      %956 = vmatprep.subr.bf16.mxu0 0
      %957 = vmatpush1.bf16.msra.mxu0 %v926
      %958 = vmatprep.subr.bf16.mxu0 0
      %959 = vmatpush2.bf16.msra.mxu0 0
      %960 = vmatprep.subr.bf16.mxu0 0
      %961 = vmatpush2.bf16.msra.mxu0 0
      %962 = vmatprep.subr.bf16.mxu0 0
      %963 = vmatpush2.bf16.msra.mxu0 0
      %964 = vmatprep.subr.bf16.mxu0 0
      %965 = vmatpush2.bf16.msra.mxu0 0
      %966 = vmatprep.subr.bf16.mxu0 0
      %967 = vmatpush2.bf16.msra.mxu0 0
      %968 = vmatprep.subr.bf16.mxu0 0
      %969 = vmatpush2.bf16.msra.mxu0 0
      %970 = vmatprep.subr.bf16.mxu0 0
      %971 = vmatpush2.bf16.msra.mxu0 0
      %972 = vmatprep.subr.bf16.mxu0 0
      %973 = vmatpush2.bf16.msra.mxu0 0
      %974 = vmatprep.mubr.bf16.mxu0 0
      %975 = vmatmul.mubr.bf16.gmra.mxu0 %v873
      %v976 = vpop.f32.mrf.mxu0
      %v977 = vadd.f32 0.0, %v976
      %v978 = vpop.f32.mrf.mxu0
      %v979 = vpop.f32.mrf.mxu0
      %v980 = vadd.f32 0.0, %v979
      %v981 = vpop.f32.mrf.mxu0
      %982 = vmatprep.mubr.bf16.mxu0 0
      %983 = vmatmul.mubr.bf16.gmra.mxu0 %v874
      %v984 = vpop.f32.mrf.mxu0
      %v985 = vadd.f32 0.0, %v984
      %v986 = vpop.f32.mrf.mxu0
      %v987 = vpop.f32.mrf.mxu0
      %v988 = vadd.f32 0.0, %v987
      %v989 = vpop.f32.mrf.mxu0
      %990 = vmatprep.mubr.bf16.mxu0 0
      %991 = vmatmul.mubr.bf16.gmra.mxu0 %v875
      %v992 = vpop.f32.mrf.mxu0
      %v993 = vadd.f32 0.0, %v992
      %v994 = vpop.f32.mrf.mxu0
      %v995 = vpop.f32.mrf.mxu0
      %v996 = vadd.f32 0.0, %v995
      %v997 = vpop.f32.mrf.mxu0
      %998 = vmatprep.mubr.bf16.mxu0 0
      %999 = vmatmul.mubr.bf16.gmra.mxu0 %v876
      %v1000 = vpop.f32.mrf.mxu0
      %v1001 = vadd.f32 0.0, %v1000
      %v1002 = vpop.f32.mrf.mxu0
      %v1003 = vpop.f32.mrf.mxu0
      %v1004 = vadd.f32 0.0, %v1003
      %v1005 = vpop.f32.mrf.mxu0
      %1006 = vdwg.mxu0
      %v1007 = vadd.f32 %v857, %v977
      %v1008 = vadd.f32 %v858, %v980
      %v1009 = vadd.f32 %v859, %v985
      %v1010 = vadd.f32 %v860, %v988
      %v1011 = vadd.f32 %v861, %v993
      %v1012 = vadd.f32 %v862, %v996
      %v1013 = vadd.f32 %v863, %v1001
      %v1014 = vadd.f32 %v864, %v1004
      %v1015 = vld [vmem:[%s714 + $0x2] sm:$0xff]
      %v1016 = vld [vmem:[%s714 + $0x12] sm:$0xff]
      %v1017 = vld [vmem:[%s714 + $0x22] sm:$0xff]
      %v1018 = vld [vmem:[%s714 + $0x32] sm:$0xff]
      %v1019 = vld [vmem:[%s714 + $0x42] sm:$0xff]
      %v1020 = vld [vmem:[%s714 + $0x52] sm:$0xff]
      %v1021 = vld [vmem:[%s714 + $0x62] sm:$0xff]
      %v1022 = vld [vmem:[%s714 + $0x72] sm:$0xff]
      %v1023 = vpack.c.bf16 %v1016, %v1015
      %v1024 = vpack.c.bf16 %v1018, %v1017
      %v1025 = vpack.c.bf16 %v1020, %v1019
      %v1026 = vpack.c.bf16 %v1022, %v1021
      %s1027 = scalar_lea.vmem %s260, 320
      %v1028 = vld [vmem:[%s1027] sm:$0xf]
      %v1029 = vld [vmem:[%s1027 + $0x4] sm:$0xf]
      %v1030 = vld [vmem:[%s1027 + $0x8] sm:$0xf]
      %v1031 = vld [vmem:[%s1027 + $0xc] sm:$0xf]
      %v1032 = vld [vmem:[%s1027 + $0x10] sm:$0xf]
      %v1033 = vld [vmem:[%s1027 + $0x14] sm:$0xf]
      %v1034 = vld [vmem:[%s1027 + $0x18] sm:$0xf]
      %v1035 = vld [vmem:[%s1027 + $0x1c] sm:$0xf]
      %v1036 = vld [vmem:[%s1027 + $0x20] sm:$0xf]
      %v1037 = vld [vmem:[%s1027 + $0x24] sm:$0xf]
      %v1038 = vld [vmem:[%s1027 + $0x28] sm:$0xf]
      %v1039 = vld [vmem:[%s1027 + $0x2c] sm:$0xf]
      %v1040 = vld [vmem:[%s1027 + $0x30] sm:$0xf]
      %v1041 = vld [vmem:[%s1027 + $0x34] sm:$0xf]
      %v1042 = vld [vmem:[%s1027 + $0x38] sm:$0xf]
      %v1043 = vld [vmem:[%s1027 + $0x3c] sm:$0xf]
      %v1060 = vunpack.c.l.b16 %v1028
      %v1061 = vunpack.c.l.b16 %v1029
      %v1062 = vunpack.c.l.b16 %v1030
      %v1063 = vunpack.c.l.b16 %v1031
      %v1064 = vunpack.c.l.b16 %v1032
      %v1065 = vunpack.c.l.b16 %v1033
      %v1066 = vunpack.c.l.b16 %v1034
      %v1067 = vunpack.c.l.b16 %v1035
      %v1068 = vunpack.c.l.b16 %v1036
      %v1069 = vunpack.c.l.b16 %v1037
      %v1070 = vunpack.c.l.b16 %v1038
      %v1071 = vunpack.c.l.b16 %v1039
      %v1072 = vunpack.c.l.b16 %v1040
      %v1073 = vunpack.c.l.b16 %v1041
      %v1074 = vunpack.c.l.b16 %v1042
      %v1075 = vunpack.c.l.b16 %v1043
      %v1076 = vpack.c.b16 %v1061, %v1060
      %v1077 = vpack.c.b16 %v1063, %v1062
      %v1078 = vpack.c.b16 %v1065, %v1064
      %v1079 = vpack.c.b16 %v1067, %v1066
      %v1080 = vpack.c.b16 %v1069, %v1068
      %v1081 = vpack.c.b16 %v1071, %v1070
      %v1082 = vpack.c.b16 %v1073, %v1072
      %v1083 = vpack.c.b16 %v1075, %v1074
      %1092 = vmatprep.subr.bf16.mxu0 0
      %1093 = vmatpush1.bf16.msra.mxu0 %v1083
      %1094 = vmatprep.subr.bf16.mxu0 0
      %1095 = vmatpush1.bf16.msra.mxu0 %v1082
      %1096 = vmatprep.subr.bf16.mxu0 0
      %1097 = vmatpush1.bf16.msra.mxu0 %v1081
      %1098 = vmatprep.subr.bf16.mxu0 0
      %1099 = vmatpush1.bf16.msra.mxu0 %v1080
      %1100 = vmatprep.subr.bf16.mxu0 0
      %1101 = vmatpush1.bf16.msra.mxu0 %v1079
      %1102 = vmatprep.subr.bf16.mxu0 0
      %1103 = vmatpush1.bf16.msra.mxu0 %v1078
      %1104 = vmatprep.subr.bf16.mxu0 0
      %1105 = vmatpush1.bf16.msra.mxu0 %v1077
      %1106 = vmatprep.subr.bf16.mxu0 0
      %1107 = vmatpush1.bf16.msra.mxu0 %v1076
      %1108 = vmatprep.subr.bf16.mxu0 0
      %1109 = vmatpush2.bf16.msra.mxu0 0
      %1110 = vmatprep.subr.bf16.mxu0 0
      %1111 = vmatpush2.bf16.msra.mxu0 0
      %1112 = vmatprep.subr.bf16.mxu0 0
      %1113 = vmatpush2.bf16.msra.mxu0 0
      %1114 = vmatprep.subr.bf16.mxu0 0
      %1115 = vmatpush2.bf16.msra.mxu0 0
      %1116 = vmatprep.subr.bf16.mxu0 0
      %1117 = vmatpush2.bf16.msra.mxu0 0
      %1118 = vmatprep.subr.bf16.mxu0 0
      %1119 = vmatpush2.bf16.msra.mxu0 0
      %1120 = vmatprep.subr.bf16.mxu0 0
      %1121 = vmatpush2.bf16.msra.mxu0 0
      %1122 = vmatprep.subr.bf16.mxu0 0
      %1123 = vmatpush2.bf16.msra.mxu0 0
      %1124 = vmatprep.mubr.bf16.mxu0 0
      %1125 = vmatmul.mubr.bf16.gmra.mxu0 %v1023
      %v1126 = vpop.f32.mrf.mxu0
      %v1127 = vadd.f32 0.0, %v1126
      %v1128 = vpop.f32.mrf.mxu0
      %v1129 = vpop.f32.mrf.mxu0
      %v1130 = vadd.f32 0.0, %v1129
      %v1131 = vpop.f32.mrf.mxu0
      %1132 = vmatprep.mubr.bf16.mxu0 0
      %1133 = vmatmul.mubr.bf16.gmra.mxu0 %v1024
      %v1134 = vpop.f32.mrf.mxu0
      %v1135 = vadd.f32 0.0, %v1134
      %v1136 = vpop.f32.mrf.mxu0
      %v1137 = vpop.f32.mrf.mxu0
      %v1138 = vadd.f32 0.0, %v1137
      %v1139 = vpop.f32.mrf.mxu0
      %1140 = vmatprep.mubr.bf16.mxu0 0
      %1141 = vmatmul.mubr.bf16.gmra.mxu0 %v1025
      %v1142 = vpop.f32.mrf.mxu0
      %v1143 = vadd.f32 0.0, %v1142
      %v1144 = vpop.f32.mrf.mxu0
      %v1145 = vpop.f32.mrf.mxu0
      %v1146 = vadd.f32 0.0, %v1145
      %v1147 = vpop.f32.mrf.mxu0
      %1148 = vmatprep.mubr.bf16.mxu0 0
      %1149 = vmatmul.mubr.bf16.gmra.mxu0 %v1026
      %v1150 = vpop.f32.mrf.mxu0
      %v1151 = vadd.f32 0.0, %v1150
      %v1152 = vpop.f32.mrf.mxu0
      %v1153 = vpop.f32.mrf.mxu0
      %v1154 = vadd.f32 0.0, %v1153
      %v1155 = vpop.f32.mrf.mxu0
      %1156 = vdwg.mxu0
      %v1157 = vadd.f32 %v1007, %v1127
      %v1158 = vadd.f32 %v1008, %v1130
      %v1159 = vadd.f32 %v1009, %v1135
      %v1160 = vadd.f32 %v1010, %v1138
      %v1161 = vadd.f32 %v1011, %v1143
      %v1162 = vadd.f32 %v1012, %v1146
      %v1163 = vadd.f32 %v1013, %v1151
      %v1164 = vadd.f32 %v1014, %v1154
      %s1165 = scalar_lea.vmem %s256, 32
      %v1166 = vld [vmem:[%s1165] sm:$0xff]
      %v1167 = vld [vmem:[%s1165 + $0x10] sm:$0xff]
      %v1168 = vld [vmem:[%s1165 + $0x20] sm:$0xff]
      %v1169 = vld [vmem:[%s1165 + $0x30] sm:$0xff]
      %v1170 = vld [vmem:[%s1165 + $0x40] sm:$0xff]
      %v1171 = vld [vmem:[%s1165 + $0x50] sm:$0xff]
      %v1172 = vld [vmem:[%s1165 + $0x60] sm:$0xff]
      %v1173 = vld [vmem:[%s1165 + $0x70] sm:$0xff]
      %v1174 = vpack.c.bf16 %v1167, %v1166
      %v1175 = vpack.c.bf16 %v1169, %v1168
      %v1176 = vpack.c.bf16 %v1171, %v1170
      %v1177 = vpack.c.bf16 %v1173, %v1172
      %s1178 = scalar_lea.vmem %s260, 384
      %v1179 = vld [vmem:[%s1178] sm:$0xf]
      %v1180 = vld [vmem:[%s1178 + $0x4] sm:$0xf]
      %v1181 = vld [vmem:[%s1178 + $0x8] sm:$0xf]
      %v1182 = vld [vmem:[%s1178 + $0xc] sm:$0xf]
      %v1183 = vld [vmem:[%s1178 + $0x10] sm:$0xf]
      %v1184 = vld [vmem:[%s1178 + $0x14] sm:$0xf]
      %v1185 = vld [vmem:[%s1178 + $0x18] sm:$0xf]
      %v1186 = vld [vmem:[%s1178 + $0x1c] sm:$0xf]
      %v1187 = vld [vmem:[%s1178 + $0x20] sm:$0xf]
      %v1188 = vld [vmem:[%s1178 + $0x24] sm:$0xf]
      %v1189 = vld [vmem:[%s1178 + $0x28] sm:$0xf]
      %v1190 = vld [vmem:[%s1178 + $0x2c] sm:$0xf]
      %v1191 = vld [vmem:[%s1178 + $0x30] sm:$0xf]
      %v1192 = vld [vmem:[%s1178 + $0x34] sm:$0xf]
      %v1193 = vld [vmem:[%s1178 + $0x38] sm:$0xf]
      %v1194 = vld [vmem:[%s1178 + $0x3c] sm:$0xf]
      %v1211 = vunpack.c.l.b16 %v1179
      %v1212 = vunpack.c.l.b16 %v1180
      %v1213 = vunpack.c.l.b16 %v1181
      %v1214 = vunpack.c.l.b16 %v1182
      %v1215 = vunpack.c.l.b16 %v1183
      %v1216 = vunpack.c.l.b16 %v1184
      %v1217 = vunpack.c.l.b16 %v1185
      %v1218 = vunpack.c.l.b16 %v1186
      %v1219 = vunpack.c.l.b16 %v1187
      %v1220 = vunpack.c.l.b16 %v1188
      %v1221 = vunpack.c.l.b16 %v1189
      %v1222 = vunpack.c.l.b16 %v1190
      %v1223 = vunpack.c.l.b16 %v1191
      %v1224 = vunpack.c.l.b16 %v1192
      %v1225 = vunpack.c.l.b16 %v1193
      %v1226 = vunpack.c.l.b16 %v1194
      %v1227 = vpack.c.b16 %v1212, %v1211
      %v1228 = vpack.c.b16 %v1214, %v1213
      %v1229 = vpack.c.b16 %v1216, %v1215
      %v1230 = vpack.c.b16 %v1218, %v1217
      %v1231 = vpack.c.b16 %v1220, %v1219
      %v1232 = vpack.c.b16 %v1222, %v1221
      %v1233 = vpack.c.b16 %v1224, %v1223
      %v1234 = vpack.c.b16 %v1226, %v1225
      %1243 = vmatprep.subr.bf16.mxu0 0
      %1244 = vmatpush1.bf16.msra.mxu0 %v1234
      %1245 = vmatprep.subr.bf16.mxu0 0
      %1246 = vmatpush1.bf16.msra.mxu0 %v1233
      %1247 = vmatprep.subr.bf16.mxu0 0
      %1248 = vmatpush1.bf16.msra.mxu0 %v1232
      %1249 = vmatprep.subr.bf16.mxu0 0
      %1250 = vmatpush1.bf16.msra.mxu0 %v1231
      %1251 = vmatprep.subr.bf16.mxu0 0
      %1252 = vmatpush1.bf16.msra.mxu0 %v1230
      %1253 = vmatprep.subr.bf16.mxu0 0
      %1254 = vmatpush1.bf16.msra.mxu0 %v1229
      %1255 = vmatprep.subr.bf16.mxu0 0
      %1256 = vmatpush1.bf16.msra.mxu0 %v1228
      %1257 = vmatprep.subr.bf16.mxu0 0
      %1258 = vmatpush1.bf16.msra.mxu0 %v1227
      %1259 = vmatprep.subr.bf16.mxu0 0
      %1260 = vmatpush2.bf16.msra.mxu0 0
      %1261 = vmatprep.subr.bf16.mxu0 0
      %1262 = vmatpush2.bf16.msra.mxu0 0
      %1263 = vmatprep.subr.bf16.mxu0 0
      %1264 = vmatpush2.bf16.msra.mxu0 0
      %1265 = vmatprep.subr.bf16.mxu0 0
      %1266 = vmatpush2.bf16.msra.mxu0 0
      %1267 = vmatprep.subr.bf16.mxu0 0
      %1268 = vmatpush2.bf16.msra.mxu0 0
      %1269 = vmatprep.subr.bf16.mxu0 0
      %1270 = vmatpush2.bf16.msra.mxu0 0
      %1271 = vmatprep.subr.bf16.mxu0 0
      %1272 = vmatpush2.bf16.msra.mxu0 0
      %1273 = vmatprep.subr.bf16.mxu0 0
      %1274 = vmatpush2.bf16.msra.mxu0 0
      %1275 = vmatprep.mubr.bf16.mxu0 0
      %1276 = vmatmul.mubr.bf16.gmra.mxu0 %v1174
      %v1277 = vpop.f32.mrf.mxu0
      %v1278 = vadd.f32 0.0, %v1277
      %v1279 = vpop.f32.mrf.mxu0
      %v1280 = vpop.f32.mrf.mxu0
      %v1281 = vadd.f32 0.0, %v1280
      %v1282 = vpop.f32.mrf.mxu0
      %1283 = vmatprep.mubr.bf16.mxu0 0
      %1284 = vmatmul.mubr.bf16.gmra.mxu0 %v1175
      %v1285 = vpop.f32.mrf.mxu0
      %v1286 = vadd.f32 0.0, %v1285
      %v1287 = vpop.f32.mrf.mxu0
      %v1288 = vpop.f32.mrf.mxu0
      %v1289 = vadd.f32 0.0, %v1288
      %v1290 = vpop.f32.mrf.mxu0
      %1291 = vmatprep.mubr.bf16.mxu0 0
      %1292 = vmatmul.mubr.bf16.gmra.mxu0 %v1176
      %v1293 = vpop.f32.mrf.mxu0
      %v1294 = vadd.f32 0.0, %v1293
      %v1295 = vpop.f32.mrf.mxu0
      %v1296 = vpop.f32.mrf.mxu0
      %v1297 = vadd.f32 0.0, %v1296
      %v1298 = vpop.f32.mrf.mxu0
      %1299 = vmatprep.mubr.bf16.mxu0 0
      %1300 = vmatmul.mubr.bf16.gmra.mxu0 %v1177
      %v1301 = vpop.f32.mrf.mxu0
      %v1302 = vadd.f32 0.0, %v1301
      %v1303 = vpop.f32.mrf.mxu0
      %v1304 = vpop.f32.mrf.mxu0
      %v1305 = vadd.f32 0.0, %v1304
      %v1306 = vpop.f32.mrf.mxu0
      %1307 = vdwg.mxu0
      %v1308 = vadd.f32 %v1157, %v1278
      %v1309 = vadd.f32 %v1158, %v1281
      %v1310 = vadd.f32 %v1159, %v1286
      %v1311 = vadd.f32 %v1160, %v1289
      %v1312 = vadd.f32 %v1161, %v1294
      %v1313 = vadd.f32 %v1162, %v1297
      %v1314 = vadd.f32 %v1163, %v1302
      %v1315 = vadd.f32 %v1164, %v1305
      %v1316 = vld [vmem:[%s1165 + $0x1] sm:$0xff]
      %v1317 = vld [vmem:[%s1165 + $0x11] sm:$0xff]
      %v1318 = vld [vmem:[%s1165 + $0x21] sm:$0xff]
      %v1319 = vld [vmem:[%s1165 + $0x31] sm:$0xff]
      %v1320 = vld [vmem:[%s1165 + $0x41] sm:$0xff]
      %v1321 = vld [vmem:[%s1165 + $0x51] sm:$0xff]
      %v1322 = vld [vmem:[%s1165 + $0x61] sm:$0xff]
      %v1323 = vld [vmem:[%s1165 + $0x71] sm:$0xff]
      %v1324 = vpack.c.bf16 %v1317, %v1316
      %v1325 = vpack.c.bf16 %v1319, %v1318
      %v1326 = vpack.c.bf16 %v1321, %v1320
      %v1327 = vpack.c.bf16 %v1323, %v1322
      %s1328 = scalar_lea.vmem %s260, 448
      %v1329 = vld [vmem:[%s1328] sm:$0xf]
      %v1330 = vld [vmem:[%s1328 + $0x4] sm:$0xf]
      %v1331 = vld [vmem:[%s1328 + $0x8] sm:$0xf]
      %v1332 = vld [vmem:[%s1328 + $0xc] sm:$0xf]
      %v1333 = vld [vmem:[%s1328 + $0x10] sm:$0xf]
      %v1334 = vld [vmem:[%s1328 + $0x14] sm:$0xf]
      %v1335 = vld [vmem:[%s1328 + $0x18] sm:$0xf]
      %v1336 = vld [vmem:[%s1328 + $0x1c] sm:$0xf]
      %v1337 = vld [vmem:[%s1328 + $0x20] sm:$0xf]
      %v1338 = vld [vmem:[%s1328 + $0x24] sm:$0xf]
      %v1339 = vld [vmem:[%s1328 + $0x28] sm:$0xf]
      %v1340 = vld [vmem:[%s1328 + $0x2c] sm:$0xf]
      %v1341 = vld [vmem:[%s1328 + $0x30] sm:$0xf]
      %v1342 = vld [vmem:[%s1328 + $0x34] sm:$0xf]
      %v1343 = vld [vmem:[%s1328 + $0x38] sm:$0xf]
      %v1344 = vld [vmem:[%s1328 + $0x3c] sm:$0xf]
      %v1361 = vunpack.c.l.b16 %v1329
      %v1362 = vunpack.c.l.b16 %v1330
      %v1363 = vunpack.c.l.b16 %v1331
      %v1364 = vunpack.c.l.b16 %v1332
      %v1365 = vunpack.c.l.b16 %v1333
      %v1366 = vunpack.c.l.b16 %v1334
      %v1367 = vunpack.c.l.b16 %v1335
      %v1368 = vunpack.c.l.b16 %v1336
      %v1369 = vunpack.c.l.b16 %v1337
      %v1370 = vunpack.c.l.b16 %v1338
      %v1371 = vunpack.c.l.b16 %v1339
      %v1372 = vunpack.c.l.b16 %v1340
      %v1373 = vunpack.c.l.b16 %v1341
      %v1374 = vunpack.c.l.b16 %v1342
      %v1375 = vunpack.c.l.b16 %v1343
      %v1376 = vunpack.c.l.b16 %v1344
      %v1377 = vpack.c.b16 %v1362, %v1361
      %v1378 = vpack.c.b16 %v1364, %v1363
      %v1379 = vpack.c.b16 %v1366, %v1365
      %v1380 = vpack.c.b16 %v1368, %v1367
      %v1381 = vpack.c.b16 %v1370, %v1369
      %v1382 = vpack.c.b16 %v1372, %v1371
      %v1383 = vpack.c.b16 %v1374, %v1373
      %v1384 = vpack.c.b16 %v1376, %v1375
      %1393 = vmatprep.subr.bf16.mxu0 0
      %1394 = vmatpush1.bf16.msra.mxu0 %v1384
      %1395 = vmatprep.subr.bf16.mxu0 0
      %1396 = vmatpush1.bf16.msra.mxu0 %v1383
      %1397 = vmatprep.subr.bf16.mxu0 0
      %1398 = vmatpush1.bf16.msra.mxu0 %v1382
      %1399 = vmatprep.subr.bf16.mxu0 0
      %1400 = vmatpush1.bf16.msra.mxu0 %v1381
      %1401 = vmatprep.subr.bf16.mxu0 0
      %1402 = vmatpush1.bf16.msra.mxu0 %v1380
      %1403 = vmatprep.subr.bf16.mxu0 0
      %1404 = vmatpush1.bf16.msra.mxu0 %v1379
      %1405 = vmatprep.subr.bf16.mxu0 0
      %1406 = vmatpush1.bf16.msra.mxu0 %v1378
      %1407 = vmatprep.subr.bf16.mxu0 0
      %1408 = vmatpush1.bf16.msra.mxu0 %v1377
      %1409 = vmatprep.subr.bf16.mxu0 0
      %1410 = vmatpush2.bf16.msra.mxu0 0
      %1411 = vmatprep.subr.bf16.mxu0 0
      %1412 = vmatpush2.bf16.msra.mxu0 0
      %1413 = vmatprep.subr.bf16.mxu0 0
      %1414 = vmatpush2.bf16.msra.mxu0 0
      %1415 = vmatprep.subr.bf16.mxu0 0
      %1416 = vmatpush2.bf16.msra.mxu0 0
      %1417 = vmatprep.subr.bf16.mxu0 0
      %1418 = vmatpush2.bf16.msra.mxu0 0
      %1419 = vmatprep.subr.bf16.mxu0 0
      %1420 = vmatpush2.bf16.msra.mxu0 0
      %1421 = vmatprep.subr.bf16.mxu0 0
      %1422 = vmatpush2.bf16.msra.mxu0 0
      %1423 = vmatprep.subr.bf16.mxu0 0
      %1424 = vmatpush2.bf16.msra.mxu0 0
      %1425 = vmatprep.mubr.bf16.mxu0 0
      %1426 = vmatmul.mubr.bf16.gmra.mxu0 %v1324
      %v1427 = vpop.f32.mrf.mxu0
      %v1428 = vadd.f32 0.0, %v1427
      %v1429 = vpop.f32.mrf.mxu0
      %v1430 = vpop.f32.mrf.mxu0
      %v1431 = vadd.f32 0.0, %v1430
      %v1432 = vpop.f32.mrf.mxu0
      %1433 = vmatprep.mubr.bf16.mxu0 0
      %1434 = vmatmul.mubr.bf16.gmra.mxu0 %v1325
      %v1435 = vpop.f32.mrf.mxu0
      %v1436 = vadd.f32 0.0, %v1435
      %v1437 = vpop.f32.mrf.mxu0
      %v1438 = vpop.f32.mrf.mxu0
      %v1439 = vadd.f32 0.0, %v1438
      %v1440 = vpop.f32.mrf.mxu0
      %1441 = vmatprep.mubr.bf16.mxu0 0
      %1442 = vmatmul.mubr.bf16.gmra.mxu0 %v1326
      %v1443 = vpop.f32.mrf.mxu0
      %v1444 = vadd.f32 0.0, %v1443
      %v1445 = vpop.f32.mrf.mxu0
      %v1446 = vpop.f32.mrf.mxu0
      %v1447 = vadd.f32 0.0, %v1446
      %v1448 = vpop.f32.mrf.mxu0
      %1449 = vmatprep.mubr.bf16.mxu0 0
      %1450 = vmatmul.mubr.bf16.gmra.mxu0 %v1327
      %v1451 = vpop.f32.mrf.mxu0
      %v1452 = vadd.f32 0.0, %v1451
      %v1453 = vpop.f32.mrf.mxu0
      %v1454 = vpop.f32.mrf.mxu0
      %v1455 = vadd.f32 0.0, %v1454
      %v1456 = vpop.f32.mrf.mxu0
      %1457 = vdwg.mxu0
      %v1458 = vadd.f32 %v1308, %v1428
      %v1459 = vadd.f32 %v1309, %v1431
      %v1460 = vadd.f32 %v1310, %v1436
      %v1461 = vadd.f32 %v1311, %v1439
      %v1462 = vadd.f32 %v1312, %v1444
      %v1463 = vadd.f32 %v1313, %v1447
      %v1464 = vadd.f32 %v1314, %v1452
      %v1465 = vadd.f32 %v1315, %v1455
      %v1466 = vld [vmem:[%s1165 + $0x2] sm:$0xff]
      %v1467 = vld [vmem:[%s1165 + $0x12] sm:$0xff]
      %v1468 = vld [vmem:[%s1165 + $0x22] sm:$0xff]
      %v1469 = vld [vmem:[%s1165 + $0x32] sm:$0xff]
      %v1470 = vld [vmem:[%s1165 + $0x42] sm:$0xff]
      %v1471 = vld [vmem:[%s1165 + $0x52] sm:$0xff]
      %v1472 = vld [vmem:[%s1165 + $0x62] sm:$0xff]
      %v1473 = vld [vmem:[%s1165 + $0x72] sm:$0xff]
      %v1474 = vpack.c.bf16 %v1467, %v1466
      %v1475 = vpack.c.bf16 %v1469, %v1468
      %v1476 = vpack.c.bf16 %v1471, %v1470
      %v1477 = vpack.c.bf16 %v1473, %v1472
      %s1478 = scalar_lea.vmem %s260, 512
      %v1479 = vld [vmem:[%s1478] sm:$0xf]
      %v1480 = vld [vmem:[%s1478 + $0x4] sm:$0xf]
      %v1481 = vld [vmem:[%s1478 + $0x8] sm:$0xf]
      %v1482 = vld [vmem:[%s1478 + $0xc] sm:$0xf]
      %v1483 = vld [vmem:[%s1478 + $0x10] sm:$0xf]
      %v1484 = vld [vmem:[%s1478 + $0x14] sm:$0xf]
      %v1485 = vld [vmem:[%s1478 + $0x18] sm:$0xf]
      %v1486 = vld [vmem:[%s1478 + $0x1c] sm:$0xf]
      %v1487 = vld [vmem:[%s1478 + $0x20] sm:$0xf]
      %v1488 = vld [vmem:[%s1478 + $0x24] sm:$0xf]
      %v1489 = vld [vmem:[%s1478 + $0x28] sm:$0xf]
      %v1490 = vld [vmem:[%s1478 + $0x2c] sm:$0xf]
      %v1491 = vld [vmem:[%s1478 + $0x30] sm:$0xf]
      %v1492 = vld [vmem:[%s1478 + $0x34] sm:$0xf]
      %v1493 = vld [vmem:[%s1478 + $0x38] sm:$0xf]
      %v1494 = vld [vmem:[%s1478 + $0x3c] sm:$0xf]
      %v1511 = vunpack.c.l.b16 %v1479
      %v1512 = vunpack.c.l.b16 %v1480
      %v1513 = vunpack.c.l.b16 %v1481
      %v1514 = vunpack.c.l.b16 %v1482
      %v1515 = vunpack.c.l.b16 %v1483
      %v1516 = vunpack.c.l.b16 %v1484
      %v1517 = vunpack.c.l.b16 %v1485
      %v1518 = vunpack.c.l.b16 %v1486
      %v1519 = vunpack.c.l.b16 %v1487
      %v1520 = vunpack.c.l.b16 %v1488
      %v1521 = vunpack.c.l.b16 %v1489
      %v1522 = vunpack.c.l.b16 %v1490
      %v1523 = vunpack.c.l.b16 %v1491
      %v1524 = vunpack.c.l.b16 %v1492
      %v1525 = vunpack.c.l.b16 %v1493
      %v1526 = vunpack.c.l.b16 %v1494
      %v1527 = vpack.c.b16 %v1512, %v1511
      %v1528 = vpack.c.b16 %v1514, %v1513
      %v1529 = vpack.c.b16 %v1516, %v1515
      %v1530 = vpack.c.b16 %v1518, %v1517
      %v1531 = vpack.c.b16 %v1520, %v1519
      %v1532 = vpack.c.b16 %v1522, %v1521
      %v1533 = vpack.c.b16 %v1524, %v1523
      %v1534 = vpack.c.b16 %v1526, %v1525
      %1543 = vmatprep.subr.bf16.mxu0 0
      %1544 = vmatpush1.bf16.msra.mxu0 %v1534
      %1545 = vmatprep.subr.bf16.mxu0 0
      %1546 = vmatpush1.bf16.msra.mxu0 %v1533
      %1547 = vmatprep.subr.bf16.mxu0 0
      %1548 = vmatpush1.bf16.msra.mxu0 %v1532
      %1549 = vmatprep.subr.bf16.mxu0 0
      %1550 = vmatpush1.bf16.msra.mxu0 %v1531
      %1551 = vmatprep.subr.bf16.mxu0 0
      %1552 = vmatpush1.bf16.msra.mxu0 %v1530
      %1553 = vmatprep.subr.bf16.mxu0 0
      %1554 = vmatpush1.bf16.msra.mxu0 %v1529
      %1555 = vmatprep.subr.bf16.mxu0 0
      %1556 = vmatpush1.bf16.msra.mxu0 %v1528
      %1557 = vmatprep.subr.bf16.mxu0 0
      %1558 = vmatpush1.bf16.msra.mxu0 %v1527
      %1559 = vmatprep.subr.bf16.mxu0 0
      %1560 = vmatpush2.bf16.msra.mxu0 0
      %1561 = vmatprep.subr.bf16.mxu0 0
      %1562 = vmatpush2.bf16.msra.mxu0 0
      %1563 = vmatprep.subr.bf16.mxu0 0
      %1564 = vmatpush2.bf16.msra.mxu0 0
      %1565 = vmatprep.subr.bf16.mxu0 0
      %1566 = vmatpush2.bf16.msra.mxu0 0
      %1567 = vmatprep.subr.bf16.mxu0 0
      %1568 = vmatpush2.bf16.msra.mxu0 0
      %1569 = vmatprep.subr.bf16.mxu0 0
      %1570 = vmatpush2.bf16.msra.mxu0 0
      %1571 = vmatprep.subr.bf16.mxu0 0
      %1572 = vmatpush2.bf16.msra.mxu0 0
      %1573 = vmatprep.subr.bf16.mxu0 0
      %1574 = vmatpush2.bf16.msra.mxu0 0
      %1575 = vmatprep.mubr.bf16.mxu0 0
      %1576 = vmatmul.mubr.bf16.gmra.mxu0 %v1474
      %v1577 = vpop.f32.mrf.mxu0
      %v1578 = vadd.f32 0.0, %v1577
      %v1579 = vpop.f32.mrf.mxu0
      %v1580 = vpop.f32.mrf.mxu0
      %v1581 = vadd.f32 0.0, %v1580
      %v1582 = vpop.f32.mrf.mxu0
      %1583 = vmatprep.mubr.bf16.mxu0 0
      %1584 = vmatmul.mubr.bf16.gmra.mxu0 %v1475
      %v1585 = vpop.f32.mrf.mxu0
      %v1586 = vadd.f32 0.0, %v1585
      %v1587 = vpop.f32.mrf.mxu0
      %v1588 = vpop.f32.mrf.mxu0
      %v1589 = vadd.f32 0.0, %v1588
      %v1590 = vpop.f32.mrf.mxu0
      %1591 = vmatprep.mubr.bf16.mxu0 0
      %1592 = vmatmul.mubr.bf16.gmra.mxu0 %v1476
      %v1593 = vpop.f32.mrf.mxu0
      %v1594 = vadd.f32 0.0, %v1593
      %v1595 = vpop.f32.mrf.mxu0
      %v1596 = vpop.f32.mrf.mxu0
      %v1597 = vadd.f32 0.0, %v1596
      %v1598 = vpop.f32.mrf.mxu0
      %1599 = vmatprep.mubr.bf16.mxu0 0
      %1600 = vmatmul.mubr.bf16.gmra.mxu0 %v1477
      %v1601 = vpop.f32.mrf.mxu0
      %v1602 = vadd.f32 0.0, %v1601
      %v1603 = vpop.f32.mrf.mxu0
      %v1604 = vpop.f32.mrf.mxu0
      %v1605 = vadd.f32 0.0, %v1604
      %v1606 = vpop.f32.mrf.mxu0
      %1607 = vdwg.mxu0
      %v1608 = vadd.f32 %v1458, %v1578
      %v1609 = vadd.f32 %v1459, %v1581
      %v1610 = vadd.f32 %v1460, %v1586
      %v1611 = vadd.f32 %v1461, %v1589
      %v1612 = vadd.f32 %v1462, %v1594
      %v1613 = vadd.f32 %v1463, %v1597
      %v1614 = vadd.f32 %v1464, %v1602
      %v1615 = vadd.f32 %v1465, %v1605
      %v1616 = vld [vmem:[%s263] sm:$0x1]
      %v1618 = vlaneseq
      %v1619 = vshrl.u32 %v1618, 7
      %v1620 = vsub.s32 0, %v1619
      %v1621 = vrot.slane %v1616, %v1620
      %v1623 = vadd.f32 %v1608, %v1621
      %v1624 = vadd.f32 %v1609, %v1621
      %v1625 = vadd.f32 %v1610, %v1621
      %v1626 = vadd.f32 %v1611, %v1621
      %v1627 = vadd.f32 %v1612, %v1621
      %v1628 = vadd.f32 %v1613, %v1621
      %v1629 = vadd.f32 %v1614, %v1621
      %v1630 = vadd.f32 %v1615, %v1621
      %v1631 = vld [vmem:[%s271] sm:$0xff]
      %v1632 = vld [vmem:[%s271 + $0x8] sm:$0xff]
      %v1633 = vld [vmem:[%s271 + $0x10] sm:$0xff]
      %v1634 = vld [vmem:[%s271 + $0x18] sm:$0xff]
      %v1635 = vld [vmem:[%s271 + $0x20] sm:$0xff]
      %v1636 = vld [vmem:[%s271 + $0x28] sm:$0xff]
      %v1637 = vld [vmem:[%s271 + $0x30] sm:$0xff]
      %v1638 = vld [vmem:[%s271 + $0x38] sm:$0xff]
      %v1639 = vadd.f32 %v1623, %v1631
      %v1640 = vadd.f32 %v1624, %v1632
      %v1641 = vadd.f32 %v1625, %v1633
      %v1642 = vadd.f32 %v1626, %v1634
      %v1643 = vadd.f32 %v1627, %v1635
      %v1644 = vadd.f32 %v1628, %v1636
      %v1645 = vadd.f32 %v1629, %v1637
      %v1646 = vadd.f32 %v1630, %v1638
      %v1647 = vmax.f32 %v1639, 0.0
      %v1648 = vmax.f32 %v1640, 0.0
      %v1649 = vmax.f32 %v1641, 0.0
      %v1650 = vmax.f32 %v1642, 0.0
      %v1651 = vmax.f32 %v1643, 0.0
      %v1652 = vmax.f32 %v1644, 0.0
      %v1653 = vmax.f32 %v1645, 0.0
      %v1654 = vmax.f32 %v1646, 0.0
      %1655 = vst [vmem:[%s279] sm:$0xff] %v1647
      %1656 = vst [vmem:[%s279 + $0x8] sm:$0xff] %v1648
      %1657 = vst [vmem:[%s279 + $0x10] sm:$0xff] %v1649
      %1658 = vst [vmem:[%s279 + $0x18] sm:$0xff] %v1650
      %1659 = vst [vmem:[%s279 + $0x20] sm:$0xff] %v1651
      %1660 = vst [vmem:[%s279 + $0x28] sm:$0xff] %v1652
      %1661 = vst [vmem:[%s279 + $0x30] sm:$0xff] %v1653
      %1662 = vst [vmem:[%s279 + $0x38] sm:$0xff] %v1654
      %p1663 = scmp.lt.s32.totalorder %s19, 1
      %s1664 = scalar_select %p1663, %s19, 1
      %p1665 = scmp.lt.s32.totalorder %s20, 0
      %s1666 = scalar_select %p1665, %s20, 0
      %s1667 = smul.addr %s1664, 8
      %s1668 = sadd.s32 %s1666, %s1667
      %s1669 = smul.addr %s1668, 8
      %s1670 = scalar_lea.vmem %s4, %s1669
      // Predicated region
      $region37: #{run.7} parent=35 // pred_check
        %p1671 = pneg %p153
      $region38: #{run.7} parent=35 // pred_check_branch
        %1673 = sbr.rel (%p1671) target = $region40
      $region39: #{run.7} parent=35 // pred_region
        _
      $region40: #{run.7} parent=35 // pred_fallthru
        _
    $region36: #{run.7} parent=5 // pred_fallthru
      _
    %p1674 = scmp.le.s32.totalorder 2, %s10
    // Predicated region
    $region41: #{run.7} parent=5 // pred_check
      %p1675 = pneg %p1674
    $region42: #{run.7} parent=5 // pred_check_branch
      %1677 = sbr.rel (%p1675) target = $region44
    $region43: #{run.7} parent=5 // pred_region
      %s1678 = ssub.s32 %s10, 2
      // Predicated region
      $region45: #{run.7} parent=43 // pred_check
        %p1679 = pneg %p159
      $region46: #{run.7} parent=43 // pred_check_branch
        %1681 = sbr.rel (%p1679) target = $region48
      $region47: #{run.7} parent=43 // pred_region
        %p1682 = scmp.lt.s32.totalorder %s21, 1
        %s1683 = scalar_select %p1682, %s21, 1
        %p1684 = scmp.lt.s32.totalorder %s22, 0
        %s1685 = scalar_select %p1684, %s22, 0
        %s1686 = smul.addr %s1683, 8
        %s1687 = sadd.s32 %s1685, %s1686
        %s1688 = smul.addr %s1687, 8
        %s1689 = scalar_lea.vmem %s4, %s1688
      $region48: #{run.7} parent=43 // pred_fallthru
        _
    $region44: #{run.7} parent=5 // pred_fallthru
      _
  $region6: #{run.7} parent=0 // loop_footer
    %s14 = sadd.s32 1, %s10
  $region7: #{run.7} parent=0 // loop_footer_branch
    %9 = sbr.rel target = $region3
  $region8: #{run.7} parent=0 // loop_exit
    _

</llo_original>
